<compile_context>
chip_gen: v5e
topology: v5e:2x2
jax: 0.10.0
libtpu: 0.0.40
codegen_flags: <defaults>
</compile_context>

<pallas_src>
import jax
import jax.numpy as jnp
from jax.experimental import pallas as pl
from jax.experimental.pallas import tpu as pltpu

# Matched matmul precision between the Pallas kernel and the XLA reference so the
# correctness check can be tight (full-f32 MXU passes on both sides).
jax.config.update("jax_default_matmul_precision", "highest")

# ---- model hyper-parameters (match the HighwayEnv transformer config) ----
F_IN = 8              # per-entity input features (presence feature at index 0)
N_ENT = 8             # entities: 1 ego + 7 others
N_OTH = N_ENT - 1
FEAT = 64             # feature_size of the embedding / attention
HEADS = 2             # attention heads
DPH = FEAT // HEADS   # features per head
PRESENCE_IDX = 0
SCALE = 1.0 / float(DPH) ** 0.5


def ego_attention_kernel(ego_ref, oth_ref, pres_ref,
                         w1e_ref, b1e_ref, w2e_ref, b2e_ref,   # ego embedding MLP
                         w1o_ref, b1o_ref, w2o_ref, b2o_ref,   # others embedding MLP
                         wq_ref, wkv_ref, wcomb_ref,           # fused attention weights
                         out_ref):
    tb = ego_ref.shape[0]                       # samples per grid step (static)
    ego = ego_ref[...]                          # (TB, F_IN)
    oth = oth_ref[0]                            # (N_OTH*TB, F_IN), entity-major TB-row blocks
    pres = pres_ref[...]                        # (TB, N_ENT)

    def mlp(z, w1, b1, w2, b2):
        h = jnp.maximum(jnp.dot(z, w1, preferred_element_type=jnp.float32) + b1, 0.0)
        return jnp.maximum(jnp.dot(h, w2, preferred_element_type=jnp.float32) + b2, 0.0)

    ego_e = mlp(ego, w1e_ref[...], b1e_ref[...], w2e_ref[...], b2e_ref[...])    # (TB, FEAT)
    oth_e = mlp(oth, w1o_ref[...], b1o_ref[...], w2o_ref[...], b2o_ref[...])    # (N_OTH*TB, FEAT)

    q = jnp.dot(ego_e, wq_ref[...], preferred_element_type=jnp.float32)         # (TB, FEAT)
    kv_ego = jnp.dot(ego_e, wkv_ref[...], preferred_element_type=jnp.float32)   # (TB, 2*FEAT)
    kv_oth = jnp.dot(oth_e, wkv_ref[...], preferred_element_type=jnp.float32)   # (N_OTH*TB, 2*FEAT)

    # Per-entity K|V slabs (entity 0 = ego).  TB is a static multiple of 8, so these
    # are clean whole-sublane-block slices.
    kv_ent = [kv_ego] + [kv_oth[e * tb:(e + 1) * tb] for e in range(N_OTH)]

    # scores[b, h, e] = <q[b, h*DPH:(h+1)*DPH], k_e[b, h*DPH:(h+1)*DPH]> * SCALE
    score_cols = [[None] * N_ENT for _ in range(HEADS)]
    for e in range(N_ENT):
        prod = kv_ent[e][:, :FEAT] * q          # (TB, FEAT): both heads in one product
        for h in range(HEADS):
            score_cols[h][e] = jnp.sum(
                prod[:, h * DPH:(h + 1) * DPH], axis=-1, keepdims=True) * SCALE

    absent = pres < 0.5                         # (TB, N_ENT); masks the ego slot too
    head_outs = []
    for h in range(HEADS):
        scores = jnp.concatenate(score_cols[h], axis=-1)       # (TB, N_ENT), lane axis
        scores = jnp.where(absent, -1.0e9, scores)
        m = jnp.max(scores, axis=-1, keepdims=True)
        ex = jnp.exp(scores - m)
        # approx=True would move this to the EUP approximate path (free win); kept
        # exact so the f32 validation against the XLA reference stays tight.
        p = ex * pl.reciprocal(jnp.sum(ex, axis=-1, keepdims=True), approx=False)
        acc = p[:, 0:1] * kv_ent[0][:, FEAT + h * DPH:FEAT + (h + 1) * DPH]
        for e in range(1, N_ENT):
            acc = acc + p[:, e:e + 1] * kv_ent[e][:, FEAT + h * DPH:FEAT + (h + 1) * DPH]
        head_outs.append(acc)                                   # (TB, DPH)

    # [attn_out | ego_e] @ [[wc/2, 0], [I/2, 0]] == (attn_out @ wc + ego_e)/2 padded to
    # 128 lanes -> the residual add, the /2 and the lane-dense store are all one matmul.
    big = jnp.concatenate(head_outs + [ego_e], axis=-1)         # (TB, 2*FEAT)
    out_ref[...] = jnp.dot(big, wcomb_ref[...], preferred_element_type=jnp.float32)


def ego_attention_network(x, params, *, block_b=256):
    """x: (B, N_ENT, F_IN) float32 -> (B, FEAT) float32."""
    (w1e, b1e, w2e, b2e, w1o, b1o, w2o, b2o, wq, wk, wv, wc) = params
    assert block_b % 8 == 0
    B = x.shape[0]

    tb = block_b
    n_tiles = -(-B // tb)
    bp = n_tiles * tb
    if bp != B:
        # Padded samples have presence == 0 -> fully masked -> finite garbage, sliced off.
        x = jnp.pad(x, ((0, bp - B), (0, 0), (0, 0)))

    # Wrapper-side layout work (cheap XLA ops):
    ego2d = x[:, 0, :]                                           # (Bp, F_IN)
    pres2d = x[:, :, PRESENCE_IDX]                               # (Bp, N_ENT)
    # others: tile-major, entity-major 2-D slabs -> kernel sees one contiguous operand.
    oth = x[:, 1:, :].reshape(n_tiles, tb, N_OTH, F_IN)
    oth = jnp.transpose(oth, (0, 2, 1, 3)).reshape(n_tiles, N_OTH * tb, F_IN)

    # Fused projection weights.
    wkv = jnp.concatenate([wk, wv], axis=1)                      # (FEAT, 2*FEAT)
    eye = jnp.eye(FEAT, dtype=wc.dtype)
    wcomb = jnp.concatenate(
        [jnp.concatenate([wc, eye], axis=0) * 0.5,
         jnp.zeros((2 * FEAT, FEAT), wc.dtype)], axis=1)         # (2*FEAT, 2*FEAT)

    weights = [w1e, b1e, w2e, b2e, w1o, b1o, w2o, b2o, wq, wkv, wcomb]
    # Constant index_map -> each weight is DMA'd once and stays VMEM-resident.
    weight_specs = [pl.BlockSpec(w.shape, lambda i: (0, 0)) for w in weights]

    out = pl.pallas_call(
        ego_attention_kernel,
        out_shape=jax.ShapeDtypeStruct((bp, 2 * FEAT), jnp.float32),
        grid_spec=pltpu.PrefetchScalarGridSpec(
            num_scalar_prefetch=0,
            grid=(n_tiles,),
            in_specs=[pl.BlockSpec((tb, F_IN), lambda i: (i, 0)),
                      pl.BlockSpec((1, N_OTH * tb, F_IN), lambda i: (i, 0, 0)),
                      pl.BlockSpec((tb, N_ENT), lambda i: (i, 0))] + weight_specs,
            out_specs=pl.BlockSpec((tb, 2 * FEAT), lambda i: (i, 0)),
        ),
        compiler_params=pltpu.CompilerParams(dimension_semantics=("parallel",)),
    )(ego2d, oth, pres2d, *weights)

    return out[:B, :FEAT]


def reference_forward(x, params):
    """Pure-JAX replica of the PyTorch forward pass for validation."""
    (w1e, b1e, w2e, b2e, w1o, b1o, w2o, b2o, wq, wk, wv, wc) = params
    ego = x[:, 0:1, :]
    others = x[:, 1:, :]
    mask = x[:, :, PRESENCE_IDX] < 0.5                           # (B, N)

    def mlp(z, w1, b1, w2, b2):
        h = jax.nn.relu(z @ w1 + b1)
        return jax.nn.relu(h @ w2 + b2)

    ego_e = mlp(ego, w1e, b1e, w2e, b2e)                         # (B, 1, FEAT)
    oth_e = mlp(others, w1o, b1o, w2o, b2o)                      # (B, N-1, FEAT)
    inp = jnp.concatenate([ego_e, oth_e], axis=1)                # (B, N, FEAT)

    B, N, _ = inp.shape
    K = (inp @ wk).reshape(B, N, HEADS, DPH).transpose(0, 2, 1, 3)
    V = (inp @ wv).reshape(B, N, HEADS, DPH).transpose(0, 2, 1, 3)
    Q = (ego_e @ wq).reshape(B, 1, HEADS, DPH).transpose(0, 2, 1, 3)

    scores = jnp.einsum("bhqd,bhkd->bhqk", Q, K) / jnp.sqrt(jnp.float32(DPH))
    scores = jnp.where(mask[:, None, None, :], -1.0e9, scores)
    p = jax.nn.softmax(scores, axis=-1)
    out = jnp.einsum("bhqk,bhkd->bhqd", p, V).reshape(B, FEAT)
    return (out @ wc + ego_e[:, 0, :]) / 2.0


def init_params(key):
    ks = jax.random.split(key, 12)

    def w(k, shape, fan_in):
        return jax.random.normal(k, shape, jnp.float32) / jnp.sqrt(jnp.float32(fan_in))

    w1e = w(ks[0], (F_IN, FEAT), F_IN)
    b1e = 0.01 * jax.random.normal(ks[1], (1, FEAT), jnp.float32)
    w2e = w(ks[2], (FEAT, FEAT), FEAT)
    b2e = 0.01 * jax.random.normal(ks[3], (1, FEAT), jnp.float32)
    w1o = w(ks[4], (F_IN, FEAT), F_IN)
    b1o = 0.01 * jax.random.normal(ks[5], (1, FEAT), jnp.float32)
    w2o = w(ks[6], (FEAT, FEAT), FEAT)
    b2o = 0.01 * jax.random.normal(ks[7], (1, FEAT), jnp.float32)
    wq = w(ks[8], (FEAT, FEAT), FEAT)
    wk = w(ks[9], (FEAT, FEAT), FEAT)
    wv = w(ks[10], (FEAT, FEAT), FEAT)
    wc = w(ks[11], (FEAT, FEAT), FEAT)
    return (w1e, b1e, w2e, b2e, w1o, b1o, w2o, b2o, wq, wk, wv, wc)


if __name__ == "__main__":
    key = jax.random.PRNGKey(0)
    k_x, k_p = jax.random.split(key)

    B = 16                                           # small demo batch, 2 grid steps
    x = jax.random.normal(k_x, (B, N_ENT, F_IN), jnp.float32)
    # presence feature (index 0): sample b has (b % N_ENT) + 1 entities present,
    # ego always present -> exercises the masking path at varying fill levels.
    presence = (jnp.arange(N_ENT)[None, :] <= (jnp.arange(B)[:, None] % N_ENT)
                ).astype(jnp.float32)
    x = x.at[:, :, PRESENCE_IDX].set(presence)

    params = init_params(k_p)

    out = jax.block_until_ready(ego_attention_network(x, params, block_b=8))
    ref = jax.block_until_ready(reference_forward(x, params))

    assert out.shape == (B, FEAT)
    # Much tighter than the previous 5e-2 so layout/fusion bugs (head order, masking,
    # residual) are caught; small headroom over ~1e-5 for MXU pass / transcendental
    # rounding differences between Mosaic and XLA.
    err = jnp.max(jnp.abs(out - ref))
    assert jnp.allclose(out, ref, rtol=1e-3, atol=1e-3), f"mismatch: max abs err {err}"

    print("KERNEL_OK")
</pallas_src>

<mosaic_0001>
module attributes {stable_mosaic.version = 11 : i64} {
  func.func @ego_attention_kernel(%arg0: i32, %arg1: memref<8x8xf32, #tpu.memory_space<vmem>>, %arg2: memref<1x56x8xf32, #tpu.memory_space<vmem>>, %arg3: memref<8x8xf32, #tpu.memory_space<vmem>>, %arg4: memref<8x64xf32, #tpu.memory_space<vmem>>, %arg5: memref<1x64xf32, #tpu.memory_space<vmem>>, %arg6: memref<64x64xf32, #tpu.memory_space<vmem>>, %arg7: memref<1x64xf32, #tpu.memory_space<vmem>>, %arg8: memref<8x64xf32, #tpu.memory_space<vmem>>, %arg9: memref<1x64xf32, #tpu.memory_space<vmem>>, %arg10: memref<64x64xf32, #tpu.memory_space<vmem>>, %arg11: memref<1x64xf32, #tpu.memory_space<vmem>>, %arg12: memref<64x64xf32, #tpu.memory_space<vmem>>, %arg13: memref<64x128xf32, #tpu.memory_space<vmem>>, %arg14: memref<128x128xf32, #tpu.memory_space<vmem>>, %arg15: memref<8x128xf32, #tpu.memory_space<vmem>>) attributes {dimension_semantics = [#tpu.dimension_semantics<parallel>], iteration_bounds = array<i64: 2>, scalar_prefetch = 0 : i64, scratch_operands = 0 : i64, tpu.core_type = #tpu.core_type<tc>, window_params = [{transform_indices = @transform_0, window_bounds = array<i64: 8, 8>}, {transform_indices = @transform_1, window_bounds = array<i64: 1, 56, 8>}, {transform_indices = @transform_2, window_bounds = array<i64: 8, 8>}, {pipeline_mode = #tpu.pipeline_mode<synchronous>, transform_indices = @transform_3, window_bounds = array<i64: 8, 64>}, {pipeline_mode = #tpu.pipeline_mode<synchronous>, transform_indices = @transform_4, window_bounds = array<i64: 1, 64>}, {pipeline_mode = #tpu.pipeline_mode<synchronous>, transform_indices = @transform_5, window_bounds = array<i64: 64, 64>}, {pipeline_mode = #tpu.pipeline_mode<synchronous>, transform_indices = @transform_6, window_bounds = array<i64: 1, 64>}, {pipeline_mode = #tpu.pipeline_mode<synchronous>, transform_indices = @transform_7, window_bounds = array<i64: 8, 64>}, {pipeline_mode = #tpu.pipeline_mode<synchronous>, transform_indices = @transform_8, window_bounds = array<i64: 1, 64>}, {pipeline_mode = #tpu.pipeline_mode<synchronous>, transform_indices = @transform_9, window_bounds = array<i64: 64, 64>}, {pipeline_mode = #tpu.pipeline_mode<synchronous>, transform_indices = @transform_10, window_bounds = array<i64: 1, 64>}, {pipeline_mode = #tpu.pipeline_mode<synchronous>, transform_indices = @transform_11, window_bounds = array<i64: 64, 64>}, {pipeline_mode = #tpu.pipeline_mode<synchronous>, transform_indices = @transform_12, window_bounds = array<i64: 64, 128>}, {pipeline_mode = #tpu.pipeline_mode<synchronous>, transform_indices = @transform_13, window_bounds = array<i64: 128, 128>}, {transform_indices = @transform_14, window_bounds = array<i64: 8, 128>}]} {
    %c0 = arith.constant 0 : index
    %c0_0 = arith.constant 0 : index
    %0 = vector.load %arg1[%c0, %c0_0] : memref<8x8xf32, #tpu.memory_space<vmem>>, vector<8x8xf32>
    %c0_1 = arith.constant 0 : index
    %c0_2 = arith.constant 0 : index
    %c0_3 = arith.constant 0 : index
    %1 = vector.load %arg2[%c0_1, %c0_2, %c0_3] : memref<1x56x8xf32, #tpu.memory_space<vmem>>, vector<1x56x8xf32>
    %2 = vector.shape_cast %1 : vector<1x56x8xf32> to vector<56x8xf32>
    %c0_4 = arith.constant 0 : index
    %c0_5 = arith.constant 0 : index
    %3 = vector.load %arg3[%c0_4, %c0_5] : memref<8x8xf32, #tpu.memory_space<vmem>>, vector<8x8xf32>
    %c0_6 = arith.constant 0 : index
    %c0_7 = arith.constant 0 : index
    %4 = vector.load %arg4[%c0_6, %c0_7] : memref<8x64xf32, #tpu.memory_space<vmem>>, vector<8x64xf32>
    %c0_8 = arith.constant 0 : index
    %c0_9 = arith.constant 0 : index
    %5 = vector.load %arg5[%c0_8, %c0_9] : memref<1x64xf32, #tpu.memory_space<vmem>>, vector<1x64xf32>
    %c0_10 = arith.constant 0 : index
    %c0_11 = arith.constant 0 : index
    %6 = vector.load %arg6[%c0_10, %c0_11] : memref<64x64xf32, #tpu.memory_space<vmem>>, vector<64x64xf32>
    %c0_12 = arith.constant 0 : index
    %c0_13 = arith.constant 0 : index
    %7 = vector.load %arg7[%c0_12, %c0_13] : memref<1x64xf32, #tpu.memory_space<vmem>>, vector<1x64xf32>
    %cst = arith.constant dense<0.000000e+00> : vector<8x64xf32>
    %8 = tpu.matmul %0, %4, %cst {dimension_numbers = #tpu.dot_dimension_numbers<[1], [0], [0], [1], [0, 0, 1, 1], [], []>, precision = #tpu.contract_precision<fp32>} : vector<8x8xf32>, vector<8x64xf32>, vector<8x64xf32> -> vector<8x64xf32>
    %9 = vector.broadcast %5 : vector<1x64xf32> to vector<8x64xf32>
    %10 = arith.addf %8, %9 : vector<8x64xf32>
    %cst_14 = arith.constant 0.000000e+00 : f32
    %11 = vector.broadcast %cst_14 : f32 to vector<8x64xf32>
    %12 = arith.maximumf %10, %11 : vector<8x64xf32>
    %cst_15 = arith.constant dense<0.000000e+00> : vector<8x64xf32>
    %13 = tpu.matmul %12, %6, %cst_15 {dimension_numbers = #tpu.dot_dimension_numbers<[1], [0], [0], [1], [0, 0, 1, 1], [], []>, precision = #tpu.contract_precision<fp32>} : vector<8x64xf32>, vector<64x64xf32>, vector<8x64xf32> -> vector<8x64xf32>
    %14 = vector.broadcast %7 : vector<1x64xf32> to vector<8x64xf32>
    %15 = arith.addf %13, %14 : vector<8x64xf32>
    %cst_16 = arith.constant 0.000000e+00 : f32
    %16 = vector.broadcast %cst_16 : f32 to vector<8x64xf32>
    %17 = arith.maximumf %15, %16 : vector<8x64xf32>
    %c0_17 = arith.constant 0 : index
    %c0_18 = arith.constant 0 : index
    %18 = vector.load %arg8[%c0_17, %c0_18] : memref<8x64xf32, #tpu.memory_space<vmem>>, vector<8x64xf32>
    %c0_19 = arith.constant 0 : index
    %c0_20 = arith.constant 0 : index
    %19 = vector.load %arg9[%c0_19, %c0_20] : memref<1x64xf32, #tpu.memory_space<vmem>>, vector<1x64xf32>
    %c0_21 = arith.constant 0 : index
    %c0_22 = arith.constant 0 : index
    %20 = vector.load %arg10[%c0_21, %c0_22] : memref<64x64xf32, #tpu.memory_space<vmem>>, vector<64x64xf32>
    %c0_23 = arith.constant 0 : index
    %c0_24 = arith.constant 0 : index
    %21 = vector.load %arg11[%c0_23, %c0_24] : memref<1x64xf32, #tpu.memory_space<vmem>>, vector<1x64xf32>
    %cst_25 = arith.constant dense<0.000000e+00> : vector<56x64xf32>
    %22 = tpu.matmul %2, %18, %cst_25 {dimension_numbers = #tpu.dot_dimension_numbers<[1], [0], [0], [1], [0, 0, 1, 1], [], []>, precision = #tpu.contract_precision<fp32>} : vector<56x8xf32>, vector<8x64xf32>, vector<56x64xf32> -> vector<56x64xf32>
    %23 = vector.broadcast %19 : vector<1x64xf32> to vector<56x64xf32>
    %24 = arith.addf %22, %23 : vector<56x64xf32>
    %cst_26 = arith.constant 0.000000e+00 : f32
    %25 = vector.broadcast %cst_26 : f32 to vector<56x64xf32>
    %26 = arith.maximumf %24, %25 : vector<56x64xf32>
    %cst_27 = arith.constant dense<0.000000e+00> : vector<56x64xf32>
    %27 = tpu.matmul %26, %20, %cst_27 {dimension_numbers = #tpu.dot_dimension_numbers<[1], [0], [0], [1], [0, 0, 1, 1], [], []>, precision = #tpu.contract_precision<fp32>} : vector<56x64xf32>, vector<64x64xf32>, vector<56x64xf32> -> vector<56x64xf32>
    %28 = vector.broadcast %21 : vector<1x64xf32> to vector<56x64xf32>
    %29 = arith.addf %27, %28 : vector<56x64xf32>
    %cst_28 = arith.constant 0.000000e+00 : f32
    %30 = vector.broadcast %cst_28 : f32 to vector<56x64xf32>
    %31 = arith.maximumf %29, %30 : vector<56x64xf32>
    %c0_29 = arith.constant 0 : index
    %c0_30 = arith.constant 0 : index
    %32 = vector.load %arg12[%c0_29, %c0_30] : memref<64x64xf32, #tpu.memory_space<vmem>>, vector<64x64xf32>
    %cst_31 = arith.constant dense<0.000000e+00> : vector<8x64xf32>
    %33 = tpu.matmul %17, %32, %cst_31 {dimension_numbers = #tpu.dot_dimension_numbers<[1], [0], [0], [1], [0, 0, 1, 1], [], []>, precision = #tpu.contract_precision<fp32>} : vector<8x64xf32>, vector<64x64xf32>, vector<8x64xf32> -> vector<8x64xf32>
    %c0_32 = arith.constant 0 : index
    %c0_33 = arith.constant 0 : index
    %34 = vector.load %arg13[%c0_32, %c0_33] : memref<64x128xf32, #tpu.memory_space<vmem>>, vector<64x128xf32>
    %cst_34 = arith.constant dense<0.000000e+00> : vector<8x128xf32>
    %35 = tpu.matmul %17, %34, %cst_34 {dimension_numbers = #tpu.dot_dimension_numbers<[1], [0], [0], [1], [0, 0, 1, 1], [], []>, precision = #tpu.contract_precision<fp32>} : vector<8x64xf32>, vector<64x128xf32>, vector<8x128xf32> -> vector<8x128xf32>
    %c0_35 = arith.constant 0 : index
    %c0_36 = arith.constant 0 : index
    %36 = vector.load %arg13[%c0_35, %c0_36] : memref<64x128xf32, #tpu.memory_space<vmem>>, vector<64x128xf32>
    %cst_37 = arith.constant dense<0.000000e+00> : vector<56x128xf32>
    %37 = tpu.matmul %31, %36, %cst_37 {dimension_numbers = #tpu.dot_dimension_numbers<[1], [0], [0], [1], [0, 0, 1, 1], [], []>, precision = #tpu.contract_precision<fp32>} : vector<56x64xf32>, vector<64x128xf32>, vector<56x128xf32> -> vector<56x128xf32>
    %38 = vector.extract_strided_slice %37 {offsets = [0, 0], sizes = [8, 128], strides = [1, 1]} : vector<56x128xf32> to vector<8x128xf32>
    %39 = vector.extract_strided_slice %37 {offsets = [8, 0], sizes = [8, 128], strides = [1, 1]} : vector<56x128xf32> to vector<8x128xf32>
    %40 = vector.extract_strided_slice %37 {offsets = [16, 0], sizes = [8, 128], strides = [1, 1]} : vector<56x128xf32> to vector<8x128xf32>
    %41 = vector.extract_strided_slice %37 {offsets = [24, 0], sizes = [8, 128], strides = [1, 1]} : vector<56x128xf32> to vector<8x128xf32>
    %42 = vector.extract_strided_slice %37 {offsets = [32, 0], sizes = [8, 128], strides = [1, 1]} : vector<56x128xf32> to vector<8x128xf32>
    %43 = vector.extract_strided_slice %37 {offsets = [40, 0], sizes = [8, 128], strides = [1, 1]} : vector<56x128xf32> to vector<8x128xf32>
    %44 = vector.extract_strided_slice %37 {offsets = [48, 0], sizes = [8, 128], strides = [1, 1]} : vector<56x128xf32> to vector<8x128xf32>
    %45 = vector.extract_strided_slice %35 {offsets = [0, 0], sizes = [8, 64], strides = [1, 1]} : vector<8x128xf32> to vector<8x64xf32>
    %46 = arith.mulf %45, %33 : vector<8x64xf32>
    %47 = vector.extract_strided_slice %46 {offsets = [0, 0], sizes = [8, 32], strides = [1, 1]} : vector<8x64xf32> to vector<8x32xf32>
    %cst_38 = arith.constant dense<0.000000e+00> : vector<8xf32>
    %48 = vector.multi_reduction <add>, %47, %cst_38 [1] : vector<8x32xf32> to vector<8xf32>
    %49 = vector.shape_cast %48 : vector<8xf32> to vector<8x1xf32>
    %cst_39 = arith.constant 0.176776692 : f32
    %50 = vector.broadcast %cst_39 : f32 to vector<8x1xf32>
    %51 = arith.mulf %49, %50 : vector<8x1xf32>
    %52 = vector.extract_strided_slice %46 {offsets = [0, 32], sizes = [8, 32], strides = [1, 1]} : vector<8x64xf32> to vector<8x32xf32>
    %cst_40 = arith.constant dense<0.000000e+00> : vector<8xf32>
    %53 = vector.multi_reduction <add>, %52, %cst_40 [1] : vector<8x32xf32> to vector<8xf32>
    %54 = vector.shape_cast %53 : vector<8xf32> to vector<8x1xf32>
    %cst_41 = arith.constant 0.176776692 : f32
    %55 = vector.broadcast %cst_41 : f32 to vector<8x1xf32>
    %56 = arith.mulf %54, %55 : vector<8x1xf32>
    %57 = vector.extract_strided_slice %38 {offsets = [0, 0], sizes = [8, 64], strides = [1, 1]} : vector<8x128xf32> to vector<8x64xf32>
    %58 = arith.mulf %57, %33 : vector<8x64xf32>
    %59 = vector.extract_strided_slice %58 {offsets = [0, 0], sizes = [8, 32], strides = [1, 1]} : vector<8x64xf32> to vector<8x32xf32>
    %cst_42 = arith.constant dense<0.000000e+00> : vector<8xf32>
    %60 = vector.multi_reduction <add>, %59, %cst_42 [1] : vector<8x32xf32> to vector<8xf32>
    %61 = vector.shape_cast %60 : vector<8xf32> to vector<8x1xf32>
    %cst_43 = arith.constant 0.176776692 : f32
    %62 = vector.broadcast %cst_43 : f32 to vector<8x1xf32>
    %63 = arith.mulf %61, %62 : vector<8x1xf32>
    %64 = vector.extract_strided_slice %58 {offsets = [0, 32], sizes = [8, 32], strides = [1, 1]} : vector<8x64xf32> to vector<8x32xf32>
    %cst_44 = arith.constant dense<0.000000e+00> : vector<8xf32>
    %65 = vector.multi_reduction <add>, %64, %cst_44 [1] : vector<8x32xf32> to vector<8xf32>
    %66 = vector.shape_cast %65 : vector<8xf32> to vector<8x1xf32>
    %cst_45 = arith.constant 0.176776692 : f32
    %67 = vector.broadcast %cst_45 : f32 to vector<8x1xf32>
    %68 = arith.mulf %66, %67 : vector<8x1xf32>
    %69 = vector.extract_strided_slice %39 {offsets = [0, 0], sizes = [8, 64], strides = [1, 1]} : vector<8x128xf32> to vector<8x64xf32>
    %70 = arith.mulf %69, %33 : vector<8x64xf32>
    %71 = vector.extract_strided_slice %70 {offsets = [0, 0], sizes = [8, 32], strides = [1, 1]} : vector<8x64xf32> to vector<8x32xf32>
    %cst_46 = arith.constant dense<0.000000e+00> : vector<8xf32>
    %72 = vector.multi_reduction <add>, %71, %cst_46 [1] : vector<8x32xf32> to vector<8xf32>
    %73 = vector.shape_cast %72 : vector<8xf32> to vector<8x1xf32>
    %cst_47 = arith.constant 0.176776692 : f32
    %74 = vector.broadcast %cst_47 : f32 to vector<8x1xf32>
    %75 = arith.mulf %73, %74 : vector<8x1xf32>
    %76 = vector.extract_strided_slice %70 {offsets = [0, 32], sizes = [8, 32], strides = [1, 1]} : vector<8x64xf32> to vector<8x32xf32>
    %cst_48 = arith.constant dense<0.000000e+00> : vector<8xf32>
    %77 = vector.multi_reduction <add>, %76, %cst_48 [1] : vector<8x32xf32> to vector<8xf32>
    %78 = vector.shape_cast %77 : vector<8xf32> to vector<8x1xf32>
    %cst_49 = arith.constant 0.176776692 : f32
    %79 = vector.broadcast %cst_49 : f32 to vector<8x1xf32>
    %80 = arith.mulf %78, %79 : vector<8x1xf32>
    %81 = vector.extract_strided_slice %40 {offsets = [0, 0], sizes = [8, 64], strides = [1, 1]} : vector<8x128xf32> to vector<8x64xf32>
    %82 = arith.mulf %81, %33 : vector<8x64xf32>
    %83 = vector.extract_strided_slice %82 {offsets = [0, 0], sizes = [8, 32], strides = [1, 1]} : vector<8x64xf32> to vector<8x32xf32>
    %cst_50 = arith.constant dense<0.000000e+00> : vector<8xf32>
    %84 = vector.multi_reduction <add>, %83, %cst_50 [1] : vector<8x32xf32> to vector<8xf32>
    %85 = vector.shape_cast %84 : vector<8xf32> to vector<8x1xf32>
    %cst_51 = arith.constant 0.176776692 : f32
    %86 = vector.broadcast %cst_51 : f32 to vector<8x1xf32>
    %87 = arith.mulf %85, %86 : vector<8x1xf32>
    %88 = vector.extract_strided_slice %82 {offsets = [0, 32], sizes = [8, 32], strides = [1, 1]} : vector<8x64xf32> to vector<8x32xf32>
    %cst_52 = arith.constant dense<0.000000e+00> : vector<8xf32>
    %89 = vector.multi_reduction <add>, %88, %cst_52 [1] : vector<8x32xf32> to vector<8xf32>
    %90 = vector.shape_cast %89 : vector<8xf32> to vector<8x1xf32>
    %cst_53 = arith.constant 0.176776692 : f32
    %91 = vector.broadcast %cst_53 : f32 to vector<8x1xf32>
    %92 = arith.mulf %90, %91 : vector<8x1xf32>
    %93 = vector.extract_strided_slice %41 {offsets = [0, 0], sizes = [8, 64], strides = [1, 1]} : vector<8x128xf32> to vector<8x64xf32>
    %94 = arith.mulf %93, %33 : vector<8x64xf32>
    %95 = vector.extract_strided_slice %94 {offsets = [0, 0], sizes = [8, 32], strides = [1, 1]} : vector<8x64xf32> to vector<8x32xf32>
    %cst_54 = arith.constant dense<0.000000e+00> : vector<8xf32>
    %96 = vector.multi_reduction <add>, %95, %cst_54 [1] : vector<8x32xf32> to vector<8xf32>
    %97 = vector.shape_cast %96 : vector<8xf32> to vector<8x1xf32>
    %cst_55 = arith.constant 0.176776692 : f32
    %98 = vector.broadcast %cst_55 : f32 to vector<8x1xf32>
    %99 = arith.mulf %97, %98 : vector<8x1xf32>
    %100 = vector.extract_strided_slice %94 {offsets = [0, 32], sizes = [8, 32], strides = [1, 1]} : vector<8x64xf32> to vector<8x32xf32>
    %cst_56 = arith.constant dense<0.000000e+00> : vector<8xf32>
    %101 = vector.multi_reduction <add>, %100, %cst_56 [1] : vector<8x32xf32> to vector<8xf32>
    %102 = vector.shape_cast %101 : vector<8xf32> to vector<8x1xf32>
    %cst_57 = arith.constant 0.176776692 : f32
    %103 = vector.broadcast %cst_57 : f32 to vector<8x1xf32>
    %104 = arith.mulf %102, %103 : vector<8x1xf32>
    %105 = vector.extract_strided_slice %42 {offsets = [0, 0], sizes = [8, 64], strides = [1, 1]} : vector<8x128xf32> to vector<8x64xf32>
    %106 = arith.mulf %105, %33 : vector<8x64xf32>
    %107 = vector.extract_strided_slice %106 {offsets = [0, 0], sizes = [8, 32], strides = [1, 1]} : vector<8x64xf32> to vector<8x32xf32>
    %cst_58 = arith.constant dense<0.000000e+00> : vector<8xf32>
    %108 = vector.multi_reduction <add>, %107, %cst_58 [1] : vector<8x32xf32> to vector<8xf32>
    %109 = vector.shape_cast %108 : vector<8xf32> to vector<8x1xf32>
    %cst_59 = arith.constant 0.176776692 : f32
    %110 = vector.broadcast %cst_59 : f32 to vector<8x1xf32>
    %111 = arith.mulf %109, %110 : vector<8x1xf32>
    %112 = vector.extract_strided_slice %106 {offsets = [0, 32], sizes = [8, 32], strides = [1, 1]} : vector<8x64xf32> to vector<8x32xf32>
    %cst_60 = arith.constant dense<0.000000e+00> : vector<8xf32>
    %113 = vector.multi_reduction <add>, %112, %cst_60 [1] : vector<8x32xf32> to vector<8xf32>
    %114 = vector.shape_cast %113 : vector<8xf32> to vector<8x1xf32>
    %cst_61 = arith.constant 0.176776692 : f32
    %115 = vector.broadcast %cst_61 : f32 to vector<8x1xf32>
    %116 = arith.mulf %114, %115 : vector<8x1xf32>
    %117 = vector.extract_strided_slice %43 {offsets = [0, 0], sizes = [8, 64], strides = [1, 1]} : vector<8x128xf32> to vector<8x64xf32>
    %118 = arith.mulf %117, %33 : vector<8x64xf32>
    %119 = vector.extract_strided_slice %118 {offsets = [0, 0], sizes = [8, 32], strides = [1, 1]} : vector<8x64xf32> to vector<8x32xf32>
    %cst_62 = arith.constant dense<0.000000e+00> : vector<8xf32>
    %120 = vector.multi_reduction <add>, %119, %cst_62 [1] : vector<8x32xf32> to vector<8xf32>
    %121 = vector.shape_cast %120 : vector<8xf32> to vector<8x1xf32>
    %cst_63 = arith.constant 0.176776692 : f32
    %122 = vector.broadcast %cst_63 : f32 to vector<8x1xf32>
    %123 = arith.mulf %121, %122 : vector<8x1xf32>
    %124 = vector.extract_strided_slice %118 {offsets = [0, 32], sizes = [8, 32], strides = [1, 1]} : vector<8x64xf32> to vector<8x32xf32>
    %cst_64 = arith.constant dense<0.000000e+00> : vector<8xf32>
    %125 = vector.multi_reduction <add>, %124, %cst_64 [1] : vector<8x32xf32> to vector<8xf32>
    %126 = vector.shape_cast %125 : vector<8xf32> to vector<8x1xf32>
    %cst_65 = arith.constant 0.176776692 : f32
    %127 = vector.broadcast %cst_65 : f32 to vector<8x1xf32>
    %128 = arith.mulf %126, %127 : vector<8x1xf32>
    %129 = vector.extract_strided_slice %44 {offsets = [0, 0], sizes = [8, 64], strides = [1, 1]} : vector<8x128xf32> to vector<8x64xf32>
    %130 = arith.mulf %129, %33 : vector<8x64xf32>
    %131 = vector.extract_strided_slice %130 {offsets = [0, 0], sizes = [8, 32], strides = [1, 1]} : vector<8x64xf32> to vector<8x32xf32>
    %cst_66 = arith.constant dense<0.000000e+00> : vector<8xf32>
    %132 = vector.multi_reduction <add>, %131, %cst_66 [1] : vector<8x32xf32> to vector<8xf32>
    %133 = vector.shape_cast %132 : vector<8xf32> to vector<8x1xf32>
    %cst_67 = arith.constant 0.176776692 : f32
    %134 = vector.broadcast %cst_67 : f32 to vector<8x1xf32>
    %135 = arith.mulf %133, %134 : vector<8x1xf32>
    %136 = vector.extract_strided_slice %130 {offsets = [0, 32], sizes = [8, 32], strides = [1, 1]} : vector<8x64xf32> to vector<8x32xf32>
    %cst_68 = arith.constant dense<0.000000e+00> : vector<8xf32>
    %137 = vector.multi_reduction <add>, %136, %cst_68 [1] : vector<8x32xf32> to vector<8xf32>
    %138 = vector.shape_cast %137 : vector<8xf32> to vector<8x1xf32>
    %cst_69 = arith.constant 0.176776692 : f32
    %139 = vector.broadcast %cst_69 : f32 to vector<8x1xf32>
    %140 = arith.mulf %138, %139 : vector<8x1xf32>
    %cst_70 = arith.constant 5.000000e-01 : f32
    %141 = vector.broadcast %cst_70 : f32 to vector<8x8xf32>
    %142 = arith.cmpf olt, %3, %141 : vector<8x8xf32>
    %143 = tpu.concatenate %51, %63, %75, %87, %99, %111, %123, %135 in 1 : vector<8x1xf32>, vector<8x1xf32>, vector<8x1xf32>, vector<8x1xf32>, vector<8x1xf32>, vector<8x1xf32>, vector<8x1xf32>, vector<8x1xf32> -> vector<8x8xf32>
    %cst_71 = arith.constant -1.000000e+09 : f32
    %144 = vector.broadcast %cst_71 : f32 to vector<8x8xf32>
    %145 = arith.select %142, %144, %143 : vector<8x8xi1>, vector<8x8xf32>
    %cst_72 = arith.constant dense<0xFF800000> : vector<8xf32>
    %146 = vector.multi_reduction <maximumf>, %145, %cst_72 [1] : vector<8x8xf32> to vector<8xf32>
    %147 = vector.shape_cast %146 : vector<8xf32> to vector<8x1xf32>
    %148 = vector.broadcast %147 : vector<8x1xf32> to vector<8x8xf32>
    %149 = arith.subf %145, %148 : vector<8x8xf32>
    %150 = math.exp %149 : vector<8x8xf32>
    %cst_73 = arith.constant dense<0.000000e+00> : vector<8xf32>
    %151 = vector.multi_reduction <add>, %150, %cst_73 [1] : vector<8x8xf32> to vector<8xf32>
    %152 = vector.shape_cast %151 : vector<8xf32> to vector<8x1xf32>
    %153 = tpu.reciprocal %152 : vector<8x1xf32> -> vector<8x1xf32>
    %154 = vector.broadcast %153 : vector<8x1xf32> to vector<8x8xf32>
    %155 = arith.mulf %150, %154 : vector<8x8xf32>
    %156 = vector.extract_strided_slice %155 {offsets = [0, 0], sizes = [8, 1], strides = [1, 1]} : vector<8x8xf32> to vector<8x1xf32>
    %157 = vector.extract_strided_slice %35 {offsets = [0, 64], sizes = [8, 32], strides = [1, 1]} : vector<8x128xf32> to vector<8x32xf32>
    %158 = vector.broadcast %156 : vector<8x1xf32> to vector<8x32xf32>
    %159 = arith.mulf %158, %157 : vector<8x32xf32>
    %160 = vector.extract_strided_slice %155 {offsets = [0, 1], sizes = [8, 1], strides = [1, 1]} : vector<8x8xf32> to vector<8x1xf32>
    %161 = vector.extract_strided_slice %38 {offsets = [0, 64], sizes = [8, 32], strides = [1, 1]} : vector<8x128xf32> to vector<8x32xf32>
    %162 = vector.broadcast %160 : vector<8x1xf32> to vector<8x32xf32>
    %163 = arith.mulf %162, %161 : vector<8x32xf32>
    %164 = arith.addf %159, %163 : vector<8x32xf32>
    %165 = vector.extract_strided_slice %155 {offsets = [0, 2], sizes = [8, 1], strides = [1, 1]} : vector<8x8xf32> to vector<8x1xf32>
    %166 = vector.extract_strided_slice %39 {offsets = [0, 64], sizes = [8, 32], strides = [1, 1]} : vector<8x128xf32> to vector<8x32xf32>
    %167 = vector.broadcast %165 : vector<8x1xf32> to vector<8x32xf32>
    %168 = arith.mulf %167, %166 : vector<8x32xf32>
    %169 = arith.addf %164, %168 : vector<8x32xf32>
    %170 = vector.extract_strided_slice %155 {offsets = [0, 3], sizes = [8, 1], strides = [1, 1]} : vector<8x8xf32> to vector<8x1xf32>
    %171 = vector.extract_strided_slice %40 {offsets = [0, 64], sizes = [8, 32], strides = [1, 1]} : vector<8x128xf32> to vector<8x32xf32>
    %172 = vector.broadcast %170 : vector<8x1xf32> to vector<8x32xf32>
    %173 = arith.mulf %172, %171 : vector<8x32xf32>
    %174 = arith.addf %169, %173 : vector<8x32xf32>
    %175 = vector.extract_strided_slice %155 {offsets = [0, 4], sizes = [8, 1], strides = [1, 1]} : vector<8x8xf32> to vector<8x1xf32>
    %176 = vector.extract_strided_slice %41 {offsets = [0, 64], sizes = [8, 32], strides = [1, 1]} : vector<8x128xf32> to vector<8x32xf32>
    %177 = vector.broadcast %175 : vector<8x1xf32> to vector<8x32xf32>
    %178 = arith.mulf %177, %176 : vector<8x32xf32>
    %179 = arith.addf %174, %178 : vector<8x32xf32>
    %180 = vector.extract_strided_slice %155 {offsets = [0, 5], sizes = [8, 1], strides = [1, 1]} : vector<8x8xf32> to vector<8x1xf32>
    %181 = vector.extract_strided_slice %42 {offsets = [0, 64], sizes = [8, 32], strides = [1, 1]} : vector<8x128xf32> to vector<8x32xf32>
    %182 = vector.broadcast %180 : vector<8x1xf32> to vector<8x32xf32>
    %183 = arith.mulf %182, %181 : vector<8x32xf32>
    %184 = arith.addf %179, %183 : vector<8x32xf32>
    %185 = vector.extract_strided_slice %155 {offsets = [0, 6], sizes = [8, 1], strides = [1, 1]} : vector<8x8xf32> to vector<8x1xf32>
    %186 = vector.extract_strided_slice %43 {offsets = [0, 64], sizes = [8, 32], strides = [1, 1]} : vector<8x128xf32> to vector<8x32xf32>
    %187 = vector.broadcast %185 : vector<8x1xf32> to vector<8x32xf32>
    %188 = arith.mulf %187, %186 : vector<8x32xf32>
    %189 = arith.addf %184, %188 : vector<8x32xf32>
    %190 = vector.extract_strided_slice %155 {offsets = [0, 7], sizes = [8, 1], strides = [1, 1]} : vector<8x8xf32> to vector<8x1xf32>
    %191 = vector.extract_strided_slice %44 {offsets = [0, 64], sizes = [8, 32], strides = [1, 1]} : vector<8x128xf32> to vector<8x32xf32>
    %192 = vector.broadcast %190 : vector<8x1xf32> to vector<8x32xf32>
    %193 = arith.mulf %192, %191 : vector<8x32xf32>
    %194 = arith.addf %189, %193 : vector<8x32xf32>
    %195 = tpu.concatenate %56, %68, %80, %92, %104, %116, %128, %140 in 1 : vector<8x1xf32>, vector<8x1xf32>, vector<8x1xf32>, vector<8x1xf32>, vector<8x1xf32>, vector<8x1xf32>, vector<8x1xf32>, vector<8x1xf32> -> vector<8x8xf32>
    %cst_74 = arith.constant -1.000000e+09 : f32
    %196 = vector.broadcast %cst_74 : f32 to vector<8x8xf32>
    %197 = arith.select %142, %196, %195 : vector<8x8xi1>, vector<8x8xf32>
    %cst_75 = arith.constant dense<0xFF800000> : vector<8xf32>
    %198 = vector.multi_reduction <maximumf>, %197, %cst_75 [1] : vector<8x8xf32> to vector<8xf32>
    %199 = vector.shape_cast %198 : vector<8xf32> to vector<8x1xf32>
    %200 = vector.broadcast %199 : vector<8x1xf32> to vector<8x8xf32>
    %201 = arith.subf %197, %200 : vector<8x8xf32>
    %202 = math.exp %201 : vector<8x8xf32>
    %cst_76 = arith.constant dense<0.000000e+00> : vector<8xf32>
    %203 = vector.multi_reduction <add>, %202, %cst_76 [1] : vector<8x8xf32> to vector<8xf32>
    %204 = vector.shape_cast %203 : vector<8xf32> to vector<8x1xf32>
    %205 = tpu.reciprocal %204 : vector<8x1xf32> -> vector<8x1xf32>
    %206 = vector.broadcast %205 : vector<8x1xf32> to vector<8x8xf32>
    %207 = arith.mulf %202, %206 : vector<8x8xf32>
    %208 = vector.extract_strided_slice %207 {offsets = [0, 0], sizes = [8, 1], strides = [1, 1]} : vector<8x8xf32> to vector<8x1xf32>
    %209 = vector.extract_strided_slice %35 {offsets = [0, 96], sizes = [8, 32], strides = [1, 1]} : vector<8x128xf32> to vector<8x32xf32>
    %210 = vector.broadcast %208 : vector<8x1xf32> to vector<8x32xf32>
    %211 = arith.mulf %210, %209 : vector<8x32xf32>
    %212 = vector.extract_strided_slice %207 {offsets = [0, 1], sizes = [8, 1], strides = [1, 1]} : vector<8x8xf32> to vector<8x1xf32>
    %213 = vector.extract_strided_slice %38 {offsets = [0, 96], sizes = [8, 32], strides = [1, 1]} : vector<8x128xf32> to vector<8x32xf32>
    %214 = vector.broadcast %212 : vector<8x1xf32> to vector<8x32xf32>
    %215 = arith.mulf %214, %213 : vector<8x32xf32>
    %216 = arith.addf %211, %215 : vector<8x32xf32>
    %217 = vector.extract_strided_slice %207 {offsets = [0, 2], sizes = [8, 1], strides = [1, 1]} : vector<8x8xf32> to vector<8x1xf32>
    %218 = vector.extract_strided_slice %39 {offsets = [0, 96], sizes = [8, 32], strides = [1, 1]} : vector<8x128xf32> to vector<8x32xf32>
    %219 = vector.broadcast %217 : vector<8x1xf32> to vector<8x32xf32>
    %220 = arith.mulf %219, %218 : vector<8x32xf32>
    %221 = arith.addf %216, %220 : vector<8x32xf32>
    %222 = vector.extract_strided_slice %207 {offsets = [0, 3], sizes = [8, 1], strides = [1, 1]} : vector<8x8xf32> to vector<8x1xf32>
    %223 = vector.extract_strided_slice %40 {offsets = [0, 96], sizes = [8, 32], strides = [1, 1]} : vector<8x128xf32> to vector<8x32xf32>
    %224 = vector.broadcast %222 : vector<8x1xf32> to vector<8x32xf32>
    %225 = arith.mulf %224, %223 : vector<8x32xf32>
    %226 = arith.addf %221, %225 : vector<8x32xf32>
    %227 = vector.extract_strided_slice %207 {offsets = [0, 4], sizes = [8, 1], strides = [1, 1]} : vector<8x8xf32> to vector<8x1xf32>
    %228 = vector.extract_strided_slice %41 {offsets = [0, 96], sizes = [8, 32], strides = [1, 1]} : vector<8x128xf32> to vector<8x32xf32>
    %229 = vector.broadcast %227 : vector<8x1xf32> to vector<8x32xf32>
    %230 = arith.mulf %229, %228 : vector<8x32xf32>
    %231 = arith.addf %226, %230 : vector<8x32xf32>
    %232 = vector.extract_strided_slice %207 {offsets = [0, 5], sizes = [8, 1], strides = [1, 1]} : vector<8x8xf32> to vector<8x1xf32>
    %233 = vector.extract_strided_slice %42 {offsets = [0, 96], sizes = [8, 32], strides = [1, 1]} : vector<8x128xf32> to vector<8x32xf32>
    %234 = vector.broadcast %232 : vector<8x1xf32> to vector<8x32xf32>
    %235 = arith.mulf %234, %233 : vector<8x32xf32>
    %236 = arith.addf %231, %235 : vector<8x32xf32>
    %237 = vector.extract_strided_slice %207 {offsets = [0, 6], sizes = [8, 1], strides = [1, 1]} : vector<8x8xf32> to vector<8x1xf32>
    %238 = vector.extract_strided_slice %43 {offsets = [0, 96], sizes = [8, 32], strides = [1, 1]} : vector<8x128xf32> to vector<8x32xf32>
    %239 = vector.broadcast %237 : vector<8x1xf32> to vector<8x32xf32>
    %240 = arith.mulf %239, %238 : vector<8x32xf32>
    %241 = arith.addf %236, %240 : vector<8x32xf32>
    %242 = vector.extract_strided_slice %207 {offsets = [0, 7], sizes = [8, 1], strides = [1, 1]} : vector<8x8xf32> to vector<8x1xf32>
    %243 = vector.extract_strided_slice %44 {offsets = [0, 96], sizes = [8, 32], strides = [1, 1]} : vector<8x128xf32> to vector<8x32xf32>
    %244 = vector.broadcast %242 : vector<8x1xf32> to vector<8x32xf32>
    %245 = arith.mulf %244, %243 : vector<8x32xf32>
    %246 = arith.addf %241, %245 : vector<8x32xf32>
    %247 = tpu.concatenate %194, %246, %17 in 1 : vector<8x32xf32>, vector<8x32xf32>, vector<8x64xf32> -> vector<8x128xf32>
    %c0_77 = arith.constant 0 : index
    %c0_78 = arith.constant 0 : index
    %248 = vector.load %arg14[%c0_77, %c0_78] : memref<128x128xf32, #tpu.memory_space<vmem>>, vector<128x128xf32>
    %cst_79 = arith.constant dense<0.000000e+00> : vector<8x128xf32>
    %249 = tpu.matmul %247, %248, %cst_79 {dimension_numbers = #tpu.dot_dimension_numbers<[1], [0], [0], [1], [0, 0, 1, 1], [], []>, precision = #tpu.contract_precision<fp32>} : vector<8x128xf32>, vector<128x128xf32>, vector<8x128xf32> -> vector<8x128xf32>
    %c0_80 = arith.constant 0 : index
    %c0_81 = arith.constant 0 : index
    %250 = vector.load %arg15[%c0_80, %c0_81] : memref<8x128xf32, #tpu.memory_space<vmem>>, vector<8x128xf32>
    tpu.vector_store %arg15[%c0_80, %c0_81], %249 {strides = array<i32>} : memref<8x128xf32, #tpu.memory_space<vmem>>, vector<8x128xf32>,
    return
  }
  func.func @transform_0(%arg0: i32) -> (i32, i32) {
    %c0_i32 = arith.constant 0 : i32
    %c0_i32_0 = arith.constant 0 : i32
    return %arg0, %c0_i32 : i32, i32
  }
  func.func @transform_1(%arg0: i32) -> (i32, i32, i32) {
    %c0_i32 = arith.constant 0 : i32
    %c0_i32_0 = arith.constant 0 : i32
    %c0_i32_1 = arith.constant 0 : i32
    return %arg0, %c0_i32, %c0_i32_0 : i32, i32, i32
  }
  func.func @transform_2(%arg0: i32) -> (i32, i32) {
    %c0_i32 = arith.constant 0 : i32
    %c0_i32_0 = arith.constant 0 : i32
    return %arg0, %c0_i32 : i32, i32
  }
  func.func @transform_3(%arg0: i32) -> (i32, i32) {
    %c0_i32 = arith.constant 0 : i32
    %c0_i32_0 = arith.constant 0 : i32
    %c0_i32_1 = arith.constant 0 : i32
    return %c0_i32, %c0_i32_0 : i32, i32
  }
  func.func @transform_4(%arg0: i32) -> (i32, i32) {
    %c0_i32 = arith.constant 0 : i32
    %c0_i32_0 = arith.constant 0 : i32
    %c0_i32_1 = arith.constant 0 : i32
    return %c0_i32, %c0_i32_0 : i32, i32
  }
  func.func @transform_5(%arg0: i32) -> (i32, i32) {
    %c0_i32 = arith.constant 0 : i32
    %c0_i32_0 = arith.constant 0 : i32
    %c0_i32_1 = arith.constant 0 : i32
    return %c0_i32, %c0_i32_0 : i32, i32
  }
  func.func @transform_6(%arg0: i32) -> (i32, i32) {
    %c0_i32 = arith.constant 0 : i32
    %c0_i32_0 = arith.constant 0 : i32
    %c0_i32_1 = arith.constant 0 : i32
    return %c0_i32, %c0_i32_0 : i32, i32
  }
  func.func @transform_7(%arg0: i32) -> (i32, i32) {
    %c0_i32 = arith.constant 0 : i32
    %c0_i32_0 = arith.constant 0 : i32
    %c0_i32_1 = arith.constant 0 : i32
    return %c0_i32, %c0_i32_0 : i32, i32
  }
  func.func @transform_8(%arg0: i32) -> (i32, i32) {
    %c0_i32 = arith.constant 0 : i32
    %c0_i32_0 = arith.constant 0 : i32
    %c0_i32_1 = arith.constant 0 : i32
    return %c0_i32, %c0_i32_0 : i32, i32
  }
  func.func @transform_9(%arg0: i32) -> (i32, i32) {
    %c0_i32 = arith.constant 0 : i32
    %c0_i32_0 = arith.constant 0 : i32
    %c0_i32_1 = arith.constant 0 : i32
    return %c0_i32, %c0_i32_0 : i32, i32
  }
  func.func @transform_10(%arg0: i32) -> (i32, i32) {
    %c0_i32 = arith.constant 0 : i32
    %c0_i32_0 = arith.constant 0 : i32
    %c0_i32_1 = arith.constant 0 : i32
    return %c0_i32, %c0_i32_0 : i32, i32
  }
  func.func @transform_11(%arg0: i32) -> (i32, i32) {
    %c0_i32 = arith.constant 0 : i32
    %c0_i32_0 = arith.constant 0 : i32
    %c0_i32_1 = arith.constant 0 : i32
    return %c0_i32, %c0_i32_0 : i32, i32
  }
  func.func @transform_12(%arg0: i32) -> (i32, i32) {
    %c0_i32 = arith.constant 0 : i32
    %c0_i32_0 = arith.constant 0 : i32
    %c0_i32_1 = arith.constant 0 : i32
    return %c0_i32, %c0_i32_0 : i32, i32
  }
  func.func @transform_13(%arg0: i32) -> (i32, i32) {
    %c0_i32 = arith.constant 0 : i32
    %c0_i32_0 = arith.constant 0 : i32
    %c0_i32_1 = arith.constant 0 : i32
    return %c0_i32, %c0_i32_0 : i32, i32
  }
  func.func @transform_14(%arg0: i32) -> (i32, i32) {
    %c0_i32 = arith.constant 0 : i32
    %c0_i32_0 = arith.constant 0 : i32
    return %arg0, %c0_i32 : i32, i32
  }
}

</mosaic_0001>

<llo_original>
// kernel: tpu_custom_call.1
$region0: #{tpu_custom_call.1}
  #allocation0 [shape = 'u32[]', space=smem, size = 0x4, offset = 0x4, fixed_abs, tag = 'smem constant byte address 0x4 - core index']
  #allocation1 [shape = 'u32[72,128]{1,0:T(1,128)}', space=vmem, size = 0x9000, scoped, tag = 'internal scratch']
  %s0 = inlined_call_operand.vmem [shape: f32[16,8], index: 0, kind: input, shape index: {}]
  %s1 = inlined_call_operand.vmem [shape: f32[2,56,8], index: 1, kind: input, shape index: {}]
  %s2 = inlined_call_operand.vmem [shape: f32[16,8], index: 2, kind: input, shape index: {}]
  %s3 = inlined_call_operand.vmem [shape: f32[8,64], index: 3, kind: input, shape index: {}]
  %s4 = inlined_call_operand.vmem [shape: f32[1,64], index: 4, kind: input, shape index: {}]
  %s5 = inlined_call_operand.hbm [shape: f32[64,64], index: 5, kind: input, shape index: {}]
  %s6 = inlined_call_operand.vmem [shape: f32[1,64], index: 6, kind: input, shape index: {}]
  %s7 = inlined_call_operand.vmem [shape: f32[8,64], index: 7, kind: input, shape index: {}]
  %s8 = inlined_call_operand.vmem [shape: f32[1,64], index: 8, kind: input, shape index: {}]
  %s9 = inlined_call_operand.hbm [shape: f32[64,64], index: 9, kind: input, shape index: {}]
  %s10 = inlined_call_operand.vmem [shape: f32[1,64], index: 10, kind: input, shape index: {}]
  %s11 = inlined_call_operand.hbm [shape: f32[64,64], index: 11, kind: input, shape index: {}]
  %s12 = inlined_call_operand.hbm [shape: f32[64,128], index: 12, kind: input, shape index: {}]
  %s13 = inlined_call_operand.vmem [shape: f32[128,128], index: 13, kind: input, shape index: {}]
  %s14 = inlined_call_operand.hbm [shape: f32[16,128], index: 14, kind: output, shape index: {}]
  %s15 = sld [smem:[#allocation0]]
  $region105: #{tpu_custom_call.1} parent=0
    _
  %s17 = ssub.s32 1, %s15
  %s18 = scalar_select 0, %s17, %s15
  $region1: #{tpu_custom_call.1} parent=0
    #allocation2 [shape = 'u8[32768]{0}', space=vmem, size = 0x8000, scoped, tag = 'input window, operand 5, single buffered']
    #allocation3 [shape = 's32[2]{0}', space=sflag, size = 0x8, scoped, tag = 'scoped memory for tpu_custom_call.1']
    #allocation4 [shape = 's32[2]{0}', space=sflag, size = 0x8, scoped, tag = 'scoped memory for tpu_custom_call.1']
    #allocation5 [shape = 'u8[32768]{0}', space=vmem, size = 0x8000, scoped, tag = 'input window, operand 9, single buffered']
    #allocation6 [shape = 's32[1]{0}', space=sflag, size = 0x4, scoped, tag = 'scoped memory for tpu_custom_call.1']
    #allocation7 [shape = 'u8[32768]{0}', space=vmem, size = 0x8000, scoped, tag = 'input window, operand 11, single buffered']
    #allocation8 [shape = 'u8[32768]{0}', space=vmem, size = 0x8000, scoped, tag = 'input window, operand 12, single buffered']
    #allocation9 [shape = 's32[1]{0}', space=sflag, size = 0x4, scoped, tag = 'scoped memory for tpu_custom_call.1']
    #allocation10 [shape = 'u8[8192]{0}', space=vmem, size = 0x2000, scoped, tag = 'output window, operand 0']
    %19 = vsyncpa [#allocation3], 0
    %20 = vsyncpa [#allocation6], 0
    %21 = vsyncpa [#allocation9], 0
    %22 = vsyncpa [#allocation4], 0
    %s23 = scalar_lea.sflag [#allocation4], 1
    %24 = vsyncpa %s23, 0
    loop: start=0, step=1, limit=4
    $region2: #{tpu_custom_call.1} parent=1 // loop_pre_header
      _
    $region3: #{tpu_custom_call.1} parent=1 // loop_header
      %s26 = sphi 0, %s30
      %p27 = scmp.ge.s32.totalorder %s26, 4
      %s36 = sphi 0, %s38
      %s39 = sphi 0, %s36
      %s40 = sphi 0, %s39
      %s56 = sphi 0, %s40
      %s62 = sphi 0, %s64
      %s65 = sphi 0, %s62
      %s66 = sphi 0, %s65
      %s82 = sphi 0, %s66
      %s88 = sphi 0, %s90
      %s91 = sphi 0, %s88
      %s92 = sphi 0, %s91
      %s108 = sphi 0, %s92
      %s112 = sphi 0, %s112
      %s114 = sphi 0, %s112
      %s115 = sphi 0, %s114
      %s129 = sphi 0, %s115
      %s133 = sphi 0, %s133
      %s135 = sphi 0, %s133
      %s136 = sphi 0, %s135
      %s150 = sphi 0, %s136
      %s154 = sphi 0, %s154
      %s156 = sphi 0, %s154
      %s157 = sphi 0, %s156
      %s171 = sphi 0, %s157
      %s175 = sphi 0, %s175
      %s177 = sphi 0, %s175
      %s178 = sphi 0, %s177
      %s192 = sphi 0, %s178
      %s196 = sphi 0, %s196
      %s198 = sphi 0, %s196
      %s199 = sphi 0, %s198
      %s213 = sphi 0, %s199
      %s217 = sphi 0, %s217
      %s219 = sphi 0, %s217
      %s220 = sphi 0, %s219
      %s234 = sphi 0, %s220
      %s238 = sphi 0, %s238
      %s240 = sphi 0, %s238
      %s241 = sphi 0, %s240
      %s255 = sphi 0, %s241
      %s259 = sphi 0, %s259
      %s261 = sphi 0, %s259
      %s262 = sphi 0, %s261
      %s276 = sphi 0, %s262
      %s280 = sphi 0, %s280
      %s282 = sphi 0, %s280
      %s283 = sphi 0, %s282
      %s297 = sphi 0, %s283
      %s301 = sphi 0, %s301
      %s303 = sphi 0, %s301
      %s304 = sphi 0, %s303
      %s318 = sphi 0, %s304
      %s322 = sphi 0, %s322
      %s324 = sphi 0, %s322
      %s325 = sphi 0, %s324
      %s339 = sphi 0, %s325
      %s345 = sphi 0, %s347
      %s348 = sphi 0, %s345
      %s349 = sphi 0, %s348
      %s365 = sphi 0, %s349
    $region4: #{tpu_custom_call.1} parent=1 // loop_header_branch
      %29 = sbr.rel (%p27) target = $region8
    $region5: #{tpu_custom_call.1} parent=1 // loop_body
      %s31 = ssub.s32 %s26, 1
      %s32 = ssub.s32 %s26, 2
      %s33 = sadd.s32 %s26, 1
      %s34 = ssub.s32 %s26, %s33
      %p35 = scmp.eq.s32.totalorder %s34, 0
      %s37 = sadd.s32 %s36, 1
      %s38 = scalar_select %p35, %s36, %s37
      %p41 = pneg %p35
      %p42 = scmp.eq.s32.totalorder %s26, 1
      %p43 = por %p41, %p42
      %p44 = scmp.ne.s32.totalorder %s36, %s39
      %p45 = scmp.eq.s32.totalorder %s26, 0
      %p46 = por %p44, %p45
      %p47 = scmp.ne.s32.totalorder %s36, %s39
      %p48 = scmp.eq.s32.totalorder %s31, 1
      %p49 = por %p47, %p48
      %p50 = scmp.ne.s32.totalorder %s39, %s40
      %p51 = scmp.eq.s32.totalorder %s31, 0
      %p52 = por %p50, %p51
      %p53 = scmp.ne.s32.totalorder %s39, %s40
      %p54 = scmp.eq.s32.totalorder %s32, 1
      %p55 = por %p53, %p54
      %p57 = scmp.ne.s32.totalorder %s40, %s56
      %p58 = scmp.eq.s32.totalorder %s32, 0
      %p59 = por %p57, %p58
      %s60 = ssub.s32 %s26, %s33
      %p61 = scmp.eq.s32.totalorder %s60, 0
      %s63 = sadd.s32 %s62, 1
      %s64 = scalar_select %p61, %s62, %s63
      %p67 = pneg %p61
      %p68 = scmp.eq.s32.totalorder %s26, 1
      %p69 = por %p67, %p68
      %p70 = scmp.ne.s32.totalorder %s62, %s65
      %p71 = scmp.eq.s32.totalorder %s26, 0
      %p72 = por %p70, %p71
      %p73 = scmp.ne.s32.totalorder %s62, %s65
      %p74 = scmp.eq.s32.totalorder %s31, 1
      %p75 = por %p73, %p74
      %p76 = scmp.ne.s32.totalorder %s65, %s66
      %p77 = scmp.eq.s32.totalorder %s31, 0
      %p78 = por %p76, %p77
      %p79 = scmp.ne.s32.totalorder %s65, %s66
      %p80 = scmp.eq.s32.totalorder %s32, 1
      %p81 = por %p79, %p80
      %p83 = scmp.ne.s32.totalorder %s66, %s82
      %p84 = scmp.eq.s32.totalorder %s32, 0
      %p85 = por %p83, %p84
      %s86 = ssub.s32 %s26, %s33
      %p87 = scmp.eq.s32.totalorder %s86, 0
      %s89 = sadd.s32 %s88, 1
      %s90 = scalar_select %p87, %s88, %s89
      %p93 = pneg %p87
      %p94 = scmp.eq.s32.totalorder %s26, 1
      %p95 = por %p93, %p94
      %p96 = scmp.ne.s32.totalorder %s88, %s91
      %p97 = scmp.eq.s32.totalorder %s26, 0
      %p98 = por %p96, %p97
      %p99 = scmp.ne.s32.totalorder %s88, %s91
      %p100 = scmp.eq.s32.totalorder %s31, 1
      %p101 = por %p99, %p100
      %p102 = scmp.ne.s32.totalorder %s91, %s92
      %p103 = scmp.eq.s32.totalorder %s31, 0
      %p104 = por %p102, %p103
      %p105 = scmp.ne.s32.totalorder %s91, %s92
      %p106 = scmp.eq.s32.totalorder %s32, 1
      %p107 = por %p105, %p106
      %p109 = scmp.ne.s32.totalorder %s92, %s108
      %p110 = scmp.eq.s32.totalorder %s32, 0
      %p111 = por %p109, %p110
      %s113 = sadd.s32 %s112, 1
      %p116 = scmp.eq.s32.totalorder %s26, 1
      %p117 = scmp.ne.s32.totalorder %s112, %s114
      %p118 = scmp.eq.s32.totalorder %s26, 0
      %p119 = por %p117, %p118
      %p120 = scmp.ne.s32.totalorder %s112, %s114
      %p121 = scmp.eq.s32.totalorder %s31, 1
      %p122 = por %p120, %p121
      %p123 = scmp.ne.s32.totalorder %s114, %s115
      %p124 = scmp.eq.s32.totalorder %s31, 0
      %p125 = por %p123, %p124
      %p126 = scmp.ne.s32.totalorder %s114, %s115
      %p127 = scmp.eq.s32.totalorder %s32, 1
      %p128 = por %p126, %p127
      %p130 = scmp.ne.s32.totalorder %s115, %s129
      %p131 = scmp.eq.s32.totalorder %s32, 0
      %p132 = por %p130, %p131
      %s134 = sadd.s32 %s133, 1
      %p137 = scmp.eq.s32.totalorder %s26, 1
      %p138 = scmp.ne.s32.totalorder %s133, %s135
      %p139 = scmp.eq.s32.totalorder %s26, 0
      %p140 = por %p138, %p139
      %p141 = scmp.ne.s32.totalorder %s133, %s135
      %p142 = scmp.eq.s32.totalorder %s31, 1
      %p143 = por %p141, %p142
      %p144 = scmp.ne.s32.totalorder %s135, %s136
      %p145 = scmp.eq.s32.totalorder %s31, 0
      %p146 = por %p144, %p145
      %p147 = scmp.ne.s32.totalorder %s135, %s136
      %p148 = scmp.eq.s32.totalorder %s32, 1
      %p149 = por %p147, %p148
      %p151 = scmp.ne.s32.totalorder %s136, %s150
      %p152 = scmp.eq.s32.totalorder %s32, 0
      %p153 = por %p151, %p152
      %s155 = sadd.s32 %s154, 1
      %p158 = scmp.eq.s32.totalorder %s26, 1
      %p159 = scmp.ne.s32.totalorder %s154, %s156
      %p160 = scmp.eq.s32.totalorder %s26, 0
      %p161 = por %p159, %p160
      %p162 = scmp.ne.s32.totalorder %s154, %s156
      %p163 = scmp.eq.s32.totalorder %s31, 1
      %p164 = por %p162, %p163
      %p165 = scmp.ne.s32.totalorder %s156, %s157
      %p166 = scmp.eq.s32.totalorder %s31, 0
      %p167 = por %p165, %p166
      %p168 = scmp.ne.s32.totalorder %s156, %s157
      %p169 = scmp.eq.s32.totalorder %s32, 1
      %p170 = por %p168, %p169
      %p172 = scmp.ne.s32.totalorder %s157, %s171
      %p173 = scmp.eq.s32.totalorder %s32, 0
      %p174 = por %p172, %p173
      %s176 = sadd.s32 %s175, 1
      %p179 = scmp.eq.s32.totalorder %s26, 1
      %p180 = scmp.ne.s32.totalorder %s175, %s177
      %p181 = scmp.eq.s32.totalorder %s26, 0
      %p182 = por %p180, %p181
      %p183 = scmp.ne.s32.totalorder %s175, %s177
      %p184 = scmp.eq.s32.totalorder %s31, 1
      %p185 = por %p183, %p184
      %p186 = scmp.ne.s32.totalorder %s177, %s178
      %p187 = scmp.eq.s32.totalorder %s31, 0
      %p188 = por %p186, %p187
      %p189 = scmp.ne.s32.totalorder %s177, %s178
      %p190 = scmp.eq.s32.totalorder %s32, 1
      %p191 = por %p189, %p190
      %p193 = scmp.ne.s32.totalorder %s178, %s192
      %p194 = scmp.eq.s32.totalorder %s32, 0
      %p195 = por %p193, %p194
      %s197 = sadd.s32 %s196, 1
      %p200 = scmp.eq.s32.totalorder %s26, 1
      %p201 = scmp.ne.s32.totalorder %s196, %s198
      %p202 = scmp.eq.s32.totalorder %s26, 0
      %p203 = por %p201, %p202
      %p204 = scmp.ne.s32.totalorder %s196, %s198
      %p205 = scmp.eq.s32.totalorder %s31, 1
      %p206 = por %p204, %p205
      %p207 = scmp.ne.s32.totalorder %s198, %s199
      %p208 = scmp.eq.s32.totalorder %s31, 0
      %p209 = por %p207, %p208
      %p210 = scmp.ne.s32.totalorder %s198, %s199
      %p211 = scmp.eq.s32.totalorder %s32, 1
      %p212 = por %p210, %p211
      %p214 = scmp.ne.s32.totalorder %s199, %s213
      %p215 = scmp.eq.s32.totalorder %s32, 0
      %p216 = por %p214, %p215
      %s218 = sadd.s32 %s217, 1
      %p221 = scmp.eq.s32.totalorder %s26, 1
      %p222 = scmp.ne.s32.totalorder %s217, %s219
      %p223 = scmp.eq.s32.totalorder %s26, 0
      %p224 = por %p222, %p223
      %p225 = scmp.ne.s32.totalorder %s217, %s219
      %p226 = scmp.eq.s32.totalorder %s31, 1
      %p227 = por %p225, %p226
      %p228 = scmp.ne.s32.totalorder %s219, %s220
      %p229 = scmp.eq.s32.totalorder %s31, 0
      %p230 = por %p228, %p229
      %p231 = scmp.ne.s32.totalorder %s219, %s220
      %p232 = scmp.eq.s32.totalorder %s32, 1
      %p233 = por %p231, %p232
      %p235 = scmp.ne.s32.totalorder %s220, %s234
      %p236 = scmp.eq.s32.totalorder %s32, 0
      %p237 = por %p235, %p236
      %s239 = sadd.s32 %s238, 1
      %p242 = scmp.eq.s32.totalorder %s26, 1
      %p243 = scmp.ne.s32.totalorder %s238, %s240
      %p244 = scmp.eq.s32.totalorder %s26, 0
      %p245 = por %p243, %p244
      %p246 = scmp.ne.s32.totalorder %s238, %s240
      %p247 = scmp.eq.s32.totalorder %s31, 1
      %p248 = por %p246, %p247
      %p249 = scmp.ne.s32.totalorder %s240, %s241
      %p250 = scmp.eq.s32.totalorder %s31, 0
      %p251 = por %p249, %p250
      %p252 = scmp.ne.s32.totalorder %s240, %s241
      %p253 = scmp.eq.s32.totalorder %s32, 1
      %p254 = por %p252, %p253
      %p256 = scmp.ne.s32.totalorder %s241, %s255
      %p257 = scmp.eq.s32.totalorder %s32, 0
      %p258 = por %p256, %p257
      %s260 = sadd.s32 %s259, 1
      %p263 = scmp.eq.s32.totalorder %s26, 1
      %p264 = scmp.ne.s32.totalorder %s259, %s261
      %p265 = scmp.eq.s32.totalorder %s26, 0
      %p266 = por %p264, %p265
      %p267 = scmp.ne.s32.totalorder %s259, %s261
      %p268 = scmp.eq.s32.totalorder %s31, 1
      %p269 = por %p267, %p268
      %p270 = scmp.ne.s32.totalorder %s261, %s262
      %p271 = scmp.eq.s32.totalorder %s31, 0
      %p272 = por %p270, %p271
      %p273 = scmp.ne.s32.totalorder %s261, %s262
      %p274 = scmp.eq.s32.totalorder %s32, 1
      %p275 = por %p273, %p274
      %p277 = scmp.ne.s32.totalorder %s262, %s276
      %p278 = scmp.eq.s32.totalorder %s32, 0
      %p279 = por %p277, %p278
      %s281 = sadd.s32 %s280, 1
      %p284 = scmp.eq.s32.totalorder %s26, 1
      %p285 = scmp.ne.s32.totalorder %s280, %s282
      %p286 = scmp.eq.s32.totalorder %s26, 0
      %p287 = por %p285, %p286
      %p288 = scmp.ne.s32.totalorder %s280, %s282
      %p289 = scmp.eq.s32.totalorder %s31, 1
      %p290 = por %p288, %p289
      %p291 = scmp.ne.s32.totalorder %s282, %s283
      %p292 = scmp.eq.s32.totalorder %s31, 0
      %p293 = por %p291, %p292
      %p294 = scmp.ne.s32.totalorder %s282, %s283
      %p295 = scmp.eq.s32.totalorder %s32, 1
      %p296 = por %p294, %p295
      %p298 = scmp.ne.s32.totalorder %s283, %s297
      %p299 = scmp.eq.s32.totalorder %s32, 0
      %p300 = por %p298, %p299
      %s302 = sadd.s32 %s301, 1
      %p305 = scmp.eq.s32.totalorder %s26, 1
      %p306 = scmp.ne.s32.totalorder %s301, %s303
      %p307 = scmp.eq.s32.totalorder %s26, 0
      %p308 = por %p306, %p307
      %p309 = scmp.ne.s32.totalorder %s301, %s303
      %p310 = scmp.eq.s32.totalorder %s31, 1
      %p311 = por %p309, %p310
      %p312 = scmp.ne.s32.totalorder %s303, %s304
      %p313 = scmp.eq.s32.totalorder %s31, 0
      %p314 = por %p312, %p313
      %p315 = scmp.ne.s32.totalorder %s303, %s304
      %p316 = scmp.eq.s32.totalorder %s32, 1
      %p317 = por %p315, %p316
      %p319 = scmp.ne.s32.totalorder %s304, %s318
      %p320 = scmp.eq.s32.totalorder %s32, 0
      %p321 = por %p319, %p320
      %s323 = sadd.s32 %s322, 1
      %p326 = scmp.eq.s32.totalorder %s26, 1
      %p327 = scmp.ne.s32.totalorder %s322, %s324
      %p328 = scmp.eq.s32.totalorder %s26, 0
      %p329 = por %p327, %p328
      %p330 = scmp.ne.s32.totalorder %s322, %s324
      %p331 = scmp.eq.s32.totalorder %s31, 1
      %p332 = por %p330, %p331
      %p333 = scmp.ne.s32.totalorder %s324, %s325
      %p334 = scmp.eq.s32.totalorder %s31, 0
      %p335 = por %p333, %p334
      %p336 = scmp.ne.s32.totalorder %s324, %s325
      %p337 = scmp.eq.s32.totalorder %s32, 1
      %p338 = por %p336, %p337
      %p340 = scmp.ne.s32.totalorder %s325, %s339
      %p341 = scmp.eq.s32.totalorder %s32, 0
      %p342 = por %p340, %p341
      %s343 = ssub.s32 %s26, %s33
      %p344 = scmp.eq.s32.totalorder %s343, 0
      %s346 = sadd.s32 %s345, 1
      %s347 = scalar_select %p344, %s345, %s346
      %p350 = pneg %p344
      %p351 = scmp.eq.s32.totalorder %s26, 1
      %p352 = por %p350, %p351
      %p353 = scmp.ne.s32.totalorder %s345, %s348
      %p354 = scmp.eq.s32.totalorder %s26, 0
      %p355 = por %p353, %p354
      %p356 = scmp.ne.s32.totalorder %s345, %s348
      %p357 = scmp.eq.s32.totalorder %s31, 1
      %p358 = por %p356, %p357
      %p359 = scmp.ne.s32.totalorder %s348, %s349
      %p360 = scmp.eq.s32.totalorder %s31, 0
      %p361 = por %p359, %p360
      %p362 = scmp.ne.s32.totalorder %s348, %s349
      %p363 = scmp.eq.s32.totalorder %s32, 1
      %p364 = por %p362, %p363
      %p366 = scmp.ne.s32.totalorder %s349, %s365
      %p367 = scmp.eq.s32.totalorder %s32, 0
      %p368 = por %p366, %p367
      %p369 = scmp.le.s32.totalorder 1, %s26
      %p370 = scmp.lt.s32.totalorder %s26, 3
      %p371 = pnand %p369, %p370
      %p372 = pneg %p371
      // Predicated region
      $region9: #{tpu_custom_call.1} parent=5 // pred_check
        _
      $region10: #{tpu_custom_call.1} parent=5 // pred_check_branch
        %374 = sbr.rel (%p371) target = $region12
      $region11: #{tpu_custom_call.1} parent=5 // pred_region
        %s375 = ssub.s32 %s26, 1
        // Predicated region
        $region13: #{tpu_custom_call.1} parent=11 // pred_check
          %p376 = pneg %p125
        $region14: #{tpu_custom_call.1} parent=11 // pred_check_branch
          %378 = sbr.rel (%p376) target = $region16
        $region15: #{tpu_custom_call.1} parent=11 // pred_region
          _
        $region16: #{tpu_custom_call.1} parent=11 // pred_fallthru
          _
        // Predicated region
        $region17: #{tpu_custom_call.1} parent=11 // pred_check
          %p379 = pneg %p146
        $region18: #{tpu_custom_call.1} parent=11 // pred_check_branch
          %381 = sbr.rel (%p379) target = $region20
        $region19: #{tpu_custom_call.1} parent=11 // pred_region
          _
        $region20: #{tpu_custom_call.1} parent=11 // pred_fallthru
          _
        // Predicated region
        $region21: #{tpu_custom_call.1} parent=11 // pred_check
          %p382 = pneg %p167
        $region22: #{tpu_custom_call.1} parent=11 // pred_check_branch
          %384 = sbr.rel (%p382) target = $region24
        $region23: #{tpu_custom_call.1} parent=11 // pred_region
          %386 = vsyncadd [#allocation3], 0
          %s387 = sshll.u32 %s5, 4
          %s388 = int_to_ptr.hbm [resolvable:$true] %s387
          %s389 = sshll.u32 [#allocation2], 4
          %s390 = int_to_ptr.vmem [resolvable:$true] %s389
          %395 = dma.hbm_to_vmem [thread:$0]  %s388, 1024, %s390, [#allocation3], 128, 128, 8
        $region24: #{tpu_custom_call.1} parent=11 // pred_fallthru
          _
        // Predicated region
        $region25: #{tpu_custom_call.1} parent=11 // pred_check
          %p396 = pneg %p188
        $region26: #{tpu_custom_call.1} parent=11 // pred_check_branch
          %398 = sbr.rel (%p396) target = $region28
        $region27: #{tpu_custom_call.1} parent=11 // pred_region
          _
        $region28: #{tpu_custom_call.1} parent=11 // pred_fallthru
          _
        // Predicated region
        $region29: #{tpu_custom_call.1} parent=11 // pred_check
          %p399 = pneg %p209
        $region30: #{tpu_custom_call.1} parent=11 // pred_check_branch
          %401 = sbr.rel (%p399) target = $region32
        $region31: #{tpu_custom_call.1} parent=11 // pred_region
          _
        $region32: #{tpu_custom_call.1} parent=11 // pred_fallthru
          _
        // Predicated region
        $region33: #{tpu_custom_call.1} parent=11 // pred_check
          %p402 = pneg %p230
        $region34: #{tpu_custom_call.1} parent=11 // pred_check_branch
          %404 = sbr.rel (%p402) target = $region36
        $region35: #{tpu_custom_call.1} parent=11 // pred_region
          _
        $region36: #{tpu_custom_call.1} parent=11 // pred_fallthru
          _
        // Predicated region
        $region37: #{tpu_custom_call.1} parent=11 // pred_check
          %p405 = pneg %p251
        $region38: #{tpu_custom_call.1} parent=11 // pred_check_branch
          %407 = sbr.rel (%p405) target = $region40
        $region39: #{tpu_custom_call.1} parent=11 // pred_region
          %409 = vsyncadd [#allocation6], 0
          %s410 = sshll.u32 %s9, 4
          %s411 = int_to_ptr.hbm [resolvable:$true] %s410
          %s412 = sshll.u32 [#allocation5], 4
          %s413 = int_to_ptr.vmem [resolvable:$true] %s412
          %418 = dma.hbm_to_vmem [thread:$0]  %s411, 1024, %s413, [#allocation6], 128, 128, 8
        $region40: #{tpu_custom_call.1} parent=11 // pred_fallthru
          _
        // Predicated region
        $region41: #{tpu_custom_call.1} parent=11 // pred_check
          %p419 = pneg %p272
        $region42: #{tpu_custom_call.1} parent=11 // pred_check_branch
          %421 = sbr.rel (%p419) target = $region44
        $region43: #{tpu_custom_call.1} parent=11 // pred_region
          _
        $region44: #{tpu_custom_call.1} parent=11 // pred_fallthru
          _
        // Predicated region
        $region45: #{tpu_custom_call.1} parent=11 // pred_check
          %p422 = pneg %p293
        $region46: #{tpu_custom_call.1} parent=11 // pred_check_branch
          %424 = sbr.rel (%p422) target = $region48
        $region47: #{tpu_custom_call.1} parent=11 // pred_region
          %426 = vsyncadd [#allocation6], 0
          %s427 = sshll.u32 %s11, 4
          %s428 = int_to_ptr.hbm [resolvable:$true] %s427
          %s429 = sshll.u32 [#allocation7], 4
          %s430 = int_to_ptr.vmem [resolvable:$true] %s429
          %435 = dma.hbm_to_vmem [thread:$0]  %s428, 1024, %s430, [#allocation6], 128, 128, 8
        $region48: #{tpu_custom_call.1} parent=11 // pred_fallthru
          _
        // Predicated region
        $region49: #{tpu_custom_call.1} parent=11 // pred_check
          %p436 = pneg %p314
        $region50: #{tpu_custom_call.1} parent=11 // pred_check_branch
          %438 = sbr.rel (%p436) target = $region52
        $region51: #{tpu_custom_call.1} parent=11 // pred_region
          %440 = vsyncadd [#allocation9], 0
          %s441 = sshll.u32 %s12, 4
          %s442 = int_to_ptr.hbm [resolvable:$true] %s441
          %s443 = sshll.u32 [#allocation8], 4
          %s444 = int_to_ptr.vmem [resolvable:$true] %s443
          %449 = dma.hbm_to_vmem [thread:$0]  %s442, 1024, %s444, [#allocation9], 128, 128, 8
        $region52: #{tpu_custom_call.1} parent=11 // pred_fallthru
          _
        // Predicated region
        $region53: #{tpu_custom_call.1} parent=11 // pred_check
          %p450 = pneg %p335
        $region54: #{tpu_custom_call.1} parent=11 // pred_check_branch
          %452 = sbr.rel (%p450) target = $region56
        $region55: #{tpu_custom_call.1} parent=11 // pred_region
          _
        $region56: #{tpu_custom_call.1} parent=11 // pred_fallthru
          _
      $region12: #{tpu_custom_call.1} parent=5 // pred_fallthru
        _
      %p453 = scmp.lt.s32.totalorder %s26, 2
      // Predicated region
      $region57: #{tpu_custom_call.1} parent=5 // pred_check
        %p454 = pneg %p453
      $region58: #{tpu_custom_call.1} parent=5 // pred_check_branch
        %456 = sbr.rel (%p454) target = $region60
      $region59: #{tpu_custom_call.1} parent=5 // pred_region
        // Predicated region
        $region61: #{tpu_custom_call.1} parent=59 // pred_check
          %p457 = pneg %p46
        $region62: #{tpu_custom_call.1} parent=59 // pred_check_branch
          %459 = sbr.rel (%p457) target = $region64
        $region63: #{tpu_custom_call.1} parent=59 // pred_region
          %p460 = scmp.lt.s32.totalorder %s26, 1
          %s461 = scalar_select %p460, %s26, 1
          %s462 = smul.addr %s461, 8
          %s463 = scalar_lea.vmem %s0, %s462
        $region64: #{tpu_custom_call.1} parent=59 // pred_fallthru
          _
        // Predicated region
        $region65: #{tpu_custom_call.1} parent=59 // pred_check
          %p464 = pneg %p72
        $region66: #{tpu_custom_call.1} parent=59 // pred_check_branch
          %466 = sbr.rel (%p464) target = $region68
        $region67: #{tpu_custom_call.1} parent=59 // pred_region
          %p467 = scmp.lt.s32.totalorder %s26, 1
          %s468 = scalar_select %p467, %s26, 1
          %s469 = smul.addr %s468, 7
          %s470 = smul.addr %s469, 8
          %s471 = scalar_lea.vmem %s1, %s470
        $region68: #{tpu_custom_call.1} parent=59 // pred_fallthru
          _
        // Predicated region
        $region69: #{tpu_custom_call.1} parent=59 // pred_check
          %p472 = pneg %p98
        $region70: #{tpu_custom_call.1} parent=59 // pred_check_branch
          %474 = sbr.rel (%p472) target = $region72
        $region71: #{tpu_custom_call.1} parent=59 // pred_region
          %p475 = scmp.lt.s32.totalorder %s26, 1
          %s476 = scalar_select %p475, %s26, 1
          %s477 = smul.addr %s476, 8
          %s478 = scalar_lea.vmem %s2, %s477
        $region72: #{tpu_custom_call.1} parent=59 // pred_fallthru
          _
      $region60: #{tpu_custom_call.1} parent=5 // pred_fallthru
        _
      %p479 = scmp.le.s32.totalorder 1, %s26
      %p480 = scmp.lt.s32.totalorder %s26, 3
      %p481 = pnand %p479, %p480
      %p482 = pneg %p481
      // Predicated region
      $region73: #{tpu_custom_call.1} parent=5 // pred_check
        _
      $region74: #{tpu_custom_call.1} parent=5 // pred_check_branch
        %484 = sbr.rel (%p481) target = $region76
      $region75: #{tpu_custom_call.1} parent=5 // pred_region
        %s485 = ssub.s32 %s26, 1
        // Predicated region
        $region77: #{tpu_custom_call.1} parent=75 // pred_check
          %p486 = pneg %p167
        $region78: #{tpu_custom_call.1} parent=75 // pred_check_branch
          %488 = sbr.rel (%p486) target = $region80
        $region79: #{tpu_custom_call.1} parent=75 // pred_region
          %490 = dma.done [#allocation3], 1024
        $region80: #{tpu_custom_call.1} parent=75 // pred_fallthru
          _
        // Predicated region
        $region81: #{tpu_custom_call.1} parent=75 // pred_check
          %p491 = pneg %p251
        $region82: #{tpu_custom_call.1} parent=75 // pred_check_branch
          %493 = sbr.rel (%p491) target = $region84
        $region83: #{tpu_custom_call.1} parent=75 // pred_region
          %495 = dma.done [#allocation6], 1024
        $region84: #{tpu_custom_call.1} parent=75 // pred_fallthru
          _
        // Predicated region
        $region85: #{tpu_custom_call.1} parent=75 // pred_check
          %p496 = pneg %p293
        $region86: #{tpu_custom_call.1} parent=75 // pred_check_branch
          %498 = sbr.rel (%p496) target = $region88
        $region87: #{tpu_custom_call.1} parent=75 // pred_region
          %500 = dma.done [#allocation6], 1024
        $region88: #{tpu_custom_call.1} parent=75 // pred_fallthru
          _
        // Predicated region
        $region89: #{tpu_custom_call.1} parent=75 // pred_check
          %p501 = pneg %p314
        $region90: #{tpu_custom_call.1} parent=75 // pred_check_branch
          %503 = sbr.rel (%p501) target = $region92
        $region91: #{tpu_custom_call.1} parent=75 // pred_region
          %505 = dma.done [#allocation9], 1024
        $region92: #{tpu_custom_call.1} parent=75 // pred_fallthru
          _
        %p506 = scmp.lt.s32.totalorder %s31, 1
        %s507 = scalar_select %p506, %s31, 1
        %s508 = smul.addr %s507, 8
        %s509 = scalar_lea.vmem %s0, %s508
        %p510 = pneg %p52
        %p511 = pneg %p49
        %p512 = scmp.lt.s32.totalorder %s31, 1
        %s513 = scalar_select %p512, %s31, 1
        %s514 = smul.addr %s513, 7
        %s515 = smul.addr %s514, 8
        %s516 = scalar_lea.vmem %s1, %s515
        %p517 = pneg %p78
        %p518 = pneg %p75
        %p519 = scmp.lt.s32.totalorder %s31, 1
        %s520 = scalar_select %p519, %s31, 1
        %s521 = smul.addr %s520, 8
        %s522 = scalar_lea.vmem %s2, %s521
        %p523 = pneg %p104
        %p524 = pneg %p101
        %p525 = pneg %p125
        %p526 = pneg %p122
        %p527 = pneg %p146
        %p528 = pneg %p143
        %p529 = pneg %p167
        %p530 = pneg %p164
        %p531 = pneg %p188
        %p532 = pneg %p185
        %p533 = pneg %p209
        %p534 = pneg %p206
        %p535 = pneg %p230
        %p536 = pneg %p227
        %p537 = pneg %p251
        %p538 = pneg %p248
        %p539 = pneg %p272
        %p540 = pneg %p269
        %p541 = pneg %p293
        %p542 = pneg %p290
        %p543 = pneg %p314
        %p544 = pneg %p311
        %p545 = pneg %p335
        %p546 = pneg %p332
        %p547 = pneg %p361
        %p548 = pneg %p358
        %s549 = sand.u32 %s348, 1
        %s550 = scalar_lea.sflag [#allocation4], %s549
        %s551 = sand.u32 %s348, 1
        %s552 = smul.addr %s551, 8
        %s553 = scalar_lea.vmem [#allocation10], %s552
        %p554 = scmp.lt.s32.totalorder %s31, 1
        %s555 = scalar_select %p554, %s31, 1
        %s556 = smul.addr %s555, 8
        %s557 = scalar_lea.vmem %s0, %s556
        %p558 = scmp.lt.s32.totalorder %s31, 1
        %s559 = scalar_select %p558, %s31, 1
        %s560 = smul.addr %s559, 7
        %s561 = smul.addr %s560, 8
        %s562 = scalar_lea.vmem %s1, %s561
        %p563 = scmp.lt.s32.totalorder %s31, 1
        %s564 = scalar_select %p563, %s31, 1
        %s565 = smul.addr %s564, 8
        %s566 = scalar_lea.vmem %s2, %s565
        %v567 = vld [vmem:[%s557] sm:$0xff]
        %v568 = vld [vmem:[%s562] sm:$0xff]
        %v569 = vld [vmem:[%s562 + $0x8] sm:$0xff]
        %v570 = vld [vmem:[%s562 + $0x10] sm:$0xff]
        %v571 = vld [vmem:[%s562 + $0x18] sm:$0xff]
        %v572 = vld [vmem:[%s562 + $0x20] sm:$0xff]
        %v573 = vld [vmem:[%s562 + $0x28] sm:$0xff]
        %v574 = vld [vmem:[%s562 + $0x30] sm:$0xff]
        %v575 = vld [vmem:[%s566] sm:$0xff]
        %v576 = vld [vmem:[%s3] sm:$0xff]
        %v577 = vld [vmem:[%s4] sm:$0x1]
        %v578 = vld [vmem:[#allocation2] sm:$0xff]
        %v579 = vld [vmem:[#allocation2 + $0x8] sm:$0xff]
        %v580 = vld [vmem:[#allocation2 + $0x10] sm:$0xff]
        %v581 = vld [vmem:[#allocation2 + $0x18] sm:$0xff]
        %v582 = vld [vmem:[#allocation2 + $0x20] sm:$0xff]
        %v583 = vld [vmem:[#allocation2 + $0x28] sm:$0xff]
        %v584 = vld [vmem:[#allocation2 + $0x30] sm:$0xff]
        %v585 = vld [vmem:[#allocation2 + $0x38] sm:$0xff]
        %v586 = vld [vmem:[%s6] sm:$0x1]
        %v588 = vperm.slane %v577, 0
        %vm590 = vcmask 64512
        %v592 = vsel %vm590, %v567, 0
        %594 = vmatpush.msra.mxu0 0.0
        %595 = vmatpush.msra.mxu0 0.0
        %596 = vmatpush.msra.mxu0 0.0
        %597 = vmatpush.msra.mxu0 0.0
        %598 = vmatpush.msra.mxu0 0.0
        %599 = vmatpush.msra.mxu0 0.0
        %600 = vmatpush.msra.mxu0 0.0
        %601 = vmatpush.msra.mxu0 0.0
        %602 = vmatpush.msra.mxu0 0.0
        %603 = vmatpush.msra.mxu0 0.0
        %604 = vmatpush.msra.mxu0 0.0
        %605 = vmatpush.msra.mxu0 0.0
        %606 = vmatpush.msra.mxu0 0.0
        %607 = vmatpush.msra.mxu0 0.0
        %608 = vmatpush.msra.mxu0 0.0
        %v609 = vand.u32 %v576, 4294901760
        %610 = vmatpush.msra.mxu0 %v609
        %v611 = vand.u32 %v592, 4294901760
        %v612 = vsub.f32 %v592, %v611
        %v613 = vand.u32 %v612, 4294901760
        %v614 = vsub.f32 %v612, %v613
        %v615 = vand.u32 %v614, 4294901760
        %616 = vmatmul.f32.gmra.mxu0 %v615
        %v617 = vpop.f32.mrf.mxu0
        %v618 = vadd.f32 %v588, %v617
        %619 = vdwg.mxu0
        %620 = vmatpush.msra.mxu0 0.0
        %621 = vmatpush.msra.mxu0 0.0
        %622 = vmatpush.msra.mxu0 0.0
        %623 = vmatpush.msra.mxu0 0.0
        %624 = vmatpush.msra.mxu0 0.0
        %625 = vmatpush.msra.mxu0 0.0
        %626 = vmatpush.msra.mxu0 0.0
        %627 = vmatpush.msra.mxu0 0.0
        %628 = vmatpush.msra.mxu0 0.0
        %629 = vmatpush.msra.mxu0 0.0
        %630 = vmatpush.msra.mxu0 0.0
        %631 = vmatpush.msra.mxu0 0.0
        %632 = vmatpush.msra.mxu0 0.0
        %633 = vmatpush.msra.mxu0 0.0
        %634 = vmatpush.msra.mxu0 0.0
        %v635 = vand.u32 %v576, 4294901760
        %v636 = vsub.f32 %v576, %v635
        %v637 = vand.u32 %v636, 4294901760
        %v638 = vsub.f32 %v636, %v637
        %v639 = vand.u32 %v638, 4294901760
        %640 = vmatpush.msra.mxu0 %v639
        %v641 = vand.u32 %v592, 4294901760
        %642 = vmatmul.f32.gmra.mxu0 %v641
        %v643 = vpop.f32.mrf.mxu0
        %v644 = vadd.f32 %v618, %v643
        %645 = vdwg.mxu0
        %646 = vmatpush.msra.mxu0 0.0
        %647 = vmatpush.msra.mxu0 0.0
        %648 = vmatpush.msra.mxu0 0.0
        %649 = vmatpush.msra.mxu0 0.0
        %650 = vmatpush.msra.mxu0 0.0
        %651 = vmatpush.msra.mxu0 0.0
        %652 = vmatpush.msra.mxu0 0.0
        %653 = vmatpush.msra.mxu0 0.0
        %654 = vmatpush.msra.mxu0 0.0
        %655 = vmatpush.msra.mxu0 0.0
        %656 = vmatpush.msra.mxu0 0.0
        %657 = vmatpush.msra.mxu0 0.0
        %658 = vmatpush.msra.mxu0 0.0
        %659 = vmatpush.msra.mxu0 0.0
        %660 = vmatpush.msra.mxu0 0.0
        %v661 = vand.u32 %v576, 4294901760
        %v662 = vsub.f32 %v576, %v661
        %663 = vmatpush.msra.mxu0 %v662
        %v664 = vand.u32 %v592, 4294901760
        %v665 = vsub.f32 %v592, %v664
        %666 = vmatmul.f32.gmra.mxu0 %v665
        %v667 = vpop.f32.mrf.mxu0
        %v668 = vadd.f32 %v644, %v667
        %669 = vdwg.mxu0
        %670 = vmatpush.msra.mxu0 0.0
        %671 = vmatpush.msra.mxu0 0.0
        %672 = vmatpush.msra.mxu0 0.0
        %673 = vmatpush.msra.mxu0 0.0
        %674 = vmatpush.msra.mxu0 0.0
        %675 = vmatpush.msra.mxu0 0.0
        %676 = vmatpush.msra.mxu0 0.0
        %677 = vmatpush.msra.mxu0 0.0
        %678 = vmatpush.msra.mxu0 0.0
        %679 = vmatpush.msra.mxu0 0.0
        %680 = vmatpush.msra.mxu0 0.0
        %681 = vmatpush.msra.mxu0 0.0
        %682 = vmatpush.msra.mxu0 0.0
        %683 = vmatpush.msra.mxu0 0.0
        %684 = vmatpush.msra.mxu0 0.0
        %v685 = vand.u32 %v576, 4294901760
        %686 = vmatpush.msra.mxu0 %v685
        %v687 = vand.u32 %v592, 4294901760
        %v688 = vsub.f32 %v592, %v687
        %v689 = vand.u32 %v688, 4294901760
        %690 = vmatmul.f32.gmra.mxu0 %v689
        %v691 = vpop.f32.mrf.mxu0
        %v692 = vadd.f32 %v668, %v691
        %693 = vdwg.mxu0
        %694 = vmatpush.msra.mxu0 0.0
        %695 = vmatpush.msra.mxu0 0.0
        %696 = vmatpush.msra.mxu0 0.0
        %697 = vmatpush.msra.mxu0 0.0
        %698 = vmatpush.msra.mxu0 0.0
        %699 = vmatpush.msra.mxu0 0.0
        %700 = vmatpush.msra.mxu0 0.0
        %701 = vmatpush.msra.mxu0 0.0
        %702 = vmatpush.msra.mxu0 0.0
        %703 = vmatpush.msra.mxu0 0.0
        %704 = vmatpush.msra.mxu0 0.0
        %705 = vmatpush.msra.mxu0 0.0
        %706 = vmatpush.msra.mxu0 0.0
        %707 = vmatpush.msra.mxu0 0.0
        %708 = vmatpush.msra.mxu0 0.0
        %v709 = vand.u32 %v576, 4294901760
        %v710 = vsub.f32 %v576, %v709
        %v711 = vand.u32 %v710, 4294901760
        %712 = vmatpush.msra.mxu0 %v711
        %v713 = vand.u32 %v592, 4294901760
        %714 = vmatmul.f32.gmra.mxu0 %v713
        %v715 = vpop.f32.mrf.mxu0
        %v716 = vadd.f32 %v692, %v715
        %717 = vdwg.mxu0
        %718 = vmatpush.msra.mxu0 0.0
        %719 = vmatpush.msra.mxu0 0.0
        %720 = vmatpush.msra.mxu0 0.0
        %721 = vmatpush.msra.mxu0 0.0
        %722 = vmatpush.msra.mxu0 0.0
        %723 = vmatpush.msra.mxu0 0.0
        %724 = vmatpush.msra.mxu0 0.0
        %725 = vmatpush.msra.mxu0 0.0
        %726 = vmatpush.msra.mxu0 0.0
        %727 = vmatpush.msra.mxu0 0.0
        %728 = vmatpush.msra.mxu0 0.0
        %729 = vmatpush.msra.mxu0 0.0
        %730 = vmatpush.msra.mxu0 0.0
        %731 = vmatpush.msra.mxu0 0.0
        %732 = vmatpush.msra.mxu0 0.0
        %v733 = vand.u32 %v576, 4294901760
        %734 = vmatpush.msra.mxu0 %v733
        %v735 = vand.u32 %v592, 4294901760
        %736 = vmatmul.f32.gmra.mxu0 %v735
        %v737 = vpop.f32.mrf.mxu0
        %v738 = vadd.f32 %v716, %v737
        %739 = vdwg.mxu0
        %v740 = vmax.f32 %v738, 0.0
        %v742 = vperm.slane %v586, 0
        %vm744 = vcmask 523264
        %v746 = vsel %vm744, %v740, 0
        %748 = vmatpush.msra.mxu0 0.0
        %749 = vmatpush.msra.mxu0 0.0
        %750 = vmatpush.msra.mxu0 0.0
        %751 = vmatpush.msra.mxu0 0.0
        %752 = vmatpush.msra.mxu0 0.0
        %753 = vmatpush.msra.mxu0 0.0
        %754 = vmatpush.msra.mxu0 0.0
        %755 = vmatpush.msra.mxu0 0.0
        %v756 = vand.u32 %v585, 4294901760
        %757 = vmatpush.msra.mxu0 %v756
        %v758 = vand.u32 %v584, 4294901760
        %759 = vmatpush.msra.mxu0 %v758
        %v760 = vand.u32 %v583, 4294901760
        %761 = vmatpush.msra.mxu0 %v760
        %v762 = vand.u32 %v582, 4294901760
        %763 = vmatpush.msra.mxu0 %v762
        %v764 = vand.u32 %v581, 4294901760
        %765 = vmatpush.msra.mxu0 %v764
        %v766 = vand.u32 %v580, 4294901760
        %767 = vmatpush.msra.mxu0 %v766
        %v768 = vand.u32 %v579, 4294901760
        %769 = vmatpush.msra.mxu0 %v768
        %v770 = vand.u32 %v578, 4294901760
        %771 = vmatpush.msra.mxu0 %v770
        %v772 = vand.u32 %v746, 4294901760
        %v773 = vsub.f32 %v746, %v772
        %v774 = vand.u32 %v773, 4294901760
        %v775 = vsub.f32 %v773, %v774
        %v776 = vand.u32 %v775, 4294901760
        %777 = vmatmul.f32.gmra.mxu0 %v776
        %v778 = vpop.f32.mrf.mxu0
        %v779 = vadd.f32 %v742, %v778
        %780 = vdwg.mxu0
        %781 = vmatpush.msra.mxu0 0.0
        %782 = vmatpush.msra.mxu0 0.0
        %783 = vmatpush.msra.mxu0 0.0
        %784 = vmatpush.msra.mxu0 0.0
        %785 = vmatpush.msra.mxu0 0.0
        %786 = vmatpush.msra.mxu0 0.0
        %787 = vmatpush.msra.mxu0 0.0
        %788 = vmatpush.msra.mxu0 0.0
        %v789 = vand.u32 %v585, 4294901760
        %v790 = vsub.f32 %v585, %v789
        %v791 = vand.u32 %v790, 4294901760
        %v792 = vsub.f32 %v790, %v791
        %v793 = vand.u32 %v792, 4294901760
        %794 = vmatpush.msra.mxu0 %v793
        %v795 = vand.u32 %v584, 4294901760
        %v796 = vsub.f32 %v584, %v795
        %v797 = vand.u32 %v796, 4294901760
        %v798 = vsub.f32 %v796, %v797
        %v799 = vand.u32 %v798, 4294901760
        %800 = vmatpush.msra.mxu0 %v799
        %v801 = vand.u32 %v583, 4294901760
        %v802 = vsub.f32 %v583, %v801
        %v803 = vand.u32 %v802, 4294901760
        %v804 = vsub.f32 %v802, %v803
        %v805 = vand.u32 %v804, 4294901760
        %806 = vmatpush.msra.mxu0 %v805
        %v807 = vand.u32 %v582, 4294901760
        %v808 = vsub.f32 %v582, %v807
        %v809 = vand.u32 %v808, 4294901760
        %v810 = vsub.f32 %v808, %v809
        %v811 = vand.u32 %v810, 4294901760
        %812 = vmatpush.msra.mxu0 %v811
        %v813 = vand.u32 %v581, 4294901760
        %v814 = vsub.f32 %v581, %v813
        %v815 = vand.u32 %v814, 4294901760
        %v816 = vsub.f32 %v814, %v815
        %v817 = vand.u32 %v816, 4294901760
        %818 = vmatpush.msra.mxu0 %v817
        %v819 = vand.u32 %v580, 4294901760
        %v820 = vsub.f32 %v580, %v819
        %v821 = vand.u32 %v820, 4294901760
        %v822 = vsub.f32 %v820, %v821
        %v823 = vand.u32 %v822, 4294901760
        %824 = vmatpush.msra.mxu0 %v823
        %v825 = vand.u32 %v579, 4294901760
        %v826 = vsub.f32 %v579, %v825
        %v827 = vand.u32 %v826, 4294901760
        %v828 = vsub.f32 %v826, %v827
        %v829 = vand.u32 %v828, 4294901760
        %830 = vmatpush.msra.mxu0 %v829
        %v831 = vand.u32 %v578, 4294901760
        %v832 = vsub.f32 %v578, %v831
        %v833 = vand.u32 %v832, 4294901760
        %v834 = vsub.f32 %v832, %v833
        %v835 = vand.u32 %v834, 4294901760
        %836 = vmatpush.msra.mxu0 %v835
        %v837 = vand.u32 %v746, 4294901760
        %838 = vmatmul.f32.gmra.mxu0 %v837
        %v839 = vpop.f32.mrf.mxu0
        %v840 = vadd.f32 %v779, %v839
        %841 = vdwg.mxu0
        %842 = vmatpush.msra.mxu0 0.0
        %843 = vmatpush.msra.mxu0 0.0
        %844 = vmatpush.msra.mxu0 0.0
        %845 = vmatpush.msra.mxu0 0.0
        %846 = vmatpush.msra.mxu0 0.0
        %847 = vmatpush.msra.mxu0 0.0
        %848 = vmatpush.msra.mxu0 0.0
        %849 = vmatpush.msra.mxu0 0.0
        %v850 = vand.u32 %v585, 4294901760
        %v851 = vsub.f32 %v585, %v850
        %852 = vmatpush.msra.mxu0 %v851
        %v853 = vand.u32 %v584, 4294901760
        %v854 = vsub.f32 %v584, %v853
        %855 = vmatpush.msra.mxu0 %v854
        %v856 = vand.u32 %v583, 4294901760
        %v857 = vsub.f32 %v583, %v856
        %858 = vmatpush.msra.mxu0 %v857
        %v859 = vand.u32 %v582, 4294901760
        %v860 = vsub.f32 %v582, %v859
        %861 = vmatpush.msra.mxu0 %v860
        %v862 = vand.u32 %v581, 4294901760
        %v863 = vsub.f32 %v581, %v862
        %864 = vmatpush.msra.mxu0 %v863
        %v865 = vand.u32 %v580, 4294901760
        %v866 = vsub.f32 %v580, %v865
        %867 = vmatpush.msra.mxu0 %v866
        %v868 = vand.u32 %v579, 4294901760
        %v869 = vsub.f32 %v579, %v868
        %870 = vmatpush.msra.mxu0 %v869
        %v871 = vand.u32 %v578, 4294901760
        %v872 = vsub.f32 %v578, %v871
        %873 = vmatpush.msra.mxu0 %v872
        %v874 = vand.u32 %v746, 4294901760
        %v875 = vsub.f32 %v746, %v874
        %876 = vmatmul.f32.gmra.mxu0 %v875
        %v877 = vpop.f32.mrf.mxu0
        %v878 = vadd.f32 %v840, %v877
        %879 = vdwg.mxu0
        %880 = vmatpush.msra.mxu0 0.0
        %881 = vmatpush.msra.mxu0 0.0
        %882 = vmatpush.msra.mxu0 0.0
        %883 = vmatpush.msra.mxu0 0.0
        %884 = vmatpush.msra.mxu0 0.0
        %885 = vmatpush.msra.mxu0 0.0
        %886 = vmatpush.msra.mxu0 0.0
        %887 = vmatpush.msra.mxu0 0.0
        %v888 = vand.u32 %v585, 4294901760
        %889 = vmatpush.msra.mxu0 %v888
        %v890 = vand.u32 %v584, 4294901760
        %891 = vmatpush.msra.mxu0 %v890
        %v892 = vand.u32 %v583, 4294901760
        %893 = vmatpush.msra.mxu0 %v892
        %v894 = vand.u32 %v582, 4294901760
        %895 = vmatpush.msra.mxu0 %v894
        %v896 = vand.u32 %v581, 4294901760
        %897 = vmatpush.msra.mxu0 %v896
        %v898 = vand.u32 %v580, 4294901760
        %899 = vmatpush.msra.mxu0 %v898
        %v900 = vand.u32 %v579, 4294901760
        %901 = vmatpush.msra.mxu0 %v900
        %v902 = vand.u32 %v578, 4294901760
        %903 = vmatpush.msra.mxu0 %v902
        %v904 = vand.u32 %v746, 4294901760
        %v905 = vsub.f32 %v746, %v904
        %v906 = vand.u32 %v905, 4294901760
        %907 = vmatmul.f32.gmra.mxu0 %v906
        %v908 = vpop.f32.mrf.mxu0
        %v909 = vadd.f32 %v878, %v908
        %910 = vdwg.mxu0
        %911 = vmatpush.msra.mxu0 0.0
        %912 = vmatpush.msra.mxu0 0.0
        %913 = vmatpush.msra.mxu0 0.0
        %914 = vmatpush.msra.mxu0 0.0
        %915 = vmatpush.msra.mxu0 0.0
        %916 = vmatpush.msra.mxu0 0.0
        %917 = vmatpush.msra.mxu0 0.0
        %918 = vmatpush.msra.mxu0 0.0
        %v919 = vand.u32 %v585, 4294901760
        %v920 = vsub.f32 %v585, %v919
        %v921 = vand.u32 %v920, 4294901760
        %922 = vmatpush.msra.mxu0 %v921
        %v923 = vand.u32 %v584, 4294901760
        %v924 = vsub.f32 %v584, %v923
        %v925 = vand.u32 %v924, 4294901760
        %926 = vmatpush.msra.mxu0 %v925
        %v927 = vand.u32 %v583, 4294901760
        %v928 = vsub.f32 %v583, %v927
        %v929 = vand.u32 %v928, 4294901760
        %930 = vmatpush.msra.mxu0 %v929
        %v931 = vand.u32 %v582, 4294901760
        %v932 = vsub.f32 %v582, %v931
        %v933 = vand.u32 %v932, 4294901760
        %934 = vmatpush.msra.mxu0 %v933
        %v935 = vand.u32 %v581, 4294901760
        %v936 = vsub.f32 %v581, %v935
        %v937 = vand.u32 %v936, 4294901760
        %938 = vmatpush.msra.mxu0 %v937
        %v939 = vand.u32 %v580, 4294901760
        %v940 = vsub.f32 %v580, %v939
        %v941 = vand.u32 %v940, 4294901760
        %942 = vmatpush.msra.mxu0 %v941
        %v943 = vand.u32 %v579, 4294901760
        %v944 = vsub.f32 %v579, %v943
        %v945 = vand.u32 %v944, 4294901760
        %946 = vmatpush.msra.mxu0 %v945
        %v947 = vand.u32 %v578, 4294901760
        %v948 = vsub.f32 %v578, %v947
        %v949 = vand.u32 %v948, 4294901760
        %950 = vmatpush.msra.mxu0 %v949
        %v951 = vand.u32 %v746, 4294901760
        %952 = vmatmul.f32.gmra.mxu0 %v951
        %v953 = vpop.f32.mrf.mxu0
        %v954 = vadd.f32 %v909, %v953
        %955 = vdwg.mxu0
        %956 = vmatpush.msra.mxu0 0.0
        %957 = vmatpush.msra.mxu0 0.0
        %958 = vmatpush.msra.mxu0 0.0
        %959 = vmatpush.msra.mxu0 0.0
        %960 = vmatpush.msra.mxu0 0.0
        %961 = vmatpush.msra.mxu0 0.0
        %962 = vmatpush.msra.mxu0 0.0
        %963 = vmatpush.msra.mxu0 0.0
        %v964 = vand.u32 %v585, 4294901760
        %965 = vmatpush.msra.mxu0 %v964
        %v966 = vand.u32 %v584, 4294901760
        %967 = vmatpush.msra.mxu0 %v966
        %v968 = vand.u32 %v583, 4294901760
        %969 = vmatpush.msra.mxu0 %v968
        %v970 = vand.u32 %v582, 4294901760
        %971 = vmatpush.msra.mxu0 %v970
        %v972 = vand.u32 %v581, 4294901760
        %973 = vmatpush.msra.mxu0 %v972
        %v974 = vand.u32 %v580, 4294901760
        %975 = vmatpush.msra.mxu0 %v974
        %v976 = vand.u32 %v579, 4294901760
        %977 = vmatpush.msra.mxu0 %v976
        %v978 = vand.u32 %v578, 4294901760
        %979 = vmatpush.msra.mxu0 %v978
        %v980 = vand.u32 %v746, 4294901760
        %981 = vmatmul.f32.gmra.mxu0 %v980
        %v982 = vpop.f32.mrf.mxu0
        %v983 = vadd.f32 %v954, %v982
        %984 = vdwg.mxu0
        %v985 = vmax.f32 %v983, 0.0
        %v986 = vld [vmem:[%s7] sm:$0xff]
        %v987 = vld [vmem:[%s8] sm:$0x1]
        %v988 = vld [vmem:[#allocation5] sm:$0xff]
        %v989 = vld [vmem:[#allocation5 + $0x8] sm:$0xff]
        %v990 = vld [vmem:[#allocation5 + $0x10] sm:$0xff]
        %v991 = vld [vmem:[#allocation5 + $0x18] sm:$0xff]
        %v992 = vld [vmem:[#allocation5 + $0x20] sm:$0xff]
        %v993 = vld [vmem:[#allocation5 + $0x28] sm:$0xff]
        %v994 = vld [vmem:[#allocation5 + $0x30] sm:$0xff]
        %v995 = vld [vmem:[#allocation5 + $0x38] sm:$0xff]
        %v996 = vld [vmem:[%s10] sm:$0x1]
        %v998 = vperm.slane %v987, 0
        %v1001 = vsel %vm590, %v568, 0
        %v1004 = vsel %vm590, %v569, 0
        %v1007 = vsel %vm590, %v570, 0
        %v1010 = vsel %vm590, %v571, 0
        %v1013 = vsel %vm590, %v572, 0
        %v1016 = vsel %vm590, %v573, 0
        %v1019 = vsel %vm590, %v574, 0
        %1021 = vmatpush.msra.mxu0 0.0
        %1022 = vmatpush.msra.mxu0 0.0
        %1023 = vmatpush.msra.mxu0 0.0
        %1024 = vmatpush.msra.mxu0 0.0
        %1025 = vmatpush.msra.mxu0 0.0
        %1026 = vmatpush.msra.mxu0 0.0
        %1027 = vmatpush.msra.mxu0 0.0
        %1028 = vmatpush.msra.mxu0 0.0
        %1029 = vmatpush.msra.mxu0 0.0
        %1030 = vmatpush.msra.mxu0 0.0
        %1031 = vmatpush.msra.mxu0 0.0
        %1032 = vmatpush.msra.mxu0 0.0
        %1033 = vmatpush.msra.mxu0 0.0
        %1034 = vmatpush.msra.mxu0 0.0
        %1035 = vmatpush.msra.mxu0 0.0
        %v1036 = vand.u32 %v986, 4294901760
        %1037 = vmatpush.msra.mxu0 %v1036
        %v1038 = vand.u32 %v1001, 4294901760
        %v1039 = vsub.f32 %v1001, %v1038
        %v1040 = vand.u32 %v1039, 4294901760
        %v1041 = vsub.f32 %v1039, %v1040
        %v1042 = vand.u32 %v1041, 4294901760
        %1043 = vmatmul.f32.gmra.mxu0 %v1042
        %v1044 = vpop.f32.mrf.mxu0
        %v1045 = vadd.f32 %v998, %v1044
        %v1046 = vand.u32 %v1004, 4294901760
        %v1047 = vsub.f32 %v1004, %v1046
        %v1048 = vand.u32 %v1047, 4294901760
        %v1049 = vsub.f32 %v1047, %v1048
        %v1050 = vand.u32 %v1049, 4294901760
        %1051 = vmatmul.f32.gmra.mxu0 %v1050
        %v1052 = vpop.f32.mrf.mxu0
        %v1053 = vadd.f32 %v998, %v1052
        %v1054 = vand.u32 %v1007, 4294901760
        %v1055 = vsub.f32 %v1007, %v1054
        %v1056 = vand.u32 %v1055, 4294901760
        %v1057 = vsub.f32 %v1055, %v1056
        %v1058 = vand.u32 %v1057, 4294901760
        %1059 = vmatmul.f32.gmra.mxu0 %v1058
        %v1060 = vpop.f32.mrf.mxu0
        %v1061 = vadd.f32 %v998, %v1060
        %v1062 = vand.u32 %v1010, 4294901760
        %v1063 = vsub.f32 %v1010, %v1062
        %v1064 = vand.u32 %v1063, 4294901760
        %v1065 = vsub.f32 %v1063, %v1064
        %v1066 = vand.u32 %v1065, 4294901760
        %1067 = vmatmul.f32.gmra.mxu0 %v1066
        %v1068 = vpop.f32.mrf.mxu0
        %v1069 = vadd.f32 %v998, %v1068
        %v1070 = vand.u32 %v1013, 4294901760
        %v1071 = vsub.f32 %v1013, %v1070
        %v1072 = vand.u32 %v1071, 4294901760
        %v1073 = vsub.f32 %v1071, %v1072
        %v1074 = vand.u32 %v1073, 4294901760
        %1075 = vmatmul.f32.gmra.mxu0 %v1074
        %v1076 = vpop.f32.mrf.mxu0
        %v1077 = vadd.f32 %v998, %v1076
        %v1078 = vand.u32 %v1016, 4294901760
        %v1079 = vsub.f32 %v1016, %v1078
        %v1080 = vand.u32 %v1079, 4294901760
        %v1081 = vsub.f32 %v1079, %v1080
        %v1082 = vand.u32 %v1081, 4294901760
        %1083 = vmatmul.f32.gmra.mxu0 %v1082
        %v1084 = vpop.f32.mrf.mxu0
        %v1085 = vadd.f32 %v998, %v1084
        %v1086 = vand.u32 %v1019, 4294901760
        %v1087 = vsub.f32 %v1019, %v1086
        %v1088 = vand.u32 %v1087, 4294901760
        %v1089 = vsub.f32 %v1087, %v1088
        %v1090 = vand.u32 %v1089, 4294901760
        %1091 = vmatmul.f32.gmra.mxu0 %v1090
        %v1092 = vpop.f32.mrf.mxu0
        %v1093 = vadd.f32 %v998, %v1092
        %1094 = vdwg.mxu0
        %1095 = vmatpush.msra.mxu0 0.0
        %1096 = vmatpush.msra.mxu0 0.0
        %1097 = vmatpush.msra.mxu0 0.0
        %1098 = vmatpush.msra.mxu0 0.0
        %1099 = vmatpush.msra.mxu0 0.0
        %1100 = vmatpush.msra.mxu0 0.0
        %1101 = vmatpush.msra.mxu0 0.0
        %1102 = vmatpush.msra.mxu0 0.0
        %1103 = vmatpush.msra.mxu0 0.0
        %1104 = vmatpush.msra.mxu0 0.0
        %1105 = vmatpush.msra.mxu0 0.0
        %1106 = vmatpush.msra.mxu0 0.0
        %1107 = vmatpush.msra.mxu0 0.0
        %1108 = vmatpush.msra.mxu0 0.0
        %1109 = vmatpush.msra.mxu0 0.0
        %v1110 = vand.u32 %v986, 4294901760
        %v1111 = vsub.f32 %v986, %v1110
        %v1112 = vand.u32 %v1111, 4294901760
        %v1113 = vsub.f32 %v1111, %v1112
        %v1114 = vand.u32 %v1113, 4294901760
        %1115 = vmatpush.msra.mxu0 %v1114
        %v1116 = vand.u32 %v1001, 4294901760
        %1117 = vmatmul.f32.gmra.mxu0 %v1116
        %v1118 = vpop.f32.mrf.mxu0
        %v1119 = vadd.f32 %v1045, %v1118
        %v1120 = vand.u32 %v1004, 4294901760
        %1121 = vmatmul.f32.gmra.mxu0 %v1120
        %v1122 = vpop.f32.mrf.mxu0
        %v1123 = vadd.f32 %v1053, %v1122
        %v1124 = vand.u32 %v1007, 4294901760
        %1125 = vmatmul.f32.gmra.mxu0 %v1124
        %v1126 = vpop.f32.mrf.mxu0
        %v1127 = vadd.f32 %v1061, %v1126
        %v1128 = vand.u32 %v1010, 4294901760
        %1129 = vmatmul.f32.gmra.mxu0 %v1128
        %v1130 = vpop.f32.mrf.mxu0
        %v1131 = vadd.f32 %v1069, %v1130
        %v1132 = vand.u32 %v1013, 4294901760
        %1133 = vmatmul.f32.gmra.mxu0 %v1132
        %v1134 = vpop.f32.mrf.mxu0
        %v1135 = vadd.f32 %v1077, %v1134
        %v1136 = vand.u32 %v1016, 4294901760
        %1137 = vmatmul.f32.gmra.mxu0 %v1136
        %v1138 = vpop.f32.mrf.mxu0
        %v1139 = vadd.f32 %v1085, %v1138
        %v1140 = vand.u32 %v1019, 4294901760
        %1141 = vmatmul.f32.gmra.mxu0 %v1140
        %v1142 = vpop.f32.mrf.mxu0
        %v1143 = vadd.f32 %v1093, %v1142
        %1144 = vdwg.mxu0
        %1145 = vmatpush.msra.mxu0 0.0
        %1146 = vmatpush.msra.mxu0 0.0
        %1147 = vmatpush.msra.mxu0 0.0
        %1148 = vmatpush.msra.mxu0 0.0
        %1149 = vmatpush.msra.mxu0 0.0
        %1150 = vmatpush.msra.mxu0 0.0
        %1151 = vmatpush.msra.mxu0 0.0
        %1152 = vmatpush.msra.mxu0 0.0
        %1153 = vmatpush.msra.mxu0 0.0
        %1154 = vmatpush.msra.mxu0 0.0
        %1155 = vmatpush.msra.mxu0 0.0
        %1156 = vmatpush.msra.mxu0 0.0
        %1157 = vmatpush.msra.mxu0 0.0
        %1158 = vmatpush.msra.mxu0 0.0
        %1159 = vmatpush.msra.mxu0 0.0
        %v1160 = vand.u32 %v986, 4294901760
        %v1161 = vsub.f32 %v986, %v1160
        %1162 = vmatpush.msra.mxu0 %v1161
        %v1163 = vand.u32 %v1001, 4294901760
        %v1164 = vsub.f32 %v1001, %v1163
        %1165 = vmatmul.f32.gmra.mxu0 %v1164
        %v1166 = vpop.f32.mrf.mxu0
        %v1167 = vadd.f32 %v1119, %v1166
        %v1168 = vand.u32 %v1004, 4294901760
        %v1169 = vsub.f32 %v1004, %v1168
        %1170 = vmatmul.f32.gmra.mxu0 %v1169
        %v1171 = vpop.f32.mrf.mxu0
        %v1172 = vadd.f32 %v1123, %v1171
        %v1173 = vand.u32 %v1007, 4294901760
        %v1174 = vsub.f32 %v1007, %v1173
        %1175 = vmatmul.f32.gmra.mxu0 %v1174
        %v1176 = vpop.f32.mrf.mxu0
        %v1177 = vadd.f32 %v1127, %v1176
        %v1178 = vand.u32 %v1010, 4294901760
        %v1179 = vsub.f32 %v1010, %v1178
        %1180 = vmatmul.f32.gmra.mxu0 %v1179
        %v1181 = vpop.f32.mrf.mxu0
        %v1182 = vadd.f32 %v1131, %v1181
        %v1183 = vand.u32 %v1013, 4294901760
        %v1184 = vsub.f32 %v1013, %v1183
        %1185 = vmatmul.f32.gmra.mxu0 %v1184
        %v1186 = vpop.f32.mrf.mxu0
        %v1187 = vadd.f32 %v1135, %v1186
        %v1188 = vand.u32 %v1016, 4294901760
        %v1189 = vsub.f32 %v1016, %v1188
        %1190 = vmatmul.f32.gmra.mxu0 %v1189
        %v1191 = vpop.f32.mrf.mxu0
        %v1192 = vadd.f32 %v1139, %v1191
        %v1193 = vand.u32 %v1019, 4294901760
        %v1194 = vsub.f32 %v1019, %v1193
        %1195 = vmatmul.f32.gmra.mxu0 %v1194
        %v1196 = vpop.f32.mrf.mxu0
        %v1197 = vadd.f32 %v1143, %v1196
        %1198 = vdwg.mxu0
        %1199 = vmatpush.msra.mxu0 0.0
        %1200 = vmatpush.msra.mxu0 0.0
        %1201 = vmatpush.msra.mxu0 0.0
        %1202 = vmatpush.msra.mxu0 0.0
        %1203 = vmatpush.msra.mxu0 0.0
        %1204 = vmatpush.msra.mxu0 0.0
        %1205 = vmatpush.msra.mxu0 0.0
        %1206 = vmatpush.msra.mxu0 0.0
        %1207 = vmatpush.msra.mxu0 0.0
        %1208 = vmatpush.msra.mxu0 0.0
        %1209 = vmatpush.msra.mxu0 0.0
        %1210 = vmatpush.msra.mxu0 0.0
        %1211 = vmatpush.msra.mxu0 0.0
        %1212 = vmatpush.msra.mxu0 0.0
        %1213 = vmatpush.msra.mxu0 0.0
        %v1214 = vand.u32 %v986, 4294901760
        %1215 = vmatpush.msra.mxu0 %v1214
        %v1216 = vand.u32 %v1001, 4294901760
        %v1217 = vsub.f32 %v1001, %v1216
        %v1218 = vand.u32 %v1217, 4294901760
        %1219 = vmatmul.f32.gmra.mxu0 %v1218
        %v1220 = vpop.f32.mrf.mxu0
        %v1221 = vadd.f32 %v1167, %v1220
        %v1222 = vand.u32 %v1004, 4294901760
        %v1223 = vsub.f32 %v1004, %v1222
        %v1224 = vand.u32 %v1223, 4294901760
        %1225 = vmatmul.f32.gmra.mxu0 %v1224
        %v1226 = vpop.f32.mrf.mxu0
        %v1227 = vadd.f32 %v1172, %v1226
        %v1228 = vand.u32 %v1007, 4294901760
        %v1229 = vsub.f32 %v1007, %v1228
        %v1230 = vand.u32 %v1229, 4294901760
        %1231 = vmatmul.f32.gmra.mxu0 %v1230
        %v1232 = vpop.f32.mrf.mxu0
        %v1233 = vadd.f32 %v1177, %v1232
        %v1234 = vand.u32 %v1010, 4294901760
        %v1235 = vsub.f32 %v1010, %v1234
        %v1236 = vand.u32 %v1235, 4294901760
        %1237 = vmatmul.f32.gmra.mxu0 %v1236
        %v1238 = vpop.f32.mrf.mxu0
        %v1239 = vadd.f32 %v1182, %v1238
        %v1240 = vand.u32 %v1013, 4294901760
        %v1241 = vsub.f32 %v1013, %v1240
        %v1242 = vand.u32 %v1241, 4294901760
        %1243 = vmatmul.f32.gmra.mxu0 %v1242
        %v1244 = vpop.f32.mrf.mxu0
        %v1245 = vadd.f32 %v1187, %v1244
        %v1246 = vand.u32 %v1016, 4294901760
        %v1247 = vsub.f32 %v1016, %v1246
        %v1248 = vand.u32 %v1247, 4294901760
        %1249 = vmatmul.f32.gmra.mxu0 %v1248
        %v1250 = vpop.f32.mrf.mxu0
        %v1251 = vadd.f32 %v1192, %v1250
        %v1252 = vand.u32 %v1019, 4294901760
        %v1253 = vsub.f32 %v1019, %v1252
        %v1254 = vand.u32 %v1253, 4294901760
        %1255 = vmatmul.f32.gmra.mxu0 %v1254
        %v1256 = vpop.f32.mrf.mxu0
        %v1257 = vadd.f32 %v1197, %v1256
        %1258 = vdwg.mxu0
        %1259 = vmatpush.msra.mxu0 0.0
        %1260 = vmatpush.msra.mxu0 0.0
        %1261 = vmatpush.msra.mxu0 0.0
        %1262 = vmatpush.msra.mxu0 0.0
        %1263 = vmatpush.msra.mxu0 0.0
        %1264 = vmatpush.msra.mxu0 0.0
        %1265 = vmatpush.msra.mxu0 0.0
        %1266 = vmatpush.msra.mxu0 0.0
        %1267 = vmatpush.msra.mxu0 0.0
        %1268 = vmatpush.msra.mxu0 0.0
        %1269 = vmatpush.msra.mxu0 0.0
        %1270 = vmatpush.msra.mxu0 0.0
        %1271 = vmatpush.msra.mxu0 0.0
        %1272 = vmatpush.msra.mxu0 0.0
        %1273 = vmatpush.msra.mxu0 0.0
        %v1274 = vand.u32 %v986, 4294901760
        %v1275 = vsub.f32 %v986, %v1274
        %v1276 = vand.u32 %v1275, 4294901760
        %1277 = vmatpush.msra.mxu0 %v1276
        %v1278 = vand.u32 %v1001, 4294901760
        %1279 = vmatmul.f32.gmra.mxu0 %v1278
        %v1280 = vpop.f32.mrf.mxu0
        %v1281 = vadd.f32 %v1221, %v1280
        %v1282 = vand.u32 %v1004, 4294901760
        %1283 = vmatmul.f32.gmra.mxu0 %v1282
        %v1284 = vpop.f32.mrf.mxu0
        %v1285 = vadd.f32 %v1227, %v1284
        %v1286 = vand.u32 %v1007, 4294901760
        %1287 = vmatmul.f32.gmra.mxu0 %v1286
        %v1288 = vpop.f32.mrf.mxu0
        %v1289 = vadd.f32 %v1233, %v1288
        %v1290 = vand.u32 %v1010, 4294901760
        %1291 = vmatmul.f32.gmra.mxu0 %v1290
        %v1292 = vpop.f32.mrf.mxu0
        %v1293 = vadd.f32 %v1239, %v1292
        %v1294 = vand.u32 %v1013, 4294901760
        %1295 = vmatmul.f32.gmra.mxu0 %v1294
        %v1296 = vpop.f32.mrf.mxu0
        %v1297 = vadd.f32 %v1245, %v1296
        %v1298 = vand.u32 %v1016, 4294901760
        %1299 = vmatmul.f32.gmra.mxu0 %v1298
        %v1300 = vpop.f32.mrf.mxu0
        %v1301 = vadd.f32 %v1251, %v1300
        %v1302 = vand.u32 %v1019, 4294901760
        %1303 = vmatmul.f32.gmra.mxu0 %v1302
        %v1304 = vpop.f32.mrf.mxu0
        %v1305 = vadd.f32 %v1257, %v1304
        %1306 = vdwg.mxu0
        %1307 = vmatpush.msra.mxu0 0.0
        %1308 = vmatpush.msra.mxu0 0.0
        %1309 = vmatpush.msra.mxu0 0.0
        %1310 = vmatpush.msra.mxu0 0.0
        %1311 = vmatpush.msra.mxu0 0.0
        %1312 = vmatpush.msra.mxu0 0.0
        %1313 = vmatpush.msra.mxu0 0.0
        %1314 = vmatpush.msra.mxu0 0.0
        %1315 = vmatpush.msra.mxu0 0.0
        %1316 = vmatpush.msra.mxu0 0.0
        %1317 = vmatpush.msra.mxu0 0.0
        %1318 = vmatpush.msra.mxu0 0.0
        %1319 = vmatpush.msra.mxu0 0.0
        %1320 = vmatpush.msra.mxu0 0.0
        %1321 = vmatpush.msra.mxu0 0.0
        %v1322 = vand.u32 %v986, 4294901760
        %1323 = vmatpush.msra.mxu0 %v1322
        %v1324 = vand.u32 %v1001, 4294901760
        %1325 = vmatmul.f32.gmra.mxu0 %v1324
        %v1326 = vpop.f32.mrf.mxu0
        %v1327 = vadd.f32 %v1281, %v1326
        %v1328 = vand.u32 %v1004, 4294901760
        %1329 = vmatmul.f32.gmra.mxu0 %v1328
        %v1330 = vpop.f32.mrf.mxu0
        %v1331 = vadd.f32 %v1285, %v1330
        %v1332 = vand.u32 %v1007, 4294901760
        %1333 = vmatmul.f32.gmra.mxu0 %v1332
        %v1334 = vpop.f32.mrf.mxu0
        %v1335 = vadd.f32 %v1289, %v1334
        %v1336 = vand.u32 %v1010, 4294901760
        %1337 = vmatmul.f32.gmra.mxu0 %v1336
        %v1338 = vpop.f32.mrf.mxu0
        %v1339 = vadd.f32 %v1293, %v1338
        %v1340 = vand.u32 %v1013, 4294901760
        %1341 = vmatmul.f32.gmra.mxu0 %v1340
        %v1342 = vpop.f32.mrf.mxu0
        %v1343 = vadd.f32 %v1297, %v1342
        %v1344 = vand.u32 %v1016, 4294901760
        %1345 = vmatmul.f32.gmra.mxu0 %v1344
        %v1346 = vpop.f32.mrf.mxu0
        %v1347 = vadd.f32 %v1301, %v1346
        %v1348 = vand.u32 %v1019, 4294901760
        %1349 = vmatmul.f32.gmra.mxu0 %v1348
        %v1350 = vpop.f32.mrf.mxu0
        %v1351 = vadd.f32 %v1305, %v1350
        %1352 = vdwg.mxu0
        %v1353 = vmax.f32 %v1327, 0.0
        %v1354 = vmax.f32 %v1331, 0.0
        %v1355 = vmax.f32 %v1335, 0.0
        %v1356 = vmax.f32 %v1339, 0.0
        %v1357 = vmax.f32 %v1343, 0.0
        %v1358 = vmax.f32 %v1347, 0.0
        %v1359 = vmax.f32 %v1351, 0.0
        %v1361 = vperm.slane %v996, 0
        %v1364 = vsel %vm744, %v1353, 0
        %v1367 = vsel %vm744, %v1354, 0
        %v1370 = vsel %vm744, %v1355, 0
        %v1373 = vsel %vm744, %v1356, 0
        %v1376 = vsel %vm744, %v1357, 0
        %v1379 = vsel %vm744, %v1358, 0
        %v1382 = vsel %vm744, %v1359, 0
        %1384 = vmatpush.msra.mxu0 0.0
        %1385 = vmatpush.msra.mxu0 0.0
        %1386 = vmatpush.msra.mxu0 0.0
        %1387 = vmatpush.msra.mxu0 0.0
        %1388 = vmatpush.msra.mxu0 0.0
        %1389 = vmatpush.msra.mxu0 0.0
        %1390 = vmatpush.msra.mxu0 0.0
        %1391 = vmatpush.msra.mxu0 0.0
        %v1392 = vand.u32 %v995, 4294901760
        %1393 = vmatpush.msra.mxu0 %v1392
        %v1394 = vand.u32 %v994, 4294901760
        %1395 = vmatpush.msra.mxu0 %v1394
        %v1396 = vand.u32 %v993, 4294901760
        %1397 = vmatpush.msra.mxu0 %v1396
        %v1398 = vand.u32 %v992, 4294901760
        %1399 = vmatpush.msra.mxu0 %v1398
        %v1400 = vand.u32 %v991, 4294901760
        %1401 = vmatpush.msra.mxu0 %v1400
        %v1402 = vand.u32 %v990, 4294901760
        %1403 = vmatpush.msra.mxu0 %v1402
        %v1404 = vand.u32 %v989, 4294901760
        %1405 = vmatpush.msra.mxu0 %v1404
        %v1406 = vand.u32 %v988, 4294901760
        %1407 = vmatpush.msra.mxu0 %v1406
        %v1408 = vand.u32 %v1364, 4294901760
        %v1409 = vsub.f32 %v1364, %v1408
        %v1410 = vand.u32 %v1409, 4294901760
        %v1411 = vsub.f32 %v1409, %v1410
        %v1412 = vand.u32 %v1411, 4294901760
        %1413 = vmatmul.f32.gmra.mxu0 %v1412
        %v1414 = vpop.f32.mrf.mxu0
        %v1415 = vadd.f32 %v1361, %v1414
        %v1416 = vand.u32 %v1367, 4294901760
        %v1417 = vsub.f32 %v1367, %v1416
        %v1418 = vand.u32 %v1417, 4294901760
        %v1419 = vsub.f32 %v1417, %v1418
        %v1420 = vand.u32 %v1419, 4294901760
        %1421 = vmatmul.f32.gmra.mxu0 %v1420
        %v1422 = vpop.f32.mrf.mxu0
        %v1423 = vadd.f32 %v1361, %v1422
        %v1424 = vand.u32 %v1370, 4294901760
        %v1425 = vsub.f32 %v1370, %v1424
        %v1426 = vand.u32 %v1425, 4294901760
        %v1427 = vsub.f32 %v1425, %v1426
        %v1428 = vand.u32 %v1427, 4294901760
        %1429 = vmatmul.f32.gmra.mxu0 %v1428
        %v1430 = vpop.f32.mrf.mxu0
        %v1431 = vadd.f32 %v1361, %v1430
        %v1432 = vand.u32 %v1373, 4294901760
        %v1433 = vsub.f32 %v1373, %v1432
        %v1434 = vand.u32 %v1433, 4294901760
        %v1435 = vsub.f32 %v1433, %v1434
        %v1436 = vand.u32 %v1435, 4294901760
        %1437 = vmatmul.f32.gmra.mxu0 %v1436
        %v1438 = vpop.f32.mrf.mxu0
        %v1439 = vadd.f32 %v1361, %v1438
        %v1440 = vand.u32 %v1376, 4294901760
        %v1441 = vsub.f32 %v1376, %v1440
        %v1442 = vand.u32 %v1441, 4294901760
        %v1443 = vsub.f32 %v1441, %v1442
        %v1444 = vand.u32 %v1443, 4294901760
        %1445 = vmatmul.f32.gmra.mxu0 %v1444
        %v1446 = vpop.f32.mrf.mxu0
        %v1447 = vadd.f32 %v1361, %v1446
        %v1448 = vand.u32 %v1379, 4294901760
        %v1449 = vsub.f32 %v1379, %v1448
        %v1450 = vand.u32 %v1449, 4294901760
        %v1451 = vsub.f32 %v1449, %v1450
        %v1452 = vand.u32 %v1451, 4294901760
        %1453 = vmatmul.f32.gmra.mxu0 %v1452
        %v1454 = vpop.f32.mrf.mxu0
        %v1455 = vadd.f32 %v1361, %v1454
        %v1456 = vand.u32 %v1382, 4294901760
        %v1457 = vsub.f32 %v1382, %v1456
        %v1458 = vand.u32 %v1457, 4294901760
        %v1459 = vsub.f32 %v1457, %v1458
        %v1460 = vand.u32 %v1459, 4294901760
        %1461 = vmatmul.f32.gmra.mxu0 %v1460
        %v1462 = vpop.f32.mrf.mxu0
        %v1463 = vadd.f32 %v1361, %v1462
        %1464 = vdwg.mxu0
        %1465 = vmatpush.msra.mxu0 0.0
        %1466 = vmatpush.msra.mxu0 0.0
        %1467 = vmatpush.msra.mxu0 0.0
        %1468 = vmatpush.msra.mxu0 0.0
        %1469 = vmatpush.msra.mxu0 0.0
        %1470 = vmatpush.msra.mxu0 0.0
        %1471 = vmatpush.msra.mxu0 0.0
        %1472 = vmatpush.msra.mxu0 0.0
        %v1473 = vand.u32 %v995, 4294901760
        %v1474 = vsub.f32 %v995, %v1473
        %v1475 = vand.u32 %v1474, 4294901760
        %v1476 = vsub.f32 %v1474, %v1475
        %v1477 = vand.u32 %v1476, 4294901760
        %1478 = vmatpush.msra.mxu0 %v1477
        %v1479 = vand.u32 %v994, 4294901760
        %v1480 = vsub.f32 %v994, %v1479
        %v1481 = vand.u32 %v1480, 4294901760
        %v1482 = vsub.f32 %v1480, %v1481
        %v1483 = vand.u32 %v1482, 4294901760
        %1484 = vmatpush.msra.mxu0 %v1483
        %v1485 = vand.u32 %v993, 4294901760
        %v1486 = vsub.f32 %v993, %v1485
        %v1487 = vand.u32 %v1486, 4294901760
        %v1488 = vsub.f32 %v1486, %v1487
        %v1489 = vand.u32 %v1488, 4294901760
        %1490 = vmatpush.msra.mxu0 %v1489
        %v1491 = vand.u32 %v992, 4294901760
        %v1492 = vsub.f32 %v992, %v1491
        %v1493 = vand.u32 %v1492, 4294901760
        %v1494 = vsub.f32 %v1492, %v1493
        %v1495 = vand.u32 %v1494, 4294901760
        %1496 = vmatpush.msra.mxu0 %v1495
        %v1497 = vand.u32 %v991, 4294901760
        %v1498 = vsub.f32 %v991, %v1497
        %v1499 = vand.u32 %v1498, 4294901760
        %v1500 = vsub.f32 %v1498, %v1499
        %v1501 = vand.u32 %v1500, 4294901760
        %1502 = vmatpush.msra.mxu0 %v1501
        %v1503 = vand.u32 %v990, 4294901760
        %v1504 = vsub.f32 %v990, %v1503
        %v1505 = vand.u32 %v1504, 4294901760
        %v1506 = vsub.f32 %v1504, %v1505
        %v1507 = vand.u32 %v1506, 4294901760
        %1508 = vmatpush.msra.mxu0 %v1507
        %v1509 = vand.u32 %v989, 4294901760
        %v1510 = vsub.f32 %v989, %v1509
        %v1511 = vand.u32 %v1510, 4294901760
        %v1512 = vsub.f32 %v1510, %v1511
        %v1513 = vand.u32 %v1512, 4294901760
        %1514 = vmatpush.msra.mxu0 %v1513
        %v1515 = vand.u32 %v988, 4294901760
        %v1516 = vsub.f32 %v988, %v1515
        %v1517 = vand.u32 %v1516, 4294901760
        %v1518 = vsub.f32 %v1516, %v1517
        %v1519 = vand.u32 %v1518, 4294901760
        %1520 = vmatpush.msra.mxu0 %v1519
        %v1521 = vand.u32 %v1364, 4294901760
        %1522 = vmatmul.f32.gmra.mxu0 %v1521
        %v1523 = vpop.f32.mrf.mxu0
        %v1524 = vadd.f32 %v1415, %v1523
        %v1525 = vand.u32 %v1367, 4294901760
        %1526 = vmatmul.f32.gmra.mxu0 %v1525
        %v1527 = vpop.f32.mrf.mxu0
        %v1528 = vadd.f32 %v1423, %v1527
        %v1529 = vand.u32 %v1370, 4294901760
        %1530 = vmatmul.f32.gmra.mxu0 %v1529
        %v1531 = vpop.f32.mrf.mxu0
        %v1532 = vadd.f32 %v1431, %v1531
        %v1533 = vand.u32 %v1373, 4294901760
        %1534 = vmatmul.f32.gmra.mxu0 %v1533
        %v1535 = vpop.f32.mrf.mxu0
        %v1536 = vadd.f32 %v1439, %v1535
        %v1537 = vand.u32 %v1376, 4294901760
        %1538 = vmatmul.f32.gmra.mxu0 %v1537
        %v1539 = vpop.f32.mrf.mxu0
        %v1540 = vadd.f32 %v1447, %v1539
        %v1541 = vand.u32 %v1379, 4294901760
        %1542 = vmatmul.f32.gmra.mxu0 %v1541
        %v1543 = vpop.f32.mrf.mxu0
        %v1544 = vadd.f32 %v1455, %v1543
        %v1545 = vand.u32 %v1382, 4294901760
        %1546 = vmatmul.f32.gmra.mxu0 %v1545
        %v1547 = vpop.f32.mrf.mxu0
        %v1548 = vadd.f32 %v1463, %v1547
        %1549 = vdwg.mxu0
        %1550 = vmatpush.msra.mxu0 0.0
        %1551 = vmatpush.msra.mxu0 0.0
        %1552 = vmatpush.msra.mxu0 0.0
        %1553 = vmatpush.msra.mxu0 0.0
        %1554 = vmatpush.msra.mxu0 0.0
        %1555 = vmatpush.msra.mxu0 0.0
        %1556 = vmatpush.msra.mxu0 0.0
        %1557 = vmatpush.msra.mxu0 0.0
        %v1558 = vand.u32 %v995, 4294901760
        %v1559 = vsub.f32 %v995, %v1558
        %1560 = vmatpush.msra.mxu0 %v1559
        %v1561 = vand.u32 %v994, 4294901760
        %v1562 = vsub.f32 %v994, %v1561
        %1563 = vmatpush.msra.mxu0 %v1562
        %v1564 = vand.u32 %v993, 4294901760
        %v1565 = vsub.f32 %v993, %v1564
        %1566 = vmatpush.msra.mxu0 %v1565
        %v1567 = vand.u32 %v992, 4294901760
        %v1568 = vsub.f32 %v992, %v1567
        %1569 = vmatpush.msra.mxu0 %v1568
        %v1570 = vand.u32 %v991, 4294901760
        %v1571 = vsub.f32 %v991, %v1570
        %1572 = vmatpush.msra.mxu0 %v1571
        %v1573 = vand.u32 %v990, 4294901760
        %v1574 = vsub.f32 %v990, %v1573
        %1575 = vmatpush.msra.mxu0 %v1574
        %v1576 = vand.u32 %v989, 4294901760
        %v1577 = vsub.f32 %v989, %v1576
        %1578 = vmatpush.msra.mxu0 %v1577
        %v1579 = vand.u32 %v988, 4294901760
        %v1580 = vsub.f32 %v988, %v1579
        %1581 = vmatpush.msra.mxu0 %v1580
        %v1582 = vand.u32 %v1364, 4294901760
        %v1583 = vsub.f32 %v1364, %v1582
        %1584 = vmatmul.f32.gmra.mxu0 %v1583
        %v1585 = vpop.f32.mrf.mxu0
        %v1586 = vadd.f32 %v1524, %v1585
        %v1587 = vand.u32 %v1367, 4294901760
        %v1588 = vsub.f32 %v1367, %v1587
        %1589 = vmatmul.f32.gmra.mxu0 %v1588
        %v1590 = vpop.f32.mrf.mxu0
        %v1591 = vadd.f32 %v1528, %v1590
        %v1592 = vand.u32 %v1370, 4294901760
        %v1593 = vsub.f32 %v1370, %v1592
        %1594 = vmatmul.f32.gmra.mxu0 %v1593
        %v1595 = vpop.f32.mrf.mxu0
        %v1596 = vadd.f32 %v1532, %v1595
        %v1597 = vand.u32 %v1373, 4294901760
        %v1598 = vsub.f32 %v1373, %v1597
        %1599 = vmatmul.f32.gmra.mxu0 %v1598
        %v1600 = vpop.f32.mrf.mxu0
        %v1601 = vadd.f32 %v1536, %v1600
        %v1602 = vand.u32 %v1376, 4294901760
        %v1603 = vsub.f32 %v1376, %v1602
        %1604 = vmatmul.f32.gmra.mxu0 %v1603
        %v1605 = vpop.f32.mrf.mxu0
        %v1606 = vadd.f32 %v1540, %v1605
        %v1607 = vand.u32 %v1379, 4294901760
        %v1608 = vsub.f32 %v1379, %v1607
        %1609 = vmatmul.f32.gmra.mxu0 %v1608
        %v1610 = vpop.f32.mrf.mxu0
        %v1611 = vadd.f32 %v1544, %v1610
        %v1612 = vand.u32 %v1382, 4294901760
        %v1613 = vsub.f32 %v1382, %v1612
        %1614 = vmatmul.f32.gmra.mxu0 %v1613
        %v1615 = vpop.f32.mrf.mxu0
        %v1616 = vadd.f32 %v1548, %v1615
        %1617 = vdwg.mxu0
        %1618 = vmatpush.msra.mxu0 0.0
        %1619 = vmatpush.msra.mxu0 0.0
        %1620 = vmatpush.msra.mxu0 0.0
        %1621 = vmatpush.msra.mxu0 0.0
        %1622 = vmatpush.msra.mxu0 0.0
        %1623 = vmatpush.msra.mxu0 0.0
        %1624 = vmatpush.msra.mxu0 0.0
        %1625 = vmatpush.msra.mxu0 0.0
        %v1626 = vand.u32 %v995, 4294901760
        %1627 = vmatpush.msra.mxu0 %v1626
        %v1628 = vand.u32 %v994, 4294901760
        %1629 = vmatpush.msra.mxu0 %v1628
        %v1630 = vand.u32 %v993, 4294901760
        %1631 = vmatpush.msra.mxu0 %v1630
        %v1632 = vand.u32 %v992, 4294901760
        %1633 = vmatpush.msra.mxu0 %v1632
        %v1634 = vand.u32 %v991, 4294901760
        %1635 = vmatpush.msra.mxu0 %v1634
        %v1636 = vand.u32 %v990, 4294901760
        %1637 = vmatpush.msra.mxu0 %v1636
        %v1638 = vand.u32 %v989, 4294901760
        %1639 = vmatpush.msra.mxu0 %v1638
        %v1640 = vand.u32 %v988, 4294901760
        %1641 = vmatpush.msra.mxu0 %v1640
        %v1642 = vand.u32 %v1364, 4294901760
        %v1643 = vsub.f32 %v1364, %v1642
        %v1644 = vand.u32 %v1643, 4294901760
        %1645 = vmatmul.f32.gmra.mxu0 %v1644
        %v1646 = vpop.f32.mrf.mxu0
        %v1647 = vadd.f32 %v1586, %v1646
        %v1648 = vand.u32 %v1367, 4294901760
        %v1649 = vsub.f32 %v1367, %v1648
        %v1650 = vand.u32 %v1649, 4294901760
        %1651 = vmatmul.f32.gmra.mxu0 %v1650
        %v1652 = vpop.f32.mrf.mxu0
        %v1653 = vadd.f32 %v1591, %v1652
        %v1654 = vand.u32 %v1370, 4294901760
        %v1655 = vsub.f32 %v1370, %v1654
        %v1656 = vand.u32 %v1655, 4294901760
        %1657 = vmatmul.f32.gmra.mxu0 %v1656
        %v1658 = vpop.f32.mrf.mxu0
        %v1659 = vadd.f32 %v1596, %v1658
        %v1660 = vand.u32 %v1373, 4294901760
        %v1661 = vsub.f32 %v1373, %v1660
        %v1662 = vand.u32 %v1661, 4294901760
        %1663 = vmatmul.f32.gmra.mxu0 %v1662
        %v1664 = vpop.f32.mrf.mxu0
        %v1665 = vadd.f32 %v1601, %v1664
        %v1666 = vand.u32 %v1376, 4294901760
        %v1667 = vsub.f32 %v1376, %v1666
        %v1668 = vand.u32 %v1667, 4294901760
        %1669 = vmatmul.f32.gmra.mxu0 %v1668
        %v1670 = vpop.f32.mrf.mxu0
        %v1671 = vadd.f32 %v1606, %v1670
        %v1672 = vand.u32 %v1379, 4294901760
        %v1673 = vsub.f32 %v1379, %v1672
        %v1674 = vand.u32 %v1673, 4294901760
        %1675 = vmatmul.f32.gmra.mxu0 %v1674
        %v1676 = vpop.f32.mrf.mxu0
        %v1677 = vadd.f32 %v1611, %v1676
        %v1678 = vand.u32 %v1382, 4294901760
        %v1679 = vsub.f32 %v1382, %v1678
        %v1680 = vand.u32 %v1679, 4294901760
        %1681 = vmatmul.f32.gmra.mxu0 %v1680
        %v1682 = vpop.f32.mrf.mxu0
        %v1683 = vadd.f32 %v1616, %v1682
        %1684 = vdwg.mxu0
        %1685 = vmatpush.msra.mxu0 0.0
        %1686 = vmatpush.msra.mxu0 0.0
        %1687 = vmatpush.msra.mxu0 0.0
        %1688 = vmatpush.msra.mxu0 0.0
        %1689 = vmatpush.msra.mxu0 0.0
        %1690 = vmatpush.msra.mxu0 0.0
        %1691 = vmatpush.msra.mxu0 0.0
        %1692 = vmatpush.msra.mxu0 0.0
        %v1693 = vand.u32 %v995, 4294901760
        %v1694 = vsub.f32 %v995, %v1693
        %v1695 = vand.u32 %v1694, 4294901760
        %1696 = vmatpush.msra.mxu0 %v1695
        %v1697 = vand.u32 %v994, 4294901760
        %v1698 = vsub.f32 %v994, %v1697
        %v1699 = vand.u32 %v1698, 4294901760
        %1700 = vmatpush.msra.mxu0 %v1699
        %v1701 = vand.u32 %v993, 4294901760
        %v1702 = vsub.f32 %v993, %v1701
        %v1703 = vand.u32 %v1702, 4294901760
        %1704 = vmatpush.msra.mxu0 %v1703
        %v1705 = vand.u32 %v992, 4294901760
        %v1706 = vsub.f32 %v992, %v1705
        %v1707 = vand.u32 %v1706, 4294901760
        %1708 = vmatpush.msra.mxu0 %v1707
        %v1709 = vand.u32 %v991, 4294901760
        %v1710 = vsub.f32 %v991, %v1709
        %v1711 = vand.u32 %v1710, 4294901760
        %1712 = vmatpush.msra.mxu0 %v1711
        %v1713 = vand.u32 %v990, 4294901760
        %v1714 = vsub.f32 %v990, %v1713
        %v1715 = vand.u32 %v1714, 4294901760
        %1716 = vmatpush.msra.mxu0 %v1715
        %v1717 = vand.u32 %v989, 4294901760
        %v1718 = vsub.f32 %v989, %v1717
        %v1719 = vand.u32 %v1718, 4294901760
        %1720 = vmatpush.msra.mxu0 %v1719
        %v1721 = vand.u32 %v988, 4294901760
        %v1722 = vsub.f32 %v988, %v1721
        %v1723 = vand.u32 %v1722, 4294901760
        %1724 = vmatpush.msra.mxu0 %v1723
        %v1725 = vand.u32 %v1364, 4294901760
        %1726 = vmatmul.f32.gmra.mxu0 %v1725
        %v1727 = vpop.f32.mrf.mxu0
        %v1728 = vadd.f32 %v1647, %v1727
        %v1729 = vand.u32 %v1367, 4294901760
        %1730 = vmatmul.f32.gmra.mxu0 %v1729
        %v1731 = vpop.f32.mrf.mxu0
        %v1732 = vadd.f32 %v1653, %v1731
        %v1733 = vand.u32 %v1370, 4294901760
        %1734 = vmatmul.f32.gmra.mxu0 %v1733
        %v1735 = vpop.f32.mrf.mxu0
        %v1736 = vadd.f32 %v1659, %v1735
        %v1737 = vand.u32 %v1373, 4294901760
        %1738 = vmatmul.f32.gmra.mxu0 %v1737
        %v1739 = vpop.f32.mrf.mxu0
        %v1740 = vadd.f32 %v1665, %v1739
        %v1741 = vand.u32 %v1376, 4294901760
        %1742 = vmatmul.f32.gmra.mxu0 %v1741
        %v1743 = vpop.f32.mrf.mxu0
        %v1744 = vadd.f32 %v1671, %v1743
        %v1745 = vand.u32 %v1379, 4294901760
        %1746 = vmatmul.f32.gmra.mxu0 %v1745
        %v1747 = vpop.f32.mrf.mxu0
        %v1748 = vadd.f32 %v1677, %v1747
        %v1749 = vand.u32 %v1382, 4294901760
        %1750 = vmatmul.f32.gmra.mxu0 %v1749
        %v1751 = vpop.f32.mrf.mxu0
        %v1752 = vadd.f32 %v1683, %v1751
        %1753 = vdwg.mxu0
        %1754 = vmatpush.msra.mxu0 0.0
        %1755 = vmatpush.msra.mxu0 0.0
        %1756 = vmatpush.msra.mxu0 0.0
        %1757 = vmatpush.msra.mxu0 0.0
        %1758 = vmatpush.msra.mxu0 0.0
        %1759 = vmatpush.msra.mxu0 0.0
        %1760 = vmatpush.msra.mxu0 0.0
        %1761 = vmatpush.msra.mxu0 0.0
        %v1762 = vand.u32 %v995, 4294901760
        %1763 = vmatpush.msra.mxu0 %v1762
        %v1764 = vand.u32 %v994, 4294901760
        %1765 = vmatpush.msra.mxu0 %v1764
        %v1766 = vand.u32 %v993, 4294901760
        %1767 = vmatpush.msra.mxu0 %v1766
        %v1768 = vand.u32 %v992, 4294901760
        %1769 = vmatpush.msra.mxu0 %v1768
        %v1770 = vand.u32 %v991, 4294901760
        %1771 = vmatpush.msra.mxu0 %v1770
        %v1772 = vand.u32 %v990, 4294901760
        %1773 = vmatpush.msra.mxu0 %v1772
        %v1774 = vand.u32 %v989, 4294901760
        %1775 = vmatpush.msra.mxu0 %v1774
        %v1776 = vand.u32 %v988, 4294901760
        %1777 = vmatpush.msra.mxu0 %v1776
        %v1778 = vand.u32 %v1364, 4294901760
        %1779 = vmatmul.f32.gmra.mxu0 %v1778
        %v1780 = vpop.f32.mrf.mxu0
        %v1781 = vadd.f32 %v1728, %v1780
        %v1782 = vand.u32 %v1367, 4294901760
        %1783 = vmatmul.f32.gmra.mxu0 %v1782
        %v1784 = vpop.f32.mrf.mxu0
        %v1785 = vadd.f32 %v1732, %v1784
        %v1786 = vand.u32 %v1370, 4294901760
        %1787 = vmatmul.f32.gmra.mxu0 %v1786
        %v1788 = vpop.f32.mrf.mxu0
        %v1789 = vadd.f32 %v1736, %v1788
        %v1790 = vand.u32 %v1373, 4294901760
        %1791 = vmatmul.f32.gmra.mxu0 %v1790
        %v1792 = vpop.f32.mrf.mxu0
        %v1793 = vadd.f32 %v1740, %v1792
        %v1794 = vand.u32 %v1376, 4294901760
        %1795 = vmatmul.f32.gmra.mxu0 %v1794
        %v1796 = vpop.f32.mrf.mxu0
        %v1797 = vadd.f32 %v1744, %v1796
        %v1798 = vand.u32 %v1379, 4294901760
        %1799 = vmatmul.f32.gmra.mxu0 %v1798
        %v1800 = vpop.f32.mrf.mxu0
        %v1801 = vadd.f32 %v1748, %v1800
        %v1802 = vand.u32 %v1382, 4294901760
        %1803 = vmatmul.f32.gmra.mxu0 %v1802
        %v1804 = vpop.f32.mrf.mxu0
        %v1805 = vadd.f32 %v1752, %v1804
        %1806 = vdwg.mxu0
        %v1807 = vmax.f32 %v1781, 0.0
        %v1808 = vmax.f32 %v1785, 0.0
        %v1809 = vmax.f32 %v1789, 0.0
        %v1810 = vmax.f32 %v1793, 0.0
        %v1811 = vmax.f32 %v1797, 0.0
        %v1812 = vmax.f32 %v1801, 0.0
        %v1813 = vmax.f32 %v1805, 0.0
        %v1814 = vld [vmem:[#allocation7] sm:$0xff]
        %v1815 = vld [vmem:[#allocation7 + $0x8] sm:$0xff]
        %v1816 = vld [vmem:[#allocation7 + $0x10] sm:$0xff]
        %v1817 = vld [vmem:[#allocation7 + $0x18] sm:$0xff]
        %v1818 = vld [vmem:[#allocation7 + $0x20] sm:$0xff]
        %v1819 = vld [vmem:[#allocation7 + $0x28] sm:$0xff]
        %v1820 = vld [vmem:[#allocation7 + $0x30] sm:$0xff]
        %v1821 = vld [vmem:[#allocation7 + $0x38] sm:$0xff]
        %v1823 = vsel %vm744, %v985, 0
        %1825 = vmatpush.msra.mxu0 0.0
        %1826 = vmatpush.msra.mxu0 0.0
        %1827 = vmatpush.msra.mxu0 0.0
        %1828 = vmatpush.msra.mxu0 0.0
        %1829 = vmatpush.msra.mxu0 0.0
        %1830 = vmatpush.msra.mxu0 0.0
        %1831 = vmatpush.msra.mxu0 0.0
        %1832 = vmatpush.msra.mxu0 0.0
        %v1833 = vand.u32 %v1821, 4294901760
        %1834 = vmatpush.msra.mxu0 %v1833
        %v1835 = vand.u32 %v1820, 4294901760
        %1836 = vmatpush.msra.mxu0 %v1835
        %v1837 = vand.u32 %v1819, 4294901760
        %1838 = vmatpush.msra.mxu0 %v1837
        %v1839 = vand.u32 %v1818, 4294901760
        %1840 = vmatpush.msra.mxu0 %v1839
        %v1841 = vand.u32 %v1817, 4294901760
        %1842 = vmatpush.msra.mxu0 %v1841
        %v1843 = vand.u32 %v1816, 4294901760
        %1844 = vmatpush.msra.mxu0 %v1843
        %v1845 = vand.u32 %v1815, 4294901760
        %1846 = vmatpush.msra.mxu0 %v1845
        %v1847 = vand.u32 %v1814, 4294901760
        %1848 = vmatpush.msra.mxu0 %v1847
        %v1849 = vand.u32 %v1823, 4294901760
        %v1850 = vsub.f32 %v1823, %v1849
        %v1851 = vand.u32 %v1850, 4294901760
        %v1852 = vsub.f32 %v1850, %v1851
        %v1853 = vand.u32 %v1852, 4294901760
        %1854 = vmatmul.f32.gmra.mxu0 %v1853
        %v1855 = vpop.f32.mrf.mxu0
        %v1856 = vadd.f32 0.0, %v1855
        %1857 = vdwg.mxu0
        %1858 = vmatpush.msra.mxu0 0.0
        %1859 = vmatpush.msra.mxu0 0.0
        %1860 = vmatpush.msra.mxu0 0.0
        %1861 = vmatpush.msra.mxu0 0.0
        %1862 = vmatpush.msra.mxu0 0.0
        %1863 = vmatpush.msra.mxu0 0.0
        %1864 = vmatpush.msra.mxu0 0.0
        %1865 = vmatpush.msra.mxu0 0.0
        %v1866 = vand.u32 %v1821, 4294901760
        %v1867 = vsub.f32 %v1821, %v1866
        %v1868 = vand.u32 %v1867, 4294901760
        %v1869 = vsub.f32 %v1867, %v1868
        %v1870 = vand.u32 %v1869, 4294901760
        %1871 = vmatpush.msra.mxu0 %v1870
        %v1872 = vand.u32 %v1820, 4294901760
        %v1873 = vsub.f32 %v1820, %v1872
        %v1874 = vand.u32 %v1873, 4294901760
        %v1875 = vsub.f32 %v1873, %v1874
        %v1876 = vand.u32 %v1875, 4294901760
        %1877 = vmatpush.msra.mxu0 %v1876
        %v1878 = vand.u32 %v1819, 4294901760
        %v1879 = vsub.f32 %v1819, %v1878
        %v1880 = vand.u32 %v1879, 4294901760
        %v1881 = vsub.f32 %v1879, %v1880
        %v1882 = vand.u32 %v1881, 4294901760
        %1883 = vmatpush.msra.mxu0 %v1882
        %v1884 = vand.u32 %v1818, 4294901760
        %v1885 = vsub.f32 %v1818, %v1884
        %v1886 = vand.u32 %v1885, 4294901760
        %v1887 = vsub.f32 %v1885, %v1886
        %v1888 = vand.u32 %v1887, 4294901760
        %1889 = vmatpush.msra.mxu0 %v1888
        %v1890 = vand.u32 %v1817, 4294901760
        %v1891 = vsub.f32 %v1817, %v1890
        %v1892 = vand.u32 %v1891, 4294901760
        %v1893 = vsub.f32 %v1891, %v1892
        %v1894 = vand.u32 %v1893, 4294901760
        %1895 = vmatpush.msra.mxu0 %v1894
        %v1896 = vand.u32 %v1816, 4294901760
        %v1897 = vsub.f32 %v1816, %v1896
        %v1898 = vand.u32 %v1897, 4294901760
        %v1899 = vsub.f32 %v1897, %v1898
        %v1900 = vand.u32 %v1899, 4294901760
        %1901 = vmatpush.msra.mxu0 %v1900
        %v1902 = vand.u32 %v1815, 4294901760
        %v1903 = vsub.f32 %v1815, %v1902
        %v1904 = vand.u32 %v1903, 4294901760
        %v1905 = vsub.f32 %v1903, %v1904
        %v1906 = vand.u32 %v1905, 4294901760
        %1907 = vmatpush.msra.mxu0 %v1906
        %v1908 = vand.u32 %v1814, 4294901760
        %v1909 = vsub.f32 %v1814, %v1908
        %v1910 = vand.u32 %v1909, 4294901760
        %v1911 = vsub.f32 %v1909, %v1910
        %v1912 = vand.u32 %v1911, 4294901760
        %1913 = vmatpush.msra.mxu0 %v1912
        %v1914 = vand.u32 %v1823, 4294901760
        %1915 = vmatmul.f32.gmra.mxu0 %v1914
        %v1916 = vpop.f32.mrf.mxu0
        %v1917 = vadd.f32 %v1856, %v1916
        %1918 = vdwg.mxu0
        %1919 = vmatpush.msra.mxu0 0.0
        %1920 = vmatpush.msra.mxu0 0.0
        %1921 = vmatpush.msra.mxu0 0.0
        %1922 = vmatpush.msra.mxu0 0.0
        %1923 = vmatpush.msra.mxu0 0.0
        %1924 = vmatpush.msra.mxu0 0.0
        %1925 = vmatpush.msra.mxu0 0.0
        %1926 = vmatpush.msra.mxu0 0.0
        %v1927 = vand.u32 %v1821, 4294901760
        %v1928 = vsub.f32 %v1821, %v1927
        %1929 = vmatpush.msra.mxu0 %v1928
        %v1930 = vand.u32 %v1820, 4294901760
        %v1931 = vsub.f32 %v1820, %v1930
        %1932 = vmatpush.msra.mxu0 %v1931
        %v1933 = vand.u32 %v1819, 4294901760
        %v1934 = vsub.f32 %v1819, %v1933
        %1935 = vmatpush.msra.mxu0 %v1934
        %v1936 = vand.u32 %v1818, 4294901760
        %v1937 = vsub.f32 %v1818, %v1936
        %1938 = vmatpush.msra.mxu0 %v1937
        %v1939 = vand.u32 %v1817, 4294901760
        %v1940 = vsub.f32 %v1817, %v1939
        %1941 = vmatpush.msra.mxu0 %v1940
        %v1942 = vand.u32 %v1816, 4294901760
        %v1943 = vsub.f32 %v1816, %v1942
        %1944 = vmatpush.msra.mxu0 %v1943
        %v1945 = vand.u32 %v1815, 4294901760
        %v1946 = vsub.f32 %v1815, %v1945
        %1947 = vmatpush.msra.mxu0 %v1946
        %v1948 = vand.u32 %v1814, 4294901760
        %v1949 = vsub.f32 %v1814, %v1948
        %1950 = vmatpush.msra.mxu0 %v1949
        %v1951 = vand.u32 %v1823, 4294901760
        %v1952 = vsub.f32 %v1823, %v1951
        %1953 = vmatmul.f32.gmra.mxu0 %v1952
        %v1954 = vpop.f32.mrf.mxu0
        %v1955 = vadd.f32 %v1917, %v1954
        %1956 = vdwg.mxu0
        %1957 = vmatpush.msra.mxu0 0.0
        %1958 = vmatpush.msra.mxu0 0.0
        %1959 = vmatpush.msra.mxu0 0.0
        %1960 = vmatpush.msra.mxu0 0.0
        %1961 = vmatpush.msra.mxu0 0.0
        %1962 = vmatpush.msra.mxu0 0.0
        %1963 = vmatpush.msra.mxu0 0.0
        %1964 = vmatpush.msra.mxu0 0.0
        %v1965 = vand.u32 %v1821, 4294901760
        %1966 = vmatpush.msra.mxu0 %v1965
        %v1967 = vand.u32 %v1820, 4294901760
        %1968 = vmatpush.msra.mxu0 %v1967
        %v1969 = vand.u32 %v1819, 4294901760
        %1970 = vmatpush.msra.mxu0 %v1969
        %v1971 = vand.u32 %v1818, 4294901760
        %1972 = vmatpush.msra.mxu0 %v1971
        %v1973 = vand.u32 %v1817, 4294901760
        %1974 = vmatpush.msra.mxu0 %v1973
        %v1975 = vand.u32 %v1816, 4294901760
        %1976 = vmatpush.msra.mxu0 %v1975
        %v1977 = vand.u32 %v1815, 4294901760
        %1978 = vmatpush.msra.mxu0 %v1977
        %v1979 = vand.u32 %v1814, 4294901760
        %1980 = vmatpush.msra.mxu0 %v1979
        %v1981 = vand.u32 %v1823, 4294901760
        %v1982 = vsub.f32 %v1823, %v1981
        %v1983 = vand.u32 %v1982, 4294901760
        %1984 = vmatmul.f32.gmra.mxu0 %v1983
        %v1985 = vpop.f32.mrf.mxu0
        %v1986 = vadd.f32 %v1955, %v1985
        %1987 = vdwg.mxu0
        %1988 = vmatpush.msra.mxu0 0.0
        %1989 = vmatpush.msra.mxu0 0.0
        %1990 = vmatpush.msra.mxu0 0.0
        %1991 = vmatpush.msra.mxu0 0.0
        %1992 = vmatpush.msra.mxu0 0.0
        %1993 = vmatpush.msra.mxu0 0.0
        %1994 = vmatpush.msra.mxu0 0.0
        %1995 = vmatpush.msra.mxu0 0.0
        %v1996 = vand.u32 %v1821, 4294901760
        %v1997 = vsub.f32 %v1821, %v1996
        %v1998 = vand.u32 %v1997, 4294901760
        %1999 = vmatpush.msra.mxu0 %v1998
        %v2000 = vand.u32 %v1820, 4294901760
        %v2001 = vsub.f32 %v1820, %v2000
        %v2002 = vand.u32 %v2001, 4294901760
        %2003 = vmatpush.msra.mxu0 %v2002
        %v2004 = vand.u32 %v1819, 4294901760
        %v2005 = vsub.f32 %v1819, %v2004
        %v2006 = vand.u32 %v2005, 4294901760
        %2007 = vmatpush.msra.mxu0 %v2006
        %v2008 = vand.u32 %v1818, 4294901760
        %v2009 = vsub.f32 %v1818, %v2008
        %v2010 = vand.u32 %v2009, 4294901760
        %2011 = vmatpush.msra.mxu0 %v2010
        %v2012 = vand.u32 %v1817, 4294901760
        %v2013 = vsub.f32 %v1817, %v2012
        %v2014 = vand.u32 %v2013, 4294901760
        %2015 = vmatpush.msra.mxu0 %v2014
        %v2016 = vand.u32 %v1816, 4294901760
        %v2017 = vsub.f32 %v1816, %v2016
        %v2018 = vand.u32 %v2017, 4294901760
        %2019 = vmatpush.msra.mxu0 %v2018
        %v2020 = vand.u32 %v1815, 4294901760
        %v2021 = vsub.f32 %v1815, %v2020
        %v2022 = vand.u32 %v2021, 4294901760
        %2023 = vmatpush.msra.mxu0 %v2022
        %v2024 = vand.u32 %v1814, 4294901760
        %v2025 = vsub.f32 %v1814, %v2024
        %v2026 = vand.u32 %v2025, 4294901760
        %2027 = vmatpush.msra.mxu0 %v2026
        %v2028 = vand.u32 %v1823, 4294901760
        %2029 = vmatmul.f32.gmra.mxu0 %v2028
        %v2030 = vpop.f32.mrf.mxu0
        %v2031 = vadd.f32 %v1986, %v2030
        %2032 = vdwg.mxu0
        %2033 = vmatpush.msra.mxu0 0.0
        %2034 = vmatpush.msra.mxu0 0.0
        %2035 = vmatpush.msra.mxu0 0.0
        %2036 = vmatpush.msra.mxu0 0.0
        %2037 = vmatpush.msra.mxu0 0.0
        %2038 = vmatpush.msra.mxu0 0.0
        %2039 = vmatpush.msra.mxu0 0.0
        %2040 = vmatpush.msra.mxu0 0.0
        %v2041 = vand.u32 %v1821, 4294901760
        %2042 = vmatpush.msra.mxu0 %v2041
        %v2043 = vand.u32 %v1820, 4294901760
        %2044 = vmatpush.msra.mxu0 %v2043
        %v2045 = vand.u32 %v1819, 4294901760
        %2046 = vmatpush.msra.mxu0 %v2045
        %v2047 = vand.u32 %v1818, 4294901760
        %2048 = vmatpush.msra.mxu0 %v2047
        %v2049 = vand.u32 %v1817, 4294901760
        %2050 = vmatpush.msra.mxu0 %v2049
        %v2051 = vand.u32 %v1816, 4294901760
        %2052 = vmatpush.msra.mxu0 %v2051
        %v2053 = vand.u32 %v1815, 4294901760
        %2054 = vmatpush.msra.mxu0 %v2053
        %v2055 = vand.u32 %v1814, 4294901760
        %2056 = vmatpush.msra.mxu0 %v2055
        %v2057 = vand.u32 %v1823, 4294901760
        %2058 = vmatmul.f32.gmra.mxu0 %v2057
        %v2059 = vpop.f32.mrf.mxu0
        %v2060 = vadd.f32 %v2031, %v2059
        %2061 = vdwg.mxu0
        %v2062 = vld [vmem:[#allocation8] sm:$0xff]
        %v2063 = vld [vmem:[#allocation8 + $0x8] sm:$0xff]
        %v2064 = vld [vmem:[#allocation8 + $0x10] sm:$0xff]
        %v2065 = vld [vmem:[#allocation8 + $0x18] sm:$0xff]
        %v2066 = vld [vmem:[#allocation8 + $0x20] sm:$0xff]
        %v2067 = vld [vmem:[#allocation8 + $0x28] sm:$0xff]
        %v2068 = vld [vmem:[#allocation8 + $0x30] sm:$0xff]
        %v2069 = vld [vmem:[#allocation8 + $0x38] sm:$0xff]
        %2070 = vmatpush.msra.mxu0 0.0
        %2071 = vmatpush.msra.mxu0 0.0
        %2072 = vmatpush.msra.mxu0 0.0
        %2073 = vmatpush.msra.mxu0 0.0
        %2074 = vmatpush.msra.mxu0 0.0
        %2075 = vmatpush.msra.mxu0 0.0
        %2076 = vmatpush.msra.mxu0 0.0
        %2077 = vmatpush.msra.mxu0 0.0
        %v2078 = vand.u32 %v2069, 4294901760
        %2079 = vmatpush.msra.mxu0 %v2078
        %v2080 = vand.u32 %v2068, 4294901760
        %2081 = vmatpush.msra.mxu0 %v2080
        %v2082 = vand.u32 %v2067, 4294901760
        %2083 = vmatpush.msra.mxu0 %v2082
        %v2084 = vand.u32 %v2066, 4294901760
        %2085 = vmatpush.msra.mxu0 %v2084
        %v2086 = vand.u32 %v2065, 4294901760
        %2087 = vmatpush.msra.mxu0 %v2086
        %v2088 = vand.u32 %v2064, 4294901760
        %2089 = vmatpush.msra.mxu0 %v2088
        %v2090 = vand.u32 %v2063, 4294901760
        %2091 = vmatpush.msra.mxu0 %v2090
        %v2092 = vand.u32 %v2062, 4294901760
        %2093 = vmatpush.msra.mxu0 %v2092
        %v2094 = vand.u32 %v1823, 4294901760
        %v2095 = vsub.f32 %v1823, %v2094
        %v2096 = vand.u32 %v2095, 4294901760
        %v2097 = vsub.f32 %v2095, %v2096
        %v2098 = vand.u32 %v2097, 4294901760
        %2099 = vmatmul.f32.gmra.mxu0 %v2098
        %v2100 = vpop.f32.mrf.mxu0
        %v2101 = vadd.f32 0.0, %v2100
        %2102 = vdwg.mxu0
        %2103 = vmatpush.msra.mxu0 0.0
        %2104 = vmatpush.msra.mxu0 0.0
        %2105 = vmatpush.msra.mxu0 0.0
        %2106 = vmatpush.msra.mxu0 0.0
        %2107 = vmatpush.msra.mxu0 0.0
        %2108 = vmatpush.msra.mxu0 0.0
        %2109 = vmatpush.msra.mxu0 0.0
        %2110 = vmatpush.msra.mxu0 0.0
        %v2111 = vand.u32 %v2069, 4294901760
        %v2112 = vsub.f32 %v2069, %v2111
        %v2113 = vand.u32 %v2112, 4294901760
        %v2114 = vsub.f32 %v2112, %v2113
        %v2115 = vand.u32 %v2114, 4294901760
        %2116 = vmatpush.msra.mxu0 %v2115
        %v2117 = vand.u32 %v2068, 4294901760
        %v2118 = vsub.f32 %v2068, %v2117
        %v2119 = vand.u32 %v2118, 4294901760
        %v2120 = vsub.f32 %v2118, %v2119
        %v2121 = vand.u32 %v2120, 4294901760
        %2122 = vmatpush.msra.mxu0 %v2121
        %v2123 = vand.u32 %v2067, 4294901760
        %v2124 = vsub.f32 %v2067, %v2123
        %v2125 = vand.u32 %v2124, 4294901760
        %v2126 = vsub.f32 %v2124, %v2125
        %v2127 = vand.u32 %v2126, 4294901760
        %2128 = vmatpush.msra.mxu0 %v2127
        %v2129 = vand.u32 %v2066, 4294901760
        %v2130 = vsub.f32 %v2066, %v2129
        %v2131 = vand.u32 %v2130, 4294901760
        %v2132 = vsub.f32 %v2130, %v2131
        %v2133 = vand.u32 %v2132, 4294901760
        %2134 = vmatpush.msra.mxu0 %v2133
        %v2135 = vand.u32 %v2065, 4294901760
        %v2136 = vsub.f32 %v2065, %v2135
        %v2137 = vand.u32 %v2136, 4294901760
        %v2138 = vsub.f32 %v2136, %v2137
        %v2139 = vand.u32 %v2138, 4294901760
        %2140 = vmatpush.msra.mxu0 %v2139
        %v2141 = vand.u32 %v2064, 4294901760
        %v2142 = vsub.f32 %v2064, %v2141
        %v2143 = vand.u32 %v2142, 4294901760
        %v2144 = vsub.f32 %v2142, %v2143
        %v2145 = vand.u32 %v2144, 4294901760
        %2146 = vmatpush.msra.mxu0 %v2145
        %v2147 = vand.u32 %v2063, 4294901760
        %v2148 = vsub.f32 %v2063, %v2147
        %v2149 = vand.u32 %v2148, 4294901760
        %v2150 = vsub.f32 %v2148, %v2149
        %v2151 = vand.u32 %v2150, 4294901760
        %2152 = vmatpush.msra.mxu0 %v2151
        %v2153 = vand.u32 %v2062, 4294901760
        %v2154 = vsub.f32 %v2062, %v2153
        %v2155 = vand.u32 %v2154, 4294901760
        %v2156 = vsub.f32 %v2154, %v2155
        %v2157 = vand.u32 %v2156, 4294901760
        %2158 = vmatpush.msra.mxu0 %v2157
        %v2159 = vand.u32 %v1823, 4294901760
        %2160 = vmatmul.f32.gmra.mxu0 %v2159
        %v2161 = vpop.f32.mrf.mxu0
        %v2162 = vadd.f32 %v2101, %v2161
        %2163 = vdwg.mxu0
        %2164 = vmatpush.msra.mxu0 0.0
        %2165 = vmatpush.msra.mxu0 0.0
        %2166 = vmatpush.msra.mxu0 0.0
        %2167 = vmatpush.msra.mxu0 0.0
        %2168 = vmatpush.msra.mxu0 0.0
        %2169 = vmatpush.msra.mxu0 0.0
        %2170 = vmatpush.msra.mxu0 0.0
        %2171 = vmatpush.msra.mxu0 0.0
        %v2172 = vand.u32 %v2069, 4294901760
        %v2173 = vsub.f32 %v2069, %v2172
        %2174 = vmatpush.msra.mxu0 %v2173
        %v2175 = vand.u32 %v2068, 4294901760
        %v2176 = vsub.f32 %v2068, %v2175
        %2177 = vmatpush.msra.mxu0 %v2176
        %v2178 = vand.u32 %v2067, 4294901760
        %v2179 = vsub.f32 %v2067, %v2178
        %2180 = vmatpush.msra.mxu0 %v2179
        %v2181 = vand.u32 %v2066, 4294901760
        %v2182 = vsub.f32 %v2066, %v2181
        %2183 = vmatpush.msra.mxu0 %v2182
        %v2184 = vand.u32 %v2065, 4294901760
        %v2185 = vsub.f32 %v2065, %v2184
        %2186 = vmatpush.msra.mxu0 %v2185
        %v2187 = vand.u32 %v2064, 4294901760
        %v2188 = vsub.f32 %v2064, %v2187
        %2189 = vmatpush.msra.mxu0 %v2188
        %v2190 = vand.u32 %v2063, 4294901760
        %v2191 = vsub.f32 %v2063, %v2190
        %2192 = vmatpush.msra.mxu0 %v2191
        %v2193 = vand.u32 %v2062, 4294901760
        %v2194 = vsub.f32 %v2062, %v2193
        %2195 = vmatpush.msra.mxu0 %v2194
        %v2196 = vand.u32 %v1823, 4294901760
        %v2197 = vsub.f32 %v1823, %v2196
        %2198 = vmatmul.f32.gmra.mxu0 %v2197
        %v2199 = vpop.f32.mrf.mxu0
        %v2200 = vadd.f32 %v2162, %v2199
        %2201 = vdwg.mxu0
        %2202 = vmatpush.msra.mxu0 0.0
        %2203 = vmatpush.msra.mxu0 0.0
        %2204 = vmatpush.msra.mxu0 0.0
        %2205 = vmatpush.msra.mxu0 0.0
        %2206 = vmatpush.msra.mxu0 0.0
        %2207 = vmatpush.msra.mxu0 0.0
        %2208 = vmatpush.msra.mxu0 0.0
        %2209 = vmatpush.msra.mxu0 0.0
        %v2210 = vand.u32 %v2069, 4294901760
        %2211 = vmatpush.msra.mxu0 %v2210
        %v2212 = vand.u32 %v2068, 4294901760
        %2213 = vmatpush.msra.mxu0 %v2212
        %v2214 = vand.u32 %v2067, 4294901760
        %2215 = vmatpush.msra.mxu0 %v2214
        %v2216 = vand.u32 %v2066, 4294901760
        %2217 = vmatpush.msra.mxu0 %v2216
        %v2218 = vand.u32 %v2065, 4294901760
        %2219 = vmatpush.msra.mxu0 %v2218
        %v2220 = vand.u32 %v2064, 4294901760
        %2221 = vmatpush.msra.mxu0 %v2220
        %v2222 = vand.u32 %v2063, 4294901760
        %2223 = vmatpush.msra.mxu0 %v2222
        %v2224 = vand.u32 %v2062, 4294901760
        %2225 = vmatpush.msra.mxu0 %v2224
        %v2226 = vand.u32 %v1823, 4294901760
        %v2227 = vsub.f32 %v1823, %v2226
        %v2228 = vand.u32 %v2227, 4294901760
        %2229 = vmatmul.f32.gmra.mxu0 %v2228
        %v2230 = vpop.f32.mrf.mxu0
        %v2231 = vadd.f32 %v2200, %v2230
        %2232 = vdwg.mxu0
        %2233 = vmatpush.msra.mxu0 0.0
        %2234 = vmatpush.msra.mxu0 0.0
        %2235 = vmatpush.msra.mxu0 0.0
        %2236 = vmatpush.msra.mxu0 0.0
        %2237 = vmatpush.msra.mxu0 0.0
        %2238 = vmatpush.msra.mxu0 0.0
        %2239 = vmatpush.msra.mxu0 0.0
        %2240 = vmatpush.msra.mxu0 0.0
        %v2241 = vand.u32 %v2069, 4294901760
        %v2242 = vsub.f32 %v2069, %v2241
        %v2243 = vand.u32 %v2242, 4294901760
        %2244 = vmatpush.msra.mxu0 %v2243
        %v2245 = vand.u32 %v2068, 4294901760
        %v2246 = vsub.f32 %v2068, %v2245
        %v2247 = vand.u32 %v2246, 4294901760
        %2248 = vmatpush.msra.mxu0 %v2247
        %v2249 = vand.u32 %v2067, 4294901760
        %v2250 = vsub.f32 %v2067, %v2249
        %v2251 = vand.u32 %v2250, 4294901760
        %2252 = vmatpush.msra.mxu0 %v2251
        %v2253 = vand.u32 %v2066, 4294901760
        %v2254 = vsub.f32 %v2066, %v2253
        %v2255 = vand.u32 %v2254, 4294901760
        %2256 = vmatpush.msra.mxu0 %v2255
        %v2257 = vand.u32 %v2065, 4294901760
        %v2258 = vsub.f32 %v2065, %v2257
        %v2259 = vand.u32 %v2258, 4294901760
        %2260 = vmatpush.msra.mxu0 %v2259
        %v2261 = vand.u32 %v2064, 4294901760
        %v2262 = vsub.f32 %v2064, %v2261
        %v2263 = vand.u32 %v2262, 4294901760
        %2264 = vmatpush.msra.mxu0 %v2263
        %v2265 = vand.u32 %v2063, 4294901760
        %v2266 = vsub.f32 %v2063, %v2265
        %v2267 = vand.u32 %v2266, 4294901760
        %2268 = vmatpush.msra.mxu0 %v2267
        %v2269 = vand.u32 %v2062, 4294901760
        %v2270 = vsub.f32 %v2062, %v2269
        %v2271 = vand.u32 %v2270, 4294901760
        %2272 = vmatpush.msra.mxu0 %v2271
        %v2273 = vand.u32 %v1823, 4294901760
        %2274 = vmatmul.f32.gmra.mxu0 %v2273
        %v2275 = vpop.f32.mrf.mxu0
        %v2276 = vadd.f32 %v2231, %v2275
        %2277 = vdwg.mxu0
        %2278 = vmatpush.msra.mxu0 0.0
        %2279 = vmatpush.msra.mxu0 0.0
        %2280 = vmatpush.msra.mxu0 0.0
        %2281 = vmatpush.msra.mxu0 0.0
        %2282 = vmatpush.msra.mxu0 0.0
        %2283 = vmatpush.msra.mxu0 0.0
        %2284 = vmatpush.msra.mxu0 0.0
        %2285 = vmatpush.msra.mxu0 0.0
        %v2286 = vand.u32 %v2069, 4294901760
        %2287 = vmatpush.msra.mxu0 %v2286
        %v2288 = vand.u32 %v2068, 4294901760
        %2289 = vmatpush.msra.mxu0 %v2288
        %v2290 = vand.u32 %v2067, 4294901760
        %2291 = vmatpush.msra.mxu0 %v2290
        %v2292 = vand.u32 %v2066, 4294901760
        %2293 = vmatpush.msra.mxu0 %v2292
        %v2294 = vand.u32 %v2065, 4294901760
        %2295 = vmatpush.msra.mxu0 %v2294
        %v2296 = vand.u32 %v2064, 4294901760
        %2297 = vmatpush.msra.mxu0 %v2296
        %v2298 = vand.u32 %v2063, 4294901760
        %2299 = vmatpush.msra.mxu0 %v2298
        %v2300 = vand.u32 %v2062, 4294901760
        %2301 = vmatpush.msra.mxu0 %v2300
        %v2302 = vand.u32 %v1823, 4294901760
        %2303 = vmatmul.f32.gmra.mxu0 %v2302
        %v2304 = vpop.f32.mrf.mxu0
        %v2305 = vadd.f32 %v2276, %v2304
        %2306 = vdwg.mxu0
        %v2308 = vsel %vm744, %v1807, 0
        %v2311 = vsel %vm744, %v1808, 0
        %v2314 = vsel %vm744, %v1809, 0
        %v2317 = vsel %vm744, %v1810, 0
        %v2320 = vsel %vm744, %v1811, 0
        %v2323 = vsel %vm744, %v1812, 0
        %v2326 = vsel %vm744, %v1813, 0
        %2328 = vmatpush.msra.mxu0 0.0
        %2329 = vmatpush.msra.mxu0 0.0
        %2330 = vmatpush.msra.mxu0 0.0
        %2331 = vmatpush.msra.mxu0 0.0
        %2332 = vmatpush.msra.mxu0 0.0
        %2333 = vmatpush.msra.mxu0 0.0
        %2334 = vmatpush.msra.mxu0 0.0
        %2335 = vmatpush.msra.mxu0 0.0
        %v2336 = vand.u32 %v2069, 4294901760
        %2337 = vmatpush.msra.mxu0 %v2336
        %v2338 = vand.u32 %v2068, 4294901760
        %2339 = vmatpush.msra.mxu0 %v2338
        %v2340 = vand.u32 %v2067, 4294901760
        %2341 = vmatpush.msra.mxu0 %v2340
        %v2342 = vand.u32 %v2066, 4294901760
        %2343 = vmatpush.msra.mxu0 %v2342
        %v2344 = vand.u32 %v2065, 4294901760
        %2345 = vmatpush.msra.mxu0 %v2344
        %v2346 = vand.u32 %v2064, 4294901760
        %2347 = vmatpush.msra.mxu0 %v2346
        %v2348 = vand.u32 %v2063, 4294901760
        %2349 = vmatpush.msra.mxu0 %v2348
        %v2350 = vand.u32 %v2062, 4294901760
        %2351 = vmatpush.msra.mxu0 %v2350
        %v2352 = vand.u32 %v2308, 4294901760
        %v2353 = vsub.f32 %v2308, %v2352
        %v2354 = vand.u32 %v2353, 4294901760
        %v2355 = vsub.f32 %v2353, %v2354
        %v2356 = vand.u32 %v2355, 4294901760
        %2357 = vmatmul.f32.gmra.mxu0 %v2356
        %v2358 = vpop.f32.mrf.mxu0
        %v2359 = vadd.f32 0.0, %v2358
        %v2360 = vand.u32 %v2311, 4294901760
        %v2361 = vsub.f32 %v2311, %v2360
        %v2362 = vand.u32 %v2361, 4294901760
        %v2363 = vsub.f32 %v2361, %v2362
        %v2364 = vand.u32 %v2363, 4294901760
        %2365 = vmatmul.f32.gmra.mxu0 %v2364
        %v2366 = vpop.f32.mrf.mxu0
        %v2367 = vadd.f32 0.0, %v2366
        %v2368 = vand.u32 %v2314, 4294901760
        %v2369 = vsub.f32 %v2314, %v2368
        %v2370 = vand.u32 %v2369, 4294901760
        %v2371 = vsub.f32 %v2369, %v2370
        %v2372 = vand.u32 %v2371, 4294901760
        %2373 = vmatmul.f32.gmra.mxu0 %v2372
        %v2374 = vpop.f32.mrf.mxu0
        %v2375 = vadd.f32 0.0, %v2374
        %v2376 = vand.u32 %v2317, 4294901760
        %v2377 = vsub.f32 %v2317, %v2376
        %v2378 = vand.u32 %v2377, 4294901760
        %v2379 = vsub.f32 %v2377, %v2378
        %v2380 = vand.u32 %v2379, 4294901760
        %2381 = vmatmul.f32.gmra.mxu0 %v2380
        %v2382 = vpop.f32.mrf.mxu0
        %v2383 = vadd.f32 0.0, %v2382
        %v2384 = vand.u32 %v2320, 4294901760
        %v2385 = vsub.f32 %v2320, %v2384
        %v2386 = vand.u32 %v2385, 4294901760
        %v2387 = vsub.f32 %v2385, %v2386
        %v2388 = vand.u32 %v2387, 4294901760
        %2389 = vmatmul.f32.gmra.mxu0 %v2388
        %v2390 = vpop.f32.mrf.mxu0
        %v2391 = vadd.f32 0.0, %v2390
        %v2392 = vand.u32 %v2323, 4294901760
        %v2393 = vsub.f32 %v2323, %v2392
        %v2394 = vand.u32 %v2393, 4294901760
        %v2395 = vsub.f32 %v2393, %v2394
        %v2396 = vand.u32 %v2395, 4294901760
        %2397 = vmatmul.f32.gmra.mxu0 %v2396
        %v2398 = vpop.f32.mrf.mxu0
        %v2399 = vadd.f32 0.0, %v2398
        %v2400 = vand.u32 %v2326, 4294901760
        %v2401 = vsub.f32 %v2326, %v2400
        %v2402 = vand.u32 %v2401, 4294901760
        %v2403 = vsub.f32 %v2401, %v2402
        %v2404 = vand.u32 %v2403, 4294901760
        %2405 = vmatmul.f32.gmra.mxu0 %v2404
        %v2406 = vpop.f32.mrf.mxu0
        %v2407 = vadd.f32 0.0, %v2406
        %2408 = vdwg.mxu0
        %2409 = vmatpush.msra.mxu0 0.0
        %2410 = vmatpush.msra.mxu0 0.0
        %2411 = vmatpush.msra.mxu0 0.0
        %2412 = vmatpush.msra.mxu0 0.0
        %2413 = vmatpush.msra.mxu0 0.0
        %2414 = vmatpush.msra.mxu0 0.0
        %2415 = vmatpush.msra.mxu0 0.0
        %2416 = vmatpush.msra.mxu0 0.0
        %v2417 = vand.u32 %v2069, 4294901760
        %v2418 = vsub.f32 %v2069, %v2417
        %v2419 = vand.u32 %v2418, 4294901760
        %v2420 = vsub.f32 %v2418, %v2419
        %v2421 = vand.u32 %v2420, 4294901760
        %2422 = vmatpush.msra.mxu0 %v2421
        %v2423 = vand.u32 %v2068, 4294901760
        %v2424 = vsub.f32 %v2068, %v2423
        %v2425 = vand.u32 %v2424, 4294901760
        %v2426 = vsub.f32 %v2424, %v2425
        %v2427 = vand.u32 %v2426, 4294901760
        %2428 = vmatpush.msra.mxu0 %v2427
        %v2429 = vand.u32 %v2067, 4294901760
        %v2430 = vsub.f32 %v2067, %v2429
        %v2431 = vand.u32 %v2430, 4294901760
        %v2432 = vsub.f32 %v2430, %v2431
        %v2433 = vand.u32 %v2432, 4294901760
        %2434 = vmatpush.msra.mxu0 %v2433
        %v2435 = vand.u32 %v2066, 4294901760
        %v2436 = vsub.f32 %v2066, %v2435
        %v2437 = vand.u32 %v2436, 4294901760
        %v2438 = vsub.f32 %v2436, %v2437
        %v2439 = vand.u32 %v2438, 4294901760
        %2440 = vmatpush.msra.mxu0 %v2439
        %v2441 = vand.u32 %v2065, 4294901760
        %v2442 = vsub.f32 %v2065, %v2441
        %v2443 = vand.u32 %v2442, 4294901760
        %v2444 = vsub.f32 %v2442, %v2443
        %v2445 = vand.u32 %v2444, 4294901760
        %2446 = vmatpush.msra.mxu0 %v2445
        %v2447 = vand.u32 %v2064, 4294901760
        %v2448 = vsub.f32 %v2064, %v2447
        %v2449 = vand.u32 %v2448, 4294901760
        %v2450 = vsub.f32 %v2448, %v2449
        %v2451 = vand.u32 %v2450, 4294901760
        %2452 = vmatpush.msra.mxu0 %v2451
        %v2453 = vand.u32 %v2063, 4294901760
        %v2454 = vsub.f32 %v2063, %v2453
        %v2455 = vand.u32 %v2454, 4294901760
        %v2456 = vsub.f32 %v2454, %v2455
        %v2457 = vand.u32 %v2456, 4294901760
        %2458 = vmatpush.msra.mxu0 %v2457
        %v2459 = vand.u32 %v2062, 4294901760
        %v2460 = vsub.f32 %v2062, %v2459
        %v2461 = vand.u32 %v2460, 4294901760
        %v2462 = vsub.f32 %v2460, %v2461
        %v2463 = vand.u32 %v2462, 4294901760
        %2464 = vmatpush.msra.mxu0 %v2463
        %v2465 = vand.u32 %v2308, 4294901760
        %2466 = vmatmul.f32.gmra.mxu0 %v2465
        %v2467 = vpop.f32.mrf.mxu0
        %v2468 = vadd.f32 %v2359, %v2467
        %v2469 = vand.u32 %v2311, 4294901760
        %2470 = vmatmul.f32.gmra.mxu0 %v2469
        %v2471 = vpop.f32.mrf.mxu0
        %v2472 = vadd.f32 %v2367, %v2471
        %v2473 = vand.u32 %v2314, 4294901760
        %2474 = vmatmul.f32.gmra.mxu0 %v2473
        %v2475 = vpop.f32.mrf.mxu0
        %v2476 = vadd.f32 %v2375, %v2475
        %v2477 = vand.u32 %v2317, 4294901760
        %2478 = vmatmul.f32.gmra.mxu0 %v2477
        %v2479 = vpop.f32.mrf.mxu0
        %v2480 = vadd.f32 %v2383, %v2479
        %v2481 = vand.u32 %v2320, 4294901760
        %2482 = vmatmul.f32.gmra.mxu0 %v2481
        %v2483 = vpop.f32.mrf.mxu0
        %v2484 = vadd.f32 %v2391, %v2483
        %v2485 = vand.u32 %v2323, 4294901760
        %2486 = vmatmul.f32.gmra.mxu0 %v2485
        %v2487 = vpop.f32.mrf.mxu0
        %v2488 = vadd.f32 %v2399, %v2487
        %v2489 = vand.u32 %v2326, 4294901760
        %2490 = vmatmul.f32.gmra.mxu0 %v2489
        %v2491 = vpop.f32.mrf.mxu0
        %v2492 = vadd.f32 %v2407, %v2491
        %2493 = vdwg.mxu0
        %2494 = vmatpush.msra.mxu0 0.0
        %2495 = vmatpush.msra.mxu0 0.0
        %2496 = vmatpush.msra.mxu0 0.0
        %2497 = vmatpush.msra.mxu0 0.0
        %2498 = vmatpush.msra.mxu0 0.0
        %2499 = vmatpush.msra.mxu0 0.0
        %2500 = vmatpush.msra.mxu0 0.0
        %2501 = vmatpush.msra.mxu0 0.0
        %v2502 = vand.u32 %v2069, 4294901760
        %v2503 = vsub.f32 %v2069, %v2502
        %2504 = vmatpush.msra.mxu0 %v2503
        %v2505 = vand.u32 %v2068, 4294901760
        %v2506 = vsub.f32 %v2068, %v2505
        %2507 = vmatpush.msra.mxu0 %v2506
        %v2508 = vand.u32 %v2067, 4294901760
        %v2509 = vsub.f32 %v2067, %v2508
        %2510 = vmatpush.msra.mxu0 %v2509
        %v2511 = vand.u32 %v2066, 4294901760
        %v2512 = vsub.f32 %v2066, %v2511
        %2513 = vmatpush.msra.mxu0 %v2512
        %v2514 = vand.u32 %v2065, 4294901760
        %v2515 = vsub.f32 %v2065, %v2514
        %2516 = vmatpush.msra.mxu0 %v2515
        %v2517 = vand.u32 %v2064, 4294901760
        %v2518 = vsub.f32 %v2064, %v2517
        %2519 = vmatpush.msra.mxu0 %v2518
        %v2520 = vand.u32 %v2063, 4294901760
        %v2521 = vsub.f32 %v2063, %v2520
        %2522 = vmatpush.msra.mxu0 %v2521
        %v2523 = vand.u32 %v2062, 4294901760
        %v2524 = vsub.f32 %v2062, %v2523
        %2525 = vmatpush.msra.mxu0 %v2524
        %v2526 = vand.u32 %v2308, 4294901760
        %v2527 = vsub.f32 %v2308, %v2526
        %2528 = vmatmul.f32.gmra.mxu0 %v2527
        %v2529 = vpop.f32.mrf.mxu0
        %v2530 = vadd.f32 %v2468, %v2529
        %v2531 = vand.u32 %v2311, 4294901760
        %v2532 = vsub.f32 %v2311, %v2531
        %2533 = vmatmul.f32.gmra.mxu0 %v2532
        %v2534 = vpop.f32.mrf.mxu0
        %v2535 = vadd.f32 %v2472, %v2534
        %v2536 = vand.u32 %v2314, 4294901760
        %v2537 = vsub.f32 %v2314, %v2536
        %2538 = vmatmul.f32.gmra.mxu0 %v2537
        %v2539 = vpop.f32.mrf.mxu0
        %v2540 = vadd.f32 %v2476, %v2539
        %v2541 = vand.u32 %v2317, 4294901760
        %v2542 = vsub.f32 %v2317, %v2541
        %2543 = vmatmul.f32.gmra.mxu0 %v2542
        %v2544 = vpop.f32.mrf.mxu0
        %v2545 = vadd.f32 %v2480, %v2544
        %v2546 = vand.u32 %v2320, 4294901760
        %v2547 = vsub.f32 %v2320, %v2546
        %2548 = vmatmul.f32.gmra.mxu0 %v2547
        %v2549 = vpop.f32.mrf.mxu0
        %v2550 = vadd.f32 %v2484, %v2549
        %v2551 = vand.u32 %v2323, 4294901760
        %v2552 = vsub.f32 %v2323, %v2551
        %2553 = vmatmul.f32.gmra.mxu0 %v2552
        %v2554 = vpop.f32.mrf.mxu0
        %v2555 = vadd.f32 %v2488, %v2554
        %v2556 = vand.u32 %v2326, 4294901760
        %v2557 = vsub.f32 %v2326, %v2556
        %2558 = vmatmul.f32.gmra.mxu0 %v2557
        %v2559 = vpop.f32.mrf.mxu0
        %v2560 = vadd.f32 %v2492, %v2559
        %2561 = vdwg.mxu0
        %2562 = vmatpush.msra.mxu0 0.0
        %2563 = vmatpush.msra.mxu0 0.0
        %2564 = vmatpush.msra.mxu0 0.0
        %2565 = vmatpush.msra.mxu0 0.0
        %2566 = vmatpush.msra.mxu0 0.0
        %2567 = vmatpush.msra.mxu0 0.0
        %2568 = vmatpush.msra.mxu0 0.0
        %2569 = vmatpush.msra.mxu0 0.0
        %v2570 = vand.u32 %v2069, 4294901760
        %2571 = vmatpush.msra.mxu0 %v2570
        %v2572 = vand.u32 %v2068, 4294901760
        %2573 = vmatpush.msra.mxu0 %v2572
        %v2574 = vand.u32 %v2067, 4294901760
        %2575 = vmatpush.msra.mxu0 %v2574
        %v2576 = vand.u32 %v2066, 4294901760
        %2577 = vmatpush.msra.mxu0 %v2576
        %v2578 = vand.u32 %v2065, 4294901760
        %2579 = vmatpush.msra.mxu0 %v2578
        %v2580 = vand.u32 %v2064, 4294901760
        %2581 = vmatpush.msra.mxu0 %v2580
        %v2582 = vand.u32 %v2063, 4294901760
        %2583 = vmatpush.msra.mxu0 %v2582
        %v2584 = vand.u32 %v2062, 4294901760
        %2585 = vmatpush.msra.mxu0 %v2584
        %v2586 = vand.u32 %v2308, 4294901760
        %v2587 = vsub.f32 %v2308, %v2586
        %v2588 = vand.u32 %v2587, 4294901760
        %2589 = vmatmul.f32.gmra.mxu0 %v2588
        %v2590 = vpop.f32.mrf.mxu0
        %v2591 = vadd.f32 %v2530, %v2590
        %v2592 = vand.u32 %v2311, 4294901760
        %v2593 = vsub.f32 %v2311, %v2592
        %v2594 = vand.u32 %v2593, 4294901760
        %2595 = vmatmul.f32.gmra.mxu0 %v2594
        %v2596 = vpop.f32.mrf.mxu0
        %v2597 = vadd.f32 %v2535, %v2596
        %v2598 = vand.u32 %v2314, 4294901760
        %v2599 = vsub.f32 %v2314, %v2598
        %v2600 = vand.u32 %v2599, 4294901760
        %2601 = vmatmul.f32.gmra.mxu0 %v2600
        %v2602 = vpop.f32.mrf.mxu0
        %v2603 = vadd.f32 %v2540, %v2602
        %v2604 = vand.u32 %v2317, 4294901760
        %v2605 = vsub.f32 %v2317, %v2604
        %v2606 = vand.u32 %v2605, 4294901760
        %2607 = vmatmul.f32.gmra.mxu0 %v2606
        %v2608 = vpop.f32.mrf.mxu0
        %v2609 = vadd.f32 %v2545, %v2608
        %v2610 = vand.u32 %v2320, 4294901760
        %v2611 = vsub.f32 %v2320, %v2610
        %v2612 = vand.u32 %v2611, 4294901760
        %2613 = vmatmul.f32.gmra.mxu0 %v2612
        %v2614 = vpop.f32.mrf.mxu0
        %v2615 = vadd.f32 %v2550, %v2614
        %v2616 = vand.u32 %v2323, 4294901760
        %v2617 = vsub.f32 %v2323, %v2616
        %v2618 = vand.u32 %v2617, 4294901760
        %2619 = vmatmul.f32.gmra.mxu0 %v2618
        %v2620 = vpop.f32.mrf.mxu0
        %v2621 = vadd.f32 %v2555, %v2620
        %v2622 = vand.u32 %v2326, 4294901760
        %v2623 = vsub.f32 %v2326, %v2622
        %v2624 = vand.u32 %v2623, 4294901760
        %2625 = vmatmul.f32.gmra.mxu0 %v2624
        %v2626 = vpop.f32.mrf.mxu0
        %v2627 = vadd.f32 %v2560, %v2626
        %2628 = vdwg.mxu0
        %2629 = vmatpush.msra.mxu0 0.0
        %2630 = vmatpush.msra.mxu0 0.0
        %2631 = vmatpush.msra.mxu0 0.0
        %2632 = vmatpush.msra.mxu0 0.0
        %2633 = vmatpush.msra.mxu0 0.0
        %2634 = vmatpush.msra.mxu0 0.0
        %2635 = vmatpush.msra.mxu0 0.0
        %2636 = vmatpush.msra.mxu0 0.0
        %v2637 = vand.u32 %v2069, 4294901760
        %v2638 = vsub.f32 %v2069, %v2637
        %v2639 = vand.u32 %v2638, 4294901760
        %2640 = vmatpush.msra.mxu0 %v2639
        %v2641 = vand.u32 %v2068, 4294901760
        %v2642 = vsub.f32 %v2068, %v2641
        %v2643 = vand.u32 %v2642, 4294901760
        %2644 = vmatpush.msra.mxu0 %v2643
        %v2645 = vand.u32 %v2067, 4294901760
        %v2646 = vsub.f32 %v2067, %v2645
        %v2647 = vand.u32 %v2646, 4294901760
        %2648 = vmatpush.msra.mxu0 %v2647
        %v2649 = vand.u32 %v2066, 4294901760
        %v2650 = vsub.f32 %v2066, %v2649
        %v2651 = vand.u32 %v2650, 4294901760
        %2652 = vmatpush.msra.mxu0 %v2651
        %v2653 = vand.u32 %v2065, 4294901760
        %v2654 = vsub.f32 %v2065, %v2653
        %v2655 = vand.u32 %v2654, 4294901760
        %2656 = vmatpush.msra.mxu0 %v2655
        %v2657 = vand.u32 %v2064, 4294901760
        %v2658 = vsub.f32 %v2064, %v2657
        %v2659 = vand.u32 %v2658, 4294901760
        %2660 = vmatpush.msra.mxu0 %v2659
        %v2661 = vand.u32 %v2063, 4294901760
        %v2662 = vsub.f32 %v2063, %v2661
        %v2663 = vand.u32 %v2662, 4294901760
        %2664 = vmatpush.msra.mxu0 %v2663
        %v2665 = vand.u32 %v2062, 4294901760
        %v2666 = vsub.f32 %v2062, %v2665
        %v2667 = vand.u32 %v2666, 4294901760
        %2668 = vmatpush.msra.mxu0 %v2667
        %v2669 = vand.u32 %v2308, 4294901760
        %2670 = vmatmul.f32.gmra.mxu0 %v2669
        %v2671 = vpop.f32.mrf.mxu0
        %v2672 = vadd.f32 %v2591, %v2671
        %v2673 = vand.u32 %v2311, 4294901760
        %2674 = vmatmul.f32.gmra.mxu0 %v2673
        %v2675 = vpop.f32.mrf.mxu0
        %v2676 = vadd.f32 %v2597, %v2675
        %v2677 = vand.u32 %v2314, 4294901760
        %2678 = vmatmul.f32.gmra.mxu0 %v2677
        %v2679 = vpop.f32.mrf.mxu0
        %v2680 = vadd.f32 %v2603, %v2679
        %v2681 = vand.u32 %v2317, 4294901760
        %2682 = vmatmul.f32.gmra.mxu0 %v2681
        %v2683 = vpop.f32.mrf.mxu0
        %v2684 = vadd.f32 %v2609, %v2683
        %v2685 = vand.u32 %v2320, 4294901760
        %2686 = vmatmul.f32.gmra.mxu0 %v2685
        %v2687 = vpop.f32.mrf.mxu0
        %v2688 = vadd.f32 %v2615, %v2687
        %v2689 = vand.u32 %v2323, 4294901760
        %2690 = vmatmul.f32.gmra.mxu0 %v2689
        %v2691 = vpop.f32.mrf.mxu0
        %v2692 = vadd.f32 %v2621, %v2691
        %v2693 = vand.u32 %v2326, 4294901760
        %2694 = vmatmul.f32.gmra.mxu0 %v2693
        %v2695 = vpop.f32.mrf.mxu0
        %v2696 = vadd.f32 %v2627, %v2695
        %2697 = vdwg.mxu0
        %2698 = vmatpush.msra.mxu0 0.0
        %2699 = vmatpush.msra.mxu0 0.0
        %2700 = vmatpush.msra.mxu0 0.0
        %2701 = vmatpush.msra.mxu0 0.0
        %2702 = vmatpush.msra.mxu0 0.0
        %2703 = vmatpush.msra.mxu0 0.0
        %2704 = vmatpush.msra.mxu0 0.0
        %2705 = vmatpush.msra.mxu0 0.0
        %v2706 = vand.u32 %v2069, 4294901760
        %2707 = vmatpush.msra.mxu0 %v2706
        %v2708 = vand.u32 %v2068, 4294901760
        %2709 = vmatpush.msra.mxu0 %v2708
        %v2710 = vand.u32 %v2067, 4294901760
        %2711 = vmatpush.msra.mxu0 %v2710
        %v2712 = vand.u32 %v2066, 4294901760
        %2713 = vmatpush.msra.mxu0 %v2712
        %v2714 = vand.u32 %v2065, 4294901760
        %2715 = vmatpush.msra.mxu0 %v2714
        %v2716 = vand.u32 %v2064, 4294901760
        %2717 = vmatpush.msra.mxu0 %v2716
        %v2718 = vand.u32 %v2063, 4294901760
        %2719 = vmatpush.msra.mxu0 %v2718
        %v2720 = vand.u32 %v2062, 4294901760
        %2721 = vmatpush.msra.mxu0 %v2720
        %v2722 = vand.u32 %v2308, 4294901760
        %2723 = vmatmul.f32.gmra.mxu0 %v2722
        %v2724 = vpop.f32.mrf.mxu0
        %v2725 = vadd.f32 %v2672, %v2724
        %v2726 = vand.u32 %v2311, 4294901760
        %2727 = vmatmul.f32.gmra.mxu0 %v2726
        %v2728 = vpop.f32.mrf.mxu0
        %v2729 = vadd.f32 %v2676, %v2728
        %v2730 = vand.u32 %v2314, 4294901760
        %2731 = vmatmul.f32.gmra.mxu0 %v2730
        %v2732 = vpop.f32.mrf.mxu0
        %v2733 = vadd.f32 %v2680, %v2732
        %v2734 = vand.u32 %v2317, 4294901760
        %2735 = vmatmul.f32.gmra.mxu0 %v2734
        %v2736 = vpop.f32.mrf.mxu0
        %v2737 = vadd.f32 %v2684, %v2736
        %v2738 = vand.u32 %v2320, 4294901760
        %2739 = vmatmul.f32.gmra.mxu0 %v2738
        %v2740 = vpop.f32.mrf.mxu0
        %v2741 = vadd.f32 %v2688, %v2740
        %v2742 = vand.u32 %v2323, 4294901760
        %2743 = vmatmul.f32.gmra.mxu0 %v2742
        %v2744 = vpop.f32.mrf.mxu0
        %v2745 = vadd.f32 %v2692, %v2744
        %v2746 = vand.u32 %v2326, 4294901760
        %2747 = vmatmul.f32.gmra.mxu0 %v2746
        %v2748 = vpop.f32.mrf.mxu0
        %v2749 = vadd.f32 %v2696, %v2748
        %2750 = vdwg.mxu0
        %v2751 = vmul.f32 %v2305, %v2060
        %vm2752 = vcmask 261120
        %v2753 = vsel %vm2752, %v2751, 0.0
        %2754 = vadd.xlane.f32.xlu0 %v2753
        %v2755 = vpop.xlane.xlu0 %2754
        %v2756 = vmul.f32 %v2755, 0.17677669
        %2758 = vrot.lane.b32.xlu0 %v2751, 96
        %v2759 = vpop.permute.xlu0 %2758
        %v2761 = vsel %vm2752, %v2759, 0.0
        %2762 = vadd.xlane.f32.xlu0 %v2761
        %v2763 = vpop.xlane.xlu0 %2762
        %v2764 = vmul.f32 %v2763, 0.17677669
        %v2765 = vmul.f32 %v2725, %v2060
        %v2766 = vsel %vm2752, %v2765, 0.0
        %2767 = vadd.xlane.f32.xlu0 %v2766
        %v2768 = vpop.xlane.xlu0 %2767
        %v2769 = vmul.f32 %v2768, 0.17677669
        %2771 = vrot.lane.b32.xlu0 %v2765, 96
        %v2772 = vpop.permute.xlu0 %2771
        %v2774 = vsel %vm2752, %v2772, 0.0
        %2775 = vadd.xlane.f32.xlu0 %v2774
        %v2776 = vpop.xlane.xlu0 %2775
        %v2777 = vmul.f32 %v2776, 0.17677669
        %v2778 = vmul.f32 %v2729, %v2060
        %v2779 = vsel %vm2752, %v2778, 0.0
        %2780 = vadd.xlane.f32.xlu0 %v2779
        %v2781 = vpop.xlane.xlu0 %2780
        %v2782 = vmul.f32 %v2781, 0.17677669
        %2784 = vrot.lane.b32.xlu0 %v2778, 96
        %v2785 = vpop.permute.xlu0 %2784
        %v2787 = vsel %vm2752, %v2785, 0.0
        %2788 = vadd.xlane.f32.xlu0 %v2787
        %v2789 = vpop.xlane.xlu0 %2788
        %v2790 = vmul.f32 %v2789, 0.17677669
        %v2791 = vmul.f32 %v2733, %v2060
        %v2792 = vsel %vm2752, %v2791, 0.0
        %2793 = vadd.xlane.f32.xlu0 %v2792
        %v2794 = vpop.xlane.xlu0 %2793
        %v2795 = vmul.f32 %v2794, 0.17677669
        %2797 = vrot.lane.b32.xlu0 %v2791, 96
        %v2798 = vpop.permute.xlu0 %2797
        %v2800 = vsel %vm2752, %v2798, 0.0
        %2801 = vadd.xlane.f32.xlu0 %v2800
        %v2802 = vpop.xlane.xlu0 %2801
        %v2803 = vmul.f32 %v2802, 0.17677669
        %v2804 = vmul.f32 %v2737, %v2060
        %v2805 = vsel %vm2752, %v2804, 0.0
        %2806 = vadd.xlane.f32.xlu0 %v2805
        %v2807 = vpop.xlane.xlu0 %2806
        %v2808 = vmul.f32 %v2807, 0.17677669
        %2810 = vrot.lane.b32.xlu0 %v2804, 96
        %v2811 = vpop.permute.xlu0 %2810
        %v2813 = vsel %vm2752, %v2811, 0.0
        %2814 = vadd.xlane.f32.xlu0 %v2813
        %v2815 = vpop.xlane.xlu0 %2814
        %v2816 = vmul.f32 %v2815, 0.17677669
        %v2817 = vmul.f32 %v2741, %v2060
        %v2818 = vsel %vm2752, %v2817, 0.0
        %2819 = vadd.xlane.f32.xlu0 %v2818
        %v2820 = vpop.xlane.xlu0 %2819
        %v2821 = vmul.f32 %v2820, 0.17677669
        %2823 = vrot.lane.b32.xlu0 %v2817, 96
        %v2824 = vpop.permute.xlu0 %2823
        %v2826 = vsel %vm2752, %v2824, 0.0
        %2827 = vadd.xlane.f32.xlu0 %v2826
        %v2828 = vpop.xlane.xlu0 %2827
        %v2829 = vmul.f32 %v2828, 0.17677669
        %v2830 = vmul.f32 %v2745, %v2060
        %v2831 = vsel %vm2752, %v2830, 0.0
        %2832 = vadd.xlane.f32.xlu0 %v2831
        %v2833 = vpop.xlane.xlu0 %2832
        %v2834 = vmul.f32 %v2833, 0.17677669
        %2836 = vrot.lane.b32.xlu0 %v2830, 96
        %v2837 = vpop.permute.xlu0 %2836
        %v2839 = vsel %vm2752, %v2837, 0.0
        %2840 = vadd.xlane.f32.xlu0 %v2839
        %v2841 = vpop.xlane.xlu0 %2840
        %v2842 = vmul.f32 %v2841, 0.17677669
        %v2843 = vmul.f32 %v2749, %v2060
        %v2844 = vsel %vm2752, %v2843, 0.0
        %2845 = vadd.xlane.f32.xlu0 %v2844
        %v2846 = vpop.xlane.xlu0 %2845
        %v2847 = vmul.f32 %v2846, 0.17677669
        %2849 = vrot.lane.b32.xlu0 %v2843, 96
        %v2850 = vpop.permute.xlu0 %2849
        %v2852 = vsel %vm2752, %v2850, 0.0
        %2853 = vadd.xlane.f32.xlu0 %v2852
        %v2854 = vpop.xlane.xlu0 %2853
        %v2855 = vmul.f32 %v2854, 0.17677669
        %vm2856 = vcmp.lt.f32.partialorder %v575, 0.5
        %vm2857 = vcmask 7168
        %v2858 = vsel %vm2857, %v2756, %v2769
        %vm2859 = vcmask 15360
        %v2860 = vsel %vm2859, %v2858, %v2782
        %vm2861 = vcmask 23552
        %v2862 = vsel %vm2861, %v2860, %v2795
        %vm2863 = vcmask 31744
        %v2864 = vsel %vm2863, %v2862, %v2808
        %vm2865 = vcmask 39936
        %v2866 = vsel %vm2865, %v2864, %v2821
        %vm2867 = vcmask 48128
        %v2868 = vsel %vm2867, %v2866, %v2834
        %vm2869 = vcmask 56320
        %v2870 = vsel %vm2869, %v2868, %v2847
        %v2871 = vsel %vm2856, -1e+09, %v2870
        %v2872 = vsel %vm590, %v2871, -inf
        %2873 = vmax.xlane.f32.xlu0 %v2872
        %v2874 = vpop.xlane.xlu0 %2873
        %v2875 = vsub.f32 %v2871, %v2874
        %v2876 = vmul.f32 %v2875, 1.442695
        %v2877 = vpow.pop %v2876
        %v2878 = vsel %vm590, %v2877, 0.0
        %2879 = vadd.xlane.f32.xlu0 %v2878
        %v2880 = vpop.xlane.xlu0 %2879
        %v2881 = vrcp.pop %v2880
        %v2882 = vmul.f32 %v2880, %v2881
        %v2883 = vsub.f32 1.0, %v2882
        %v2884 = vmul.f32 %v2881, %v2883
        %v2885 = vadd.f32 %v2881, %v2884
        %vm2886 = vweird.f32 %v2880
        %vm2887 = vweird.f32 %v2881
        %vm2888 = vmor %vm2886, %vm2887
        %v2889 = vsel %vm2888, %v2881, %v2885
        %v2890 = vand.u32 2147483647, %v2880
        %vm2891 = vcmp.eq.f32.partialorder %v2890, 8.507059e+37
        %v2892 = vand.u32 %v2880, 2147483648
        %v2893 = vor.u32 1.1754944e-38, %v2892
        %v2894 = vsel %vm2891, %v2893, %v2889
        %v2895 = vmul.f32 %v2877, %v2894
        %2897 = vset.pattern.permute.xlu0 0
        %2898 = vperm.xlu0 %2897, %v2895
        %v2899 = vpop.permute.xlu0 %2898
        %v2901 = vmul.f32 %v2899, %v2305
        %2902 = vset.pattern.permute.xlu0 1
        %2903 = vperm.xlu0 %2902, %v2895
        %v2904 = vpop.permute.xlu0 %2903
        %v2906 = vmul.f32 %v2904, %v2725
        %v2907 = vadd.f32 %v2901, %v2906
        %2908 = vset.pattern.permute.xlu0 2
        %2909 = vperm.xlu0 %2908, %v2895
        %v2910 = vpop.permute.xlu0 %2909
        %v2912 = vmul.f32 %v2910, %v2729
        %v2913 = vadd.f32 %v2907, %v2912
        %2914 = vset.pattern.permute.xlu0 3
        %2915 = vperm.xlu0 %2914, %v2895
        %v2916 = vpop.permute.xlu0 %2915
        %v2918 = vmul.f32 %v2916, %v2733
        %v2919 = vadd.f32 %v2913, %v2918
        %2920 = vset.pattern.permute.xlu0 4
        %2921 = vperm.xlu0 %2920, %v2895
        %v2922 = vpop.permute.xlu0 %2921
        %v2924 = vmul.f32 %v2922, %v2737
        %v2925 = vadd.f32 %v2919, %v2924
        %2926 = vset.pattern.permute.xlu0 5
        %2927 = vperm.xlu0 %2926, %v2895
        %v2928 = vpop.permute.xlu0 %2927
        %v2930 = vmul.f32 %v2928, %v2741
        %v2931 = vadd.f32 %v2925, %v2930
        %2932 = vset.pattern.permute.xlu0 6
        %2933 = vperm.xlu0 %2932, %v2895
        %v2934 = vpop.permute.xlu0 %2933
        %v2936 = vmul.f32 %v2934, %v2745
        %v2937 = vadd.f32 %v2931, %v2936
        %2938 = vset.pattern.permute.xlu0 7
        %2939 = vperm.xlu0 %2938, %v2895
        %v2940 = vpop.permute.xlu0 %2939
        %v2942 = vmul.f32 %v2940, %v2749
        %v2943 = vadd.f32 %v2937, %v2942
        %v2944 = vsel %vm2857, %v2764, %v2777
        %v2945 = vsel %vm2859, %v2944, %v2790
        %v2946 = vsel %vm2861, %v2945, %v2803
        %v2947 = vsel %vm2863, %v2946, %v2816
        %v2948 = vsel %vm2865, %v2947, %v2829
        %v2949 = vsel %vm2867, %v2948, %v2842
        %v2950 = vsel %vm2869, %v2949, %v2855
        %v2951 = vsel %vm2856, -1e+09, %v2950
        %v2952 = vsel %vm590, %v2951, -inf
        %2953 = vmax.xlane.f32.xlu0 %v2952
        %v2954 = vpop.xlane.xlu0 %2953
        %v2955 = vsub.f32 %v2951, %v2954
        %v2956 = vmul.f32 %v2955, 1.442695
        %v2957 = vpow.pop %v2956
        %v2958 = vsel %vm590, %v2957, 0.0
        %2959 = vadd.xlane.f32.xlu0 %v2958
        %v2960 = vpop.xlane.xlu0 %2959
        %v2961 = vrcp.pop %v2960
        %v2962 = vmul.f32 %v2960, %v2961
        %v2963 = vsub.f32 1.0, %v2962
        %v2964 = vmul.f32 %v2961, %v2963
        %v2965 = vadd.f32 %v2961, %v2964
        %vm2966 = vweird.f32 %v2960
        %vm2967 = vweird.f32 %v2961
        %vm2968 = vmor %vm2966, %vm2967
        %v2969 = vsel %vm2968, %v2961, %v2965
        %v2970 = vand.u32 2147483647, %v2960
        %vm2971 = vcmp.eq.f32.partialorder %v2970, 8.507059e+37
        %v2972 = vand.u32 %v2960, 2147483648
        %v2973 = vor.u32 1.1754944e-38, %v2972
        %v2974 = vsel %vm2971, %v2973, %v2969
        %v2975 = vmul.f32 %v2957, %v2974
        %2977 = vset.pattern.permute.xlu0 0
        %2978 = vperm.xlu0 %2977, %v2975
        %v2979 = vpop.permute.xlu0 %2978
        %v2981 = vmul.f32 %v2979, %v2305
        %2982 = vset.pattern.permute.xlu0 1
        %2983 = vperm.xlu0 %2982, %v2975
        %v2984 = vpop.permute.xlu0 %2983
        %v2986 = vmul.f32 %v2984, %v2725
        %v2987 = vadd.f32 %v2981, %v2986
        %2988 = vset.pattern.permute.xlu0 2
        %2989 = vperm.xlu0 %2988, %v2975
        %v2990 = vpop.permute.xlu0 %2989
        %v2992 = vmul.f32 %v2990, %v2729
        %v2993 = vadd.f32 %v2987, %v2992
        %2994 = vset.pattern.permute.xlu0 3
        %2995 = vperm.xlu0 %2994, %v2975
        %v2996 = vpop.permute.xlu0 %2995
        %v2998 = vmul.f32 %v2996, %v2733
        %v2999 = vadd.f32 %v2993, %v2998
        %3000 = vset.pattern.permute.xlu0 4
        %3001 = vperm.xlu0 %3000, %v2975
        %v3002 = vpop.permute.xlu0 %3001
        %v3004 = vmul.f32 %v3002, %v2737
        %v3005 = vadd.f32 %v2999, %v3004
        %3006 = vset.pattern.permute.xlu0 5
        %3007 = vperm.xlu0 %3006, %v2975
        %v3008 = vpop.permute.xlu0 %3007
        %v3010 = vmul.f32 %v3008, %v2741
        %v3011 = vadd.f32 %v3005, %v3010
        %3012 = vset.pattern.permute.xlu0 6
        %3013 = vperm.xlu0 %3012, %v2975
        %v3014 = vpop.permute.xlu0 %3013
        %v3016 = vmul.f32 %v3014, %v2745
        %v3017 = vadd.f32 %v3011, %v3016
        %3018 = vset.pattern.permute.xlu0 7
        %3019 = vperm.xlu0 %3018, %v2975
        %v3020 = vpop.permute.xlu0 %3019
        %v3022 = vmul.f32 %v3020, %v2749
        %v3023 = vadd.f32 %v3017, %v3022
        %3025 = vrot.lane.b32.xlu0 %v2943, 64
        %v3026 = vpop.permute.xlu0 %3025
        %3029 = vrot.lane.b32.xlu0 %v3023, 64
        %v3030 = vpop.permute.xlu0 %3029
        %3032 = vrot.lane.b32.xlu0 %v985, 64
        %v3033 = vpop.permute.xlu0 %3032
        %v3035 = vsel %vm2752, %v3026, %v3030
        %v3036 = vsel %vm744, %v3035, %v3033
        %v3037 = vld [vmem:[%s13] sm:$0xff]
        %v3038 = vld [vmem:[%s13 + $0x8] sm:$0xff]
        %v3039 = vld [vmem:[%s13 + $0x10] sm:$0xff]
        %v3040 = vld [vmem:[%s13 + $0x18] sm:$0xff]
        %v3041 = vld [vmem:[%s13 + $0x20] sm:$0xff]
        %v3042 = vld [vmem:[%s13 + $0x28] sm:$0xff]
        %v3043 = vld [vmem:[%s13 + $0x30] sm:$0xff]
        %v3044 = vld [vmem:[%s13 + $0x38] sm:$0xff]
        %v3045 = vld [vmem:[%s13 + $0x40] sm:$0xff]
        %v3046 = vld [vmem:[%s13 + $0x48] sm:$0xff]
        %v3047 = vld [vmem:[%s13 + $0x50] sm:$0xff]
        %v3048 = vld [vmem:[%s13 + $0x58] sm:$0xff]
        %v3049 = vld [vmem:[%s13 + $0x60] sm:$0xff]
        %v3050 = vld [vmem:[%s13 + $0x68] sm:$0xff]
        %v3051 = vld [vmem:[%s13 + $0x70] sm:$0xff]
        %v3052 = vld [vmem:[%s13 + $0x78] sm:$0xff]
        %v3053 = vand.u32 %v3052, 4294901760
        %3054 = vmatpush.msra.mxu0 %v3053
        %v3055 = vand.u32 %v3051, 4294901760
        %3056 = vmatpush.msra.mxu0 %v3055
        %v3057 = vand.u32 %v3050, 4294901760
        %3058 = vmatpush.msra.mxu0 %v3057
        %v3059 = vand.u32 %v3049, 4294901760
        %3060 = vmatpush.msra.mxu0 %v3059
        %v3061 = vand.u32 %v3048, 4294901760
        %3062 = vmatpush.msra.mxu0 %v3061
        %v3063 = vand.u32 %v3047, 4294901760
        %3064 = vmatpush.msra.mxu0 %v3063
        %v3065 = vand.u32 %v3046, 4294901760
        %3066 = vmatpush.msra.mxu0 %v3065
        %v3067 = vand.u32 %v3045, 4294901760
        %3068 = vmatpush.msra.mxu0 %v3067
        %v3069 = vand.u32 %v3044, 4294901760
        %3070 = vmatpush.msra.mxu0 %v3069
        %v3071 = vand.u32 %v3043, 4294901760
        %3072 = vmatpush.msra.mxu0 %v3071
        %v3073 = vand.u32 %v3042, 4294901760
        %3074 = vmatpush.msra.mxu0 %v3073
        %v3075 = vand.u32 %v3041, 4294901760
        %3076 = vmatpush.msra.mxu0 %v3075
        %v3077 = vand.u32 %v3040, 4294901760
        %3078 = vmatpush.msra.mxu0 %v3077
        %v3079 = vand.u32 %v3039, 4294901760
        %3080 = vmatpush.msra.mxu0 %v3079
        %v3081 = vand.u32 %v3038, 4294901760
        %3082 = vmatpush.msra.mxu0 %v3081
        %v3083 = vand.u32 %v3037, 4294901760
        %3084 = vmatpush.msra.mxu0 %v3083
        %v3085 = vand.u32 %v3036, 4294901760
        %v3086 = vsub.f32 %v3036, %v3085
        %v3087 = vand.u32 %v3086, 4294901760
        %v3088 = vsub.f32 %v3086, %v3087
        %v3089 = vand.u32 %v3088, 4294901760
        %3090 = vmatmul.f32.gmra.mxu0 %v3089
        %v3091 = vpop.f32.mrf.mxu0
        %v3092 = vadd.f32 0.0, %v3091
        %3093 = vdwg.mxu0
        %v3094 = vand.u32 %v3052, 4294901760
        %v3095 = vsub.f32 %v3052, %v3094
        %v3096 = vand.u32 %v3095, 4294901760
        %v3097 = vsub.f32 %v3095, %v3096
        %v3098 = vand.u32 %v3097, 4294901760
        %3099 = vmatpush.msra.mxu0 %v3098
        %v3100 = vand.u32 %v3051, 4294901760
        %v3101 = vsub.f32 %v3051, %v3100
        %v3102 = vand.u32 %v3101, 4294901760
        %v3103 = vsub.f32 %v3101, %v3102
        %v3104 = vand.u32 %v3103, 4294901760
        %3105 = vmatpush.msra.mxu0 %v3104
        %v3106 = vand.u32 %v3050, 4294901760
        %v3107 = vsub.f32 %v3050, %v3106
        %v3108 = vand.u32 %v3107, 4294901760
        %v3109 = vsub.f32 %v3107, %v3108
        %v3110 = vand.u32 %v3109, 4294901760
        %3111 = vmatpush.msra.mxu0 %v3110
        %v3112 = vand.u32 %v3049, 4294901760
        %v3113 = vsub.f32 %v3049, %v3112
        %v3114 = vand.u32 %v3113, 4294901760
        %v3115 = vsub.f32 %v3113, %v3114
        %v3116 = vand.u32 %v3115, 4294901760
        %3117 = vmatpush.msra.mxu0 %v3116
        %v3118 = vand.u32 %v3048, 4294901760
        %v3119 = vsub.f32 %v3048, %v3118
        %v3120 = vand.u32 %v3119, 4294901760
        %v3121 = vsub.f32 %v3119, %v3120
        %v3122 = vand.u32 %v3121, 4294901760
        %3123 = vmatpush.msra.mxu0 %v3122
        %v3124 = vand.u32 %v3047, 4294901760
        %v3125 = vsub.f32 %v3047, %v3124
        %v3126 = vand.u32 %v3125, 4294901760
        %v3127 = vsub.f32 %v3125, %v3126
        %v3128 = vand.u32 %v3127, 4294901760
        %3129 = vmatpush.msra.mxu0 %v3128
        %v3130 = vand.u32 %v3046, 4294901760
        %v3131 = vsub.f32 %v3046, %v3130
        %v3132 = vand.u32 %v3131, 4294901760
        %v3133 = vsub.f32 %v3131, %v3132
        %v3134 = vand.u32 %v3133, 4294901760
        %3135 = vmatpush.msra.mxu0 %v3134
        %v3136 = vand.u32 %v3045, 4294901760
        %v3137 = vsub.f32 %v3045, %v3136
        %v3138 = vand.u32 %v3137, 4294901760
        %v3139 = vsub.f32 %v3137, %v3138
        %v3140 = vand.u32 %v3139, 4294901760
        %3141 = vmatpush.msra.mxu0 %v3140
        %v3142 = vand.u32 %v3044, 4294901760
        %v3143 = vsub.f32 %v3044, %v3142
        %v3144 = vand.u32 %v3143, 4294901760
        %v3145 = vsub.f32 %v3143, %v3144
        %v3146 = vand.u32 %v3145, 4294901760
        %3147 = vmatpush.msra.mxu0 %v3146
        %v3148 = vand.u32 %v3043, 4294901760
        %v3149 = vsub.f32 %v3043, %v3148
        %v3150 = vand.u32 %v3149, 4294901760
        %v3151 = vsub.f32 %v3149, %v3150
        %v3152 = vand.u32 %v3151, 4294901760
        %3153 = vmatpush.msra.mxu0 %v3152
        %v3154 = vand.u32 %v3042, 4294901760
        %v3155 = vsub.f32 %v3042, %v3154
        %v3156 = vand.u32 %v3155, 4294901760
        %v3157 = vsub.f32 %v3155, %v3156
        %v3158 = vand.u32 %v3157, 4294901760
        %3159 = vmatpush.msra.mxu0 %v3158
        %v3160 = vand.u32 %v3041, 4294901760
        %v3161 = vsub.f32 %v3041, %v3160
        %v3162 = vand.u32 %v3161, 4294901760
        %v3163 = vsub.f32 %v3161, %v3162
        %v3164 = vand.u32 %v3163, 4294901760
        %3165 = vmatpush.msra.mxu0 %v3164
        %v3166 = vand.u32 %v3040, 4294901760
        %v3167 = vsub.f32 %v3040, %v3166
        %v3168 = vand.u32 %v3167, 4294901760
        %v3169 = vsub.f32 %v3167, %v3168
        %v3170 = vand.u32 %v3169, 4294901760
        %3171 = vmatpush.msra.mxu0 %v3170
        %v3172 = vand.u32 %v3039, 4294901760
        %v3173 = vsub.f32 %v3039, %v3172
        %v3174 = vand.u32 %v3173, 4294901760
        %v3175 = vsub.f32 %v3173, %v3174
        %v3176 = vand.u32 %v3175, 4294901760
        %3177 = vmatpush.msra.mxu0 %v3176
        %v3178 = vand.u32 %v3038, 4294901760
        %v3179 = vsub.f32 %v3038, %v3178
        %v3180 = vand.u32 %v3179, 4294901760
        %v3181 = vsub.f32 %v3179, %v3180
        %v3182 = vand.u32 %v3181, 4294901760
        %3183 = vmatpush.msra.mxu0 %v3182
        %v3184 = vand.u32 %v3037, 4294901760
        %v3185 = vsub.f32 %v3037, %v3184
        %v3186 = vand.u32 %v3185, 4294901760
        %v3187 = vsub.f32 %v3185, %v3186
        %v3188 = vand.u32 %v3187, 4294901760
        %3189 = vmatpush.msra.mxu0 %v3188
        %v3190 = vand.u32 %v3036, 4294901760
        %3191 = vmatmul.f32.gmra.mxu0 %v3190
        %v3192 = vpop.f32.mrf.mxu0
        %v3193 = vadd.f32 %v3092, %v3192
        %3194 = vdwg.mxu0
        %v3195 = vand.u32 %v3052, 4294901760
        %v3196 = vsub.f32 %v3052, %v3195
        %3197 = vmatpush.msra.mxu0 %v3196
        %v3198 = vand.u32 %v3051, 4294901760
        %v3199 = vsub.f32 %v3051, %v3198
        %3200 = vmatpush.msra.mxu0 %v3199
        %v3201 = vand.u32 %v3050, 4294901760
        %v3202 = vsub.f32 %v3050, %v3201
        %3203 = vmatpush.msra.mxu0 %v3202
        %v3204 = vand.u32 %v3049, 4294901760
        %v3205 = vsub.f32 %v3049, %v3204
        %3206 = vmatpush.msra.mxu0 %v3205
        %v3207 = vand.u32 %v3048, 4294901760
        %v3208 = vsub.f32 %v3048, %v3207
        %3209 = vmatpush.msra.mxu0 %v3208
        %v3210 = vand.u32 %v3047, 4294901760
        %v3211 = vsub.f32 %v3047, %v3210
        %3212 = vmatpush.msra.mxu0 %v3211
        %v3213 = vand.u32 %v3046, 4294901760
        %v3214 = vsub.f32 %v3046, %v3213
        %3215 = vmatpush.msra.mxu0 %v3214
        %v3216 = vand.u32 %v3045, 4294901760
        %v3217 = vsub.f32 %v3045, %v3216
        %3218 = vmatpush.msra.mxu0 %v3217
        %v3219 = vand.u32 %v3044, 4294901760
        %v3220 = vsub.f32 %v3044, %v3219
        %3221 = vmatpush.msra.mxu0 %v3220
        %v3222 = vand.u32 %v3043, 4294901760
        %v3223 = vsub.f32 %v3043, %v3222
        %3224 = vmatpush.msra.mxu0 %v3223
        %v3225 = vand.u32 %v3042, 4294901760
        %v3226 = vsub.f32 %v3042, %v3225
        %3227 = vmatpush.msra.mxu0 %v3226
        %v3228 = vand.u32 %v3041, 4294901760
        %v3229 = vsub.f32 %v3041, %v3228
        %3230 = vmatpush.msra.mxu0 %v3229
        %v3231 = vand.u32 %v3040, 4294901760
        %v3232 = vsub.f32 %v3040, %v3231
        %3233 = vmatpush.msra.mxu0 %v3232
        %v3234 = vand.u32 %v3039, 4294901760
        %v3235 = vsub.f32 %v3039, %v3234
        %3236 = vmatpush.msra.mxu0 %v3235
        %v3237 = vand.u32 %v3038, 4294901760
        %v3238 = vsub.f32 %v3038, %v3237
        %3239 = vmatpush.msra.mxu0 %v3238
        %v3240 = vand.u32 %v3037, 4294901760
        %v3241 = vsub.f32 %v3037, %v3240
        %3242 = vmatpush.msra.mxu0 %v3241
        %v3243 = vand.u32 %v3036, 4294901760
        %v3244 = vsub.f32 %v3036, %v3243
        %3245 = vmatmul.f32.gmra.mxu0 %v3244
        %v3246 = vpop.f32.mrf.mxu0
        %v3247 = vadd.f32 %v3193, %v3246
        %3248 = vdwg.mxu0
        %v3249 = vand.u32 %v3052, 4294901760
        %3250 = vmatpush.msra.mxu0 %v3249
        %v3251 = vand.u32 %v3051, 4294901760
        %3252 = vmatpush.msra.mxu0 %v3251
        %v3253 = vand.u32 %v3050, 4294901760
        %3254 = vmatpush.msra.mxu0 %v3253
        %v3255 = vand.u32 %v3049, 4294901760
        %3256 = vmatpush.msra.mxu0 %v3255
        %v3257 = vand.u32 %v3048, 4294901760
        %3258 = vmatpush.msra.mxu0 %v3257
        %v3259 = vand.u32 %v3047, 4294901760
        %3260 = vmatpush.msra.mxu0 %v3259
        %v3261 = vand.u32 %v3046, 4294901760
        %3262 = vmatpush.msra.mxu0 %v3261
        %v3263 = vand.u32 %v3045, 4294901760
        %3264 = vmatpush.msra.mxu0 %v3263
        %v3265 = vand.u32 %v3044, 4294901760
        %3266 = vmatpush.msra.mxu0 %v3265
        %v3267 = vand.u32 %v3043, 4294901760
        %3268 = vmatpush.msra.mxu0 %v3267
        %v3269 = vand.u32 %v3042, 4294901760
        %3270 = vmatpush.msra.mxu0 %v3269
        %v3271 = vand.u32 %v3041, 4294901760
        %3272 = vmatpush.msra.mxu0 %v3271
        %v3273 = vand.u32 %v3040, 4294901760
        %3274 = vmatpush.msra.mxu0 %v3273
        %v3275 = vand.u32 %v3039, 4294901760
        %3276 = vmatpush.msra.mxu0 %v3275
        %v3277 = vand.u32 %v3038, 4294901760
        %3278 = vmatpush.msra.mxu0 %v3277
        %v3279 = vand.u32 %v3037, 4294901760
        %3280 = vmatpush.msra.mxu0 %v3279
        %v3281 = vand.u32 %v3036, 4294901760
        %v3282 = vsub.f32 %v3036, %v3281
        %v3283 = vand.u32 %v3282, 4294901760
        %3284 = vmatmul.f32.gmra.mxu0 %v3283
        %v3285 = vpop.f32.mrf.mxu0
        %v3286 = vadd.f32 %v3247, %v3285
        %3287 = vdwg.mxu0
        %v3288 = vand.u32 %v3052, 4294901760
        %v3289 = vsub.f32 %v3052, %v3288
        %v3290 = vand.u32 %v3289, 4294901760
        %3291 = vmatpush.msra.mxu0 %v3290
        %v3292 = vand.u32 %v3051, 4294901760
        %v3293 = vsub.f32 %v3051, %v3292
        %v3294 = vand.u32 %v3293, 4294901760
        %3295 = vmatpush.msra.mxu0 %v3294
        %v3296 = vand.u32 %v3050, 4294901760
        %v3297 = vsub.f32 %v3050, %v3296
        %v3298 = vand.u32 %v3297, 4294901760
        %3299 = vmatpush.msra.mxu0 %v3298
        %v3300 = vand.u32 %v3049, 4294901760
        %v3301 = vsub.f32 %v3049, %v3300
        %v3302 = vand.u32 %v3301, 4294901760
        %3303 = vmatpush.msra.mxu0 %v3302
        %v3304 = vand.u32 %v3048, 4294901760
        %v3305 = vsub.f32 %v3048, %v3304
        %v3306 = vand.u32 %v3305, 4294901760
        %3307 = vmatpush.msra.mxu0 %v3306
        %v3308 = vand.u32 %v3047, 4294901760
        %v3309 = vsub.f32 %v3047, %v3308
        %v3310 = vand.u32 %v3309, 4294901760
        %3311 = vmatpush.msra.mxu0 %v3310
        %v3312 = vand.u32 %v3046, 4294901760
        %v3313 = vsub.f32 %v3046, %v3312
        %v3314 = vand.u32 %v3313, 4294901760
        %3315 = vmatpush.msra.mxu0 %v3314
        %v3316 = vand.u32 %v3045, 4294901760
        %v3317 = vsub.f32 %v3045, %v3316
        %v3318 = vand.u32 %v3317, 4294901760
        %3319 = vmatpush.msra.mxu0 %v3318
        %v3320 = vand.u32 %v3044, 4294901760
        %v3321 = vsub.f32 %v3044, %v3320
        %v3322 = vand.u32 %v3321, 4294901760
        %3323 = vmatpush.msra.mxu0 %v3322
        %v3324 = vand.u32 %v3043, 4294901760
        %v3325 = vsub.f32 %v3043, %v3324
        %v3326 = vand.u32 %v3325, 4294901760
        %3327 = vmatpush.msra.mxu0 %v3326
        %v3328 = vand.u32 %v3042, 4294901760
        %v3329 = vsub.f32 %v3042, %v3328
        %v3330 = vand.u32 %v3329, 4294901760
        %3331 = vmatpush.msra.mxu0 %v3330
        %v3332 = vand.u32 %v3041, 4294901760
        %v3333 = vsub.f32 %v3041, %v3332
        %v3334 = vand.u32 %v3333, 4294901760
        %3335 = vmatpush.msra.mxu0 %v3334
        %v3336 = vand.u32 %v3040, 4294901760
        %v3337 = vsub.f32 %v3040, %v3336
        %v3338 = vand.u32 %v3337, 4294901760
        %3339 = vmatpush.msra.mxu0 %v3338
        %v3340 = vand.u32 %v3039, 4294901760
        %v3341 = vsub.f32 %v3039, %v3340
        %v3342 = vand.u32 %v3341, 4294901760
        %3343 = vmatpush.msra.mxu0 %v3342
        %v3344 = vand.u32 %v3038, 4294901760
        %v3345 = vsub.f32 %v3038, %v3344
        %v3346 = vand.u32 %v3345, 4294901760
        %3347 = vmatpush.msra.mxu0 %v3346
        %v3348 = vand.u32 %v3037, 4294901760
        %v3349 = vsub.f32 %v3037, %v3348
        %v3350 = vand.u32 %v3349, 4294901760
        %3351 = vmatpush.msra.mxu0 %v3350
        %v3352 = vand.u32 %v3036, 4294901760
        %3353 = vmatmul.f32.gmra.mxu0 %v3352
        %v3354 = vpop.f32.mrf.mxu0
        %v3355 = vadd.f32 %v3286, %v3354
        %3356 = vdwg.mxu0
        %v3357 = vand.u32 %v3052, 4294901760
        %3358 = vmatpush.msra.mxu0 %v3357
        %v3359 = vand.u32 %v3051, 4294901760
        %3360 = vmatpush.msra.mxu0 %v3359
        %v3361 = vand.u32 %v3050, 4294901760
        %3362 = vmatpush.msra.mxu0 %v3361
        %v3363 = vand.u32 %v3049, 4294901760
        %3364 = vmatpush.msra.mxu0 %v3363
        %v3365 = vand.u32 %v3048, 4294901760
        %3366 = vmatpush.msra.mxu0 %v3365
        %v3367 = vand.u32 %v3047, 4294901760
        %3368 = vmatpush.msra.mxu0 %v3367
        %v3369 = vand.u32 %v3046, 4294901760
        %3370 = vmatpush.msra.mxu0 %v3369
        %v3371 = vand.u32 %v3045, 4294901760
        %3372 = vmatpush.msra.mxu0 %v3371
        %v3373 = vand.u32 %v3044, 4294901760
        %3374 = vmatpush.msra.mxu0 %v3373
        %v3375 = vand.u32 %v3043, 4294901760
        %3376 = vmatpush.msra.mxu0 %v3375
        %v3377 = vand.u32 %v3042, 4294901760
        %3378 = vmatpush.msra.mxu0 %v3377
        %v3379 = vand.u32 %v3041, 4294901760
        %3380 = vmatpush.msra.mxu0 %v3379
        %v3381 = vand.u32 %v3040, 4294901760
        %3382 = vmatpush.msra.mxu0 %v3381
        %v3383 = vand.u32 %v3039, 4294901760
        %3384 = vmatpush.msra.mxu0 %v3383
        %v3385 = vand.u32 %v3038, 4294901760
        %3386 = vmatpush.msra.mxu0 %v3385
        %v3387 = vand.u32 %v3037, 4294901760
        %3388 = vmatpush.msra.mxu0 %v3387
        %v3389 = vand.u32 %v3036, 4294901760
        %3390 = vmatmul.f32.gmra.mxu0 %v3389
        %v3391 = vpop.f32.mrf.mxu0
        %v3392 = vadd.f32 %v3355, %v3391
        %3393 = vdwg.mxu0
        %3394 = vst [vmem:[%s553] sm:$0xff] %v3392
        %s3395 = sand.u32 %s348, 1
        %s3396 = scalar_lea.sflag [#allocation4], %s3395
        %s3397 = sand.u32 %s348, 1
        %s3398 = smul.addr %s3397, 8
        %s3399 = scalar_lea.vmem [#allocation10], %s3398
        // Predicated region
        $region93: #{tpu_custom_call.1} parent=75 // pred_check
          %p3400 = pneg %p358
        $region94: #{tpu_custom_call.1} parent=75 // pred_check_branch
          %3402 = sbr.rel (%p3400) target = $region96
        $region95: #{tpu_custom_call.1} parent=75 // pred_region
          %3404 = vsyncadd %s3396, 0
          %s3405 = smul.addr %s31, 8
          %s3406 = scalar_lea.hbm %s14, %s3405
          %s3408 = sshll.u32 %s3399, 4
          %s3409 = int_to_ptr.vmem [resolvable:$true] %s3408
          %s3410 = sshll.u32 %s3406, 4
          %s3411 = int_to_ptr.hbm [resolvable:$true] %s3410
          %3413 = dma.vmem_to_hbm [thread:$0]  %s3409, 128, %s3411, %s3396
        $region96: #{tpu_custom_call.1} parent=75 // pred_fallthru
          _
      $region76: #{tpu_custom_call.1} parent=5 // pred_fallthru
        _
      %p3414 = scmp.le.s32.totalorder 2, %s26
      // Predicated region
      $region97: #{tpu_custom_call.1} parent=5 // pred_check
        %p3415 = pneg %p3414
      $region98: #{tpu_custom_call.1} parent=5 // pred_check_branch
        %3417 = sbr.rel (%p3415) target = $region100
      $region99: #{tpu_custom_call.1} parent=5 // pred_region
        %s3418 = ssub.s32 %s26, 2
        // Predicated region
        $region101: #{tpu_custom_call.1} parent=99 // pred_check
          %p3419 = pneg %p364
        $region102: #{tpu_custom_call.1} parent=99 // pred_check_branch
          %3421 = sbr.rel (%p3419) target = $region104
        $region103: #{tpu_custom_call.1} parent=99 // pred_region
          %s3422 = sand.u32 %s349, 1
          %s3423 = scalar_lea.sflag [#allocation4], %s3422
          %s3424 = sand.u32 %s349, 1
          %s3425 = smul.addr %s3424, 8
          %s3426 = scalar_lea.vmem [#allocation10], %s3425
          %3428 = dma.done %s3423, 128
        $region104: #{tpu_custom_call.1} parent=99 // pred_fallthru
          _
      $region100: #{tpu_custom_call.1} parent=5 // pred_fallthru
        _
    $region6: #{tpu_custom_call.1} parent=1 // loop_footer
      %s30 = sadd.s32 1, %s26
    $region7: #{tpu_custom_call.1} parent=1 // loop_footer_branch
      %25 = sbr.rel target = $region3
    $region8: #{tpu_custom_call.1} parent=1 // loop_exit
      _
    %3429 = vsyncpa [#allocation3], 1
    %s3430 = scalar_lea.sflag [#allocation3], 1
    %3431 = vsyncpa %s3430, 1
    %3432 = vsyncpa [#allocation6], 1
    %3433 = vsyncpa [#allocation9], 1
    %3434 = vsyncpa [#allocation4], 1
    %s3435 = scalar_lea.sflag [#allocation4], 1
    %3436 = vsyncpa %s3435, 1

</llo_original>
